<compile_context>
chip_gen: v5e
topology: v5e:2x2
jax: 0.10.0
libtpu: 0.0.40
codegen_flags: <defaults>
</compile_context>

<pallas_src>
import math

import jax
import jax.numpy as jnp
from jax import lax
from jax.experimental import pallas as pl
from jax.experimental.pallas import tpu as pltpu


_OUT_LANES = 128   # lane-dense padded output width; column 0 is the real output
_MAX_GRAPHS = 8    # readout slots per call (row `G` is the trash slot for padded nodes)


# ----------------------------- small helpers ------------------------------ #

def _leaky_relu(x):
    return jnp.where(x > 0, x, 0.01 * x)


def _dot(a, b):
    """bf16 MXU matmul with f32 accumulation (weights are pre-cast to bf16)."""
    return jnp.dot(a.astype(jnp.bfloat16), b.astype(jnp.bfloat16),
                   preferred_element_type=jnp.float32)


# Row-level gather / segment-sum building blocks (all f32, no MXU, no one-hot).
#
# Arrays needing data-dependent row addressing live in [rows, 1, H] layout so
# the dynamic index lands on the *untiled* leading dim; [rows, H] matmul-layout
# arrays are only touched in aligned 8-row blocks.

def _gather_rows(dst2_ref, src3_ref, idx_ref, n_rows, tmp8_ref):
    """dst2[r, :] = src3[idx[r], 0, :]  for r in [0, n_rows); n_rows % 8 == 0."""
    def body(b, carry):
        base = pl.multiple_of(b * 8, 8)
        for j in range(8):
            tmp8_ref[j:j + 1, :] = src3_ref[idx_ref[base + j]]
        dst2_ref[pl.ds(base, 8), :] = tmp8_ref[...]
        return carry
    lax.fori_loop(0, n_rows // 8, body, 0)


def _scatter_add_rows(dst3_ref, src2_ref, idx_ref, n_rows):
    """dst3[idx[r], 0, :] += src2[r, :]  (sequential, exact f32 segment sum)."""
    def body(b, carry):
        base = pl.multiple_of(b * 8, 8)
        blk = src2_ref[pl.ds(base, 8), :]
        for j in range(8):
            d = idx_ref[base + j]
            dst3_ref[d] = dst3_ref[d] + blk[j:j + 1, :]
        return carry
    lax.fori_loop(0, n_rows // 8, body, 0)


def _rows_2d_to_3d(dst3_ref, src2_ref, n_rows):
    def body(b, carry):
        base = pl.multiple_of(b * 8, 8)
        blk = src2_ref[pl.ds(base, 8), :]
        for j in range(8):
            dst3_ref[base + j] = blk[j:j + 1, :]
        return carry
    lax.fori_loop(0, n_rows // 8, body, 0)


def _rows_3d_to_2d(dst2_ref, src3_ref, n_rows, tmp8_ref):
    def body(b, carry):
        base = pl.multiple_of(b * 8, 8)
        for j in range(8):
            tmp8_ref[j:j + 1, :] = src3_ref[base + j]
        dst2_ref[pl.ds(base, 8), :] = tmp8_ref[...]
        return carry
    lax.fori_loop(0, n_rows // 8, body, 0)


# ----------------------------- Pallas kernel ------------------------------ #

def dmpnn_kernel(src_ref, dst_ref, gid_ref,            # SMEM int32 index vectors
                 node_ref, edge_ref,                    # raw features (bf16)
                 wn_ref, bn_ref, we_ref, be_ref,
                 wi_ref, bi_ref,
                 wm_ref, bm_ref,
                 wa_ref, ba_ref,
                 wp1_ref, bp1_ref, wp2_ref, bp2_ref,
                 out_ref,
                 nemb_ref, node3_ref, full3_ref,
                 h0_ref, h_ref, newe_ref, mail2_ref,
                 g3_ref, gf2_ref, tmp8_ref):
    ep = h_ref.shape[0]          # padded edge count (multiple of 8)
    np_ = nemb_ref.shape[0]      # padded node count (multiple of 8)
    depth = wm_ref.shape[0]

    # --- embeddings --------------------------------------------------------
    nemb_ref[...] = _leaky_relu(_dot(node_ref[...], wn_ref[...]) + bn_ref[...])   # [Np,H]
    edge_emb = _leaky_relu(_dot(edge_ref[...], we_ref[...]) + be_ref[...])        # [Ep,H]

    # Node embeddings into row-gather layout.
    _rows_2d_to_3d(node3_ref, nemb_ref, np_)

    # --- initial edge hidden state: ReLU(W_i [node[src], edge]) -------------
    _gather_rows(newe_ref, node3_ref, src_ref, ep, tmp8_ref)        # node_emb[src]
    h0 = jnp.maximum(
        _dot(jnp.concatenate([newe_ref[...], edge_emb], axis=-1), wi_ref[...])
        + bi_ref[...], 0.0)                                         # [Ep,H]
    h0_ref[...] = h0
    h_ref[...] = h0

    # --- message passing layers (f32 scatter/gather, bf16 only at matmul) ---
    def layer(d, carry):
        full3_ref[...] = jnp.zeros_like(full3_ref)
        _scatter_add_rows(full3_ref, h_ref, dst_ref, ep)            # full[v] = sum h[e]
        _gather_rows(newe_ref, full3_ref, dst_ref, ep, tmp8_ref)    # full[dst(e)]
        new_e = newe_ref[...] - h_ref[...]                          # f32 exact
        h_ref[...] = jnp.maximum(
            h0_ref[...] + _dot(new_e, wm_ref[d]) + bm_ref[d], 0.0)
        return carry

    lax.fori_loop(0, depth, layer, 0, unroll=True)

    # --- node update: ReLU(W_a [node, sum incoming edge hidden]) ------------
    full3_ref[...] = jnp.zeros_like(full3_ref)
    _scatter_add_rows(full3_ref, h_ref, dst_ref, ep)                # mail
    _rows_3d_to_2d(mail2_ref, full3_ref, np_, tmp8_ref)
    node_hidden = jnp.maximum(
        _dot(jnp.concatenate([nemb_ref[...], mail2_ref[...]], axis=-1), wa_ref[...])
        + ba_ref[...], 0.0)                                         # [Np,H]
    nemb_ref[...] = node_hidden        # reuse scratch as node_hidden storage

    # --- graph readout + prediction MLP (lane-dense [8,128] output) ---------
    g3_ref[...] = jnp.zeros_like(g3_ref)
    _scatter_add_rows(g3_ref, nemb_ref, gid_ref, np_)
    _rows_3d_to_2d(gf2_ref, g3_ref, g3_ref.shape[0], tmp8_ref)
    p1 = jnp.maximum(_dot(gf2_ref[...], wp1_ref[...]) + bp1_ref[...], 0.0)
    out_ref[...] = _dot(p1, wp2_ref[...]) + bp2_ref[...]


# ------------------------------- Wrapper ----------------------------------- #

def _ceil_to(x, m):
    return ((x + m - 1) // m) * m


def _pad_rows(x, target, fill=0):
    pad = target - x.shape[0]
    if pad == 0:
        return x
    pad_block = jnp.full((pad,) + x.shape[1:], fill, x.dtype)
    return jnp.concatenate([x, pad_block], axis=0)


def dmpnn_forward(params, node, edge, src, dst, graph_ids, num_graphs):
    """Runs the full DMPNN forward in a single Pallas call.

    node: [N, num_atom_type], edge: [E, num_bond_type]
    src, dst: [E] int32 edge endpoints. graph_ids: [N] int32 graph membership.
    Returns [num_graphs, 1] f32.
    """
    n_nodes, n_atom = node.shape
    n_edges, n_bond = edge.shape
    depth = params["wm"].shape[0]
    hidden = params["wn"].shape[1]
    assert num_graphs <= _MAX_GRAPHS - 1, "toy readout supports <= 7 graphs per call"
    bf16 = jnp.bfloat16

    # Pad edges/nodes to multiples of 8 rows (sublane granularity).  Padded
    # edges point at a dedicated trash node, padded nodes point at the trash
    # graph slot, so they never contaminate real outputs.
    ep = _ceil_to(n_edges, 8)
    extra_node = 1 if ep != n_edges else 0
    np_ = _ceil_to(n_nodes + extra_node, 8)

    node_p = _pad_rows(node.astype(bf16), np_)
    edge_p = _pad_rows(edge.astype(bf16), ep)
    src_p = _pad_rows(src.astype(jnp.int32), ep, fill=0)
    dst_p = _pad_rows(dst.astype(jnp.int32), ep, fill=n_nodes)
    gid_p = _pad_rows(graph_ids.astype(jnp.int32), np_, fill=num_graphs)

    # Pad the final [H/2, 1] weight to 128 lanes so the output store is dense.
    h_half = params["wp2"].shape[0]
    wp2_p = jnp.zeros((h_half, _OUT_LANES), jnp.float32).at[:, :1].set(params["wp2"])
    bp2_p = jnp.zeros((1, _OUT_LANES), jnp.float32).at[:, :1].set(params["bp2"])

    w = lambda k: params[k].astype(bf16)   # weights bf16, biases stay f32
    args = (
        src_p, dst_p, gid_p,
        node_p, edge_p,
        w("wn"), params["bn"], w("we"), params["be"],
        w("wi"), params["bi"],
        w("wm"), params["bm"],
        w("wa"), params["ba"],
        w("wp1"), params["bp1"], wp2_p.astype(bf16), bp2_p,
    )

    scratch_shapes = [
        pltpu.VMEM((np_, hidden), jnp.float32),              # nemb / node_hidden
        pltpu.VMEM((np_, 1, hidden), jnp.float32),           # node3 (gather layout)
        pltpu.VMEM((np_, 1, hidden), jnp.float32),           # full3 (segment-sum acc)
        pltpu.VMEM((ep, hidden), jnp.float32),                # h0
        pltpu.VMEM((ep, hidden), jnp.float32),                # h
        pltpu.VMEM((ep, hidden), jnp.float32),                # new_e / gather temp
        pltpu.VMEM((np_, hidden), jnp.float32),               # mail (2D)
        pltpu.VMEM((_MAX_GRAPHS, 1, hidden), jnp.float32),    # graph readout acc
        pltpu.VMEM((_MAX_GRAPHS, hidden), jnp.float32),       # graph feats 2D
        pltpu.VMEM((8, hidden), jnp.float32),                 # 8-row packing buffer
    ]

    # VMEM budget from the actual footprint (the [*,1,H] rows pad to 8 sublanes),
    # capped generation-aware at ~0.6x physical VMEM.
    scratch_bytes = 4 * (2 * np_ * hidden + 3 * ep * hidden
                         + 2 * np_ * 8 * hidden
                         + _MAX_GRAPHS * 8 * hidden
                         + _MAX_GRAPHS * hidden + 8 * hidden)
    io_bytes = sum(int(a.size) * a.dtype.itemsize for a in args) \
        + _MAX_GRAPHS * _OUT_LANES * 4
    try:
        cap = int(0.6 * pltpu.get_tpu_info().vmem_capacity_bytes)
    except Exception:
        cap = 40 * 1024 * 1024          # safe cap for v7x's 64 MiB physical VMEM
    cap = max(cap, 16 * 1024 * 1024)
    vmem_limit = int(min(cap, max(16 * 1024 * 1024, 2 * (scratch_bytes + io_bytes))))

    # Advisory cost estimate (real matmuls + f32 gather/scatter adds).
    H = hidden
    flops = 2 * (np_ * n_atom * H + ep * n_bond * H
                 + ep * (2 * H) * H
                 + depth * ep * H * H
                 + np_ * (2 * H) * H
                 + _MAX_GRAPHS * H * (H // 2)
                 + _MAX_GRAPHS * (H // 2) * _OUT_LANES)
    flops += (depth + 1) * 2 * ep * H
    bytes_accessed = io_bytes

    smem = pl.BlockSpec(memory_space=pltpu.MemorySpace.SMEM)
    vmem = pl.BlockSpec(memory_space=pltpu.MemorySpace.VMEM)
    out_padded = pl.pallas_call(
        dmpnn_kernel,
        out_shape=jax.ShapeDtypeStruct((_MAX_GRAPHS, _OUT_LANES), jnp.float32),
        in_specs=[smem, smem, smem] + [vmem] * (len(args) - 3),
        out_specs=vmem,
        scratch_shapes=scratch_shapes,
        compiler_params=pltpu.CompilerParams(vmem_limit_bytes=vmem_limit),
        cost_estimate=pl.CostEstimate(flops=int(flops), transcendentals=0,
                                      bytes_accessed=int(bytes_accessed)),
    )(*args)
    return out_padded[:num_graphs, :1]


# ------------------------- Parameter construction -------------------------- #

def _linear(key, fan_in, fan_out):
    k1, k2 = jax.random.split(key)
    bound = 1.0 / math.sqrt(fan_in)
    w = jax.random.uniform(k1, (fan_in, fan_out), jnp.float32, -bound, bound)
    b = jax.random.uniform(k2, (1, fan_out), jnp.float32, -bound, bound)
    return w, b


def init_params(key, num_atom_type, num_bond_type, hidden_dim, depth):
    keys = jax.random.split(key, 7 + depth)
    wn, bn = _linear(keys[0], num_atom_type, hidden_dim)
    we, be = _linear(keys[1], num_bond_type, hidden_dim)
    wi, bi = _linear(keys[2], 2 * hidden_dim, hidden_dim)   # init_h_func
    wa, ba = _linear(keys[3], 2 * hidden_dim, hidden_dim)   # W_a
    wp1, bp1 = _linear(keys[4], hidden_dim, hidden_dim // 2)
    wp2, bp2 = _linear(keys[5], hidden_dim // 2, 1)
    wm_list, bm_list = [], []
    for d in range(depth):
        w_, b_ = _linear(keys[6 + d], hidden_dim, hidden_dim)
        wm_list.append(w_)
        bm_list.append(b_)
    return {
        "wn": wn, "bn": bn, "we": we, "be": be,
        "wi": wi, "bi": bi,
        "wm": jnp.stack(wm_list), "bm": jnp.stack(bm_list),
        "wa": wa, "ba": ba,
        "wp1": wp1, "bp1": bp1, "wp2": wp2, "bp2": bp2,
    }


# ------------------------ Pure-JAX (f32) reference ------------------------- #

def dmpnn_reference(params, node, edge, src, dst, graph_ids, num_graphs):
    n_nodes = node.shape[0]
    depth = params["wm"].shape[0]
    node_emb = jax.nn.leaky_relu(node @ params["wn"] + params["bn"], 0.01)
    edge_emb = jax.nn.leaky_relu(edge @ params["we"] + params["be"], 0.01)
    h0 = jax.nn.relu(jnp.concatenate([node_emb[src], edge_emb], -1) @ params["wi"]
                     + params["bi"])
    h = h0
    for d in range(depth):
        full = jax.ops.segment_sum(h, dst, num_segments=n_nodes)
        new_e = full[dst] - h
        h = jax.nn.relu(h0 + new_e @ params["wm"][d] + params["bm"][d])
    mail = jax.ops.segment_sum(h, dst, num_segments=n_nodes)
    node_hidden = jax.nn.relu(jnp.concatenate([node_emb, mail], -1) @ params["wa"]
                              + params["ba"])
    graph_feats = jax.ops.segment_sum(node_hidden, graph_ids,
                                      num_segments=num_graphs)
    p1 = jax.nn.relu(graph_feats @ params["wp1"] + params["bp1"])
    return p1 @ params["wp2"] + params["bp2"]


# --------------------------------- Main ------------------------------------ #

if __name__ == "__main__":
    # Small config; hidden_dim=128 fills the vreg lane width.
    num_atom_type, num_bond_type = 16, 8
    hidden_dim, depth = 128, 3
    nodes_per_graph, num_graphs = 8, 2
    n_nodes = nodes_per_graph * num_graphs

    key = jax.random.PRNGKey(0)
    k_node, k_edge, k_param = jax.random.split(key, 3)

    node = jax.random.normal(k_node, (n_nodes, num_atom_type), jnp.float32)

    # Two disjoint bidirectional rings: every node has in-degree 2.
    src_list, dst_list, gid_list = [], [], []
    idx = jnp.arange(nodes_per_graph, dtype=jnp.int32)
    for g in range(num_graphs):
        base = g * nodes_per_graph
        a = base + idx
        b = base + (idx + 1) % nodes_per_graph
        src_list += [a, b]
        dst_list += [b, a]
        gid_list.append(jnp.full((nodes_per_graph,), g, jnp.int32))
    src = jnp.concatenate(src_list)
    dst = jnp.concatenate(dst_list)
    graph_ids = jnp.concatenate(gid_list)
    n_edges = int(src.shape[0])

    edge = jax.random.normal(k_edge, (n_edges, num_bond_type), jnp.float32)

    params = init_params(k_param, num_atom_type, num_bond_type, hidden_dim, depth)

    out = dmpnn_forward(params, node, edge, src, dst, graph_ids, num_graphs)
    out = jax.block_until_ready(out)

    ref = dmpnn_reference(params, node, edge, src, dst, graph_ids, num_graphs)
    assert out.shape == (num_graphs, 1)
    # Gather/scatter and h are f32 in-kernel now; only matmul operands are
    # bf16 (f32 accumulation), so the tolerance is tighter than v2.
    assert jnp.allclose(out, ref, atol=3e-2, rtol=3e-2), (out, ref)

    print("KERNEL_OK")
</pallas_src>

<mosaic_0001>
module attributes {stable_mosaic.version = 11 : i64} {
  func.func @dmpnn_kernel(%arg0: memref<32xi32, #tpu.memory_space<smem>>, %arg1: memref<32xi32, #tpu.memory_space<smem>>, %arg2: memref<16xi32, #tpu.memory_space<smem>>, %arg3: memref<16x16xbf16, #tpu.memory_space<vmem>>, %arg4: memref<32x8xbf16, #tpu.memory_space<vmem>>, %arg5: memref<16x128xbf16, #tpu.memory_space<vmem>>, %arg6: memref<1x128xf32, #tpu.memory_space<vmem>>, %arg7: memref<8x128xbf16, #tpu.memory_space<vmem>>, %arg8: memref<1x128xf32, #tpu.memory_space<vmem>>, %arg9: memref<256x128xbf16, #tpu.memory_space<vmem>>, %arg10: memref<1x128xf32, #tpu.memory_space<vmem>>, %arg11: memref<3x128x128xbf16, #tpu.memory_space<vmem>>, %arg12: memref<3x1x128xf32, #tpu.memory_space<vmem>>, %arg13: memref<256x128xbf16, #tpu.memory_space<vmem>>, %arg14: memref<1x128xf32, #tpu.memory_space<vmem>>, %arg15: memref<128x64xbf16, #tpu.memory_space<vmem>>, %arg16: memref<1x64xf32, #tpu.memory_space<vmem>>, %arg17: memref<64x128xbf16, #tpu.memory_space<vmem>>, %arg18: memref<1x128xf32, #tpu.memory_space<vmem>>, %arg19: memref<8x128xf32, #tpu.memory_space<vmem>>, %arg20: memref<16x128xf32, #tpu.memory_space<vmem>>, %arg21: memref<16x1x128xf32, #tpu.memory_space<vmem>>, %arg22: memref<16x1x128xf32, #tpu.memory_space<vmem>>, %arg23: memref<32x128xf32, #tpu.memory_space<vmem>>, %arg24: memref<32x128xf32, #tpu.memory_space<vmem>>, %arg25: memref<32x128xf32, #tpu.memory_space<vmem>>, %arg26: memref<16x128xf32, #tpu.memory_space<vmem>>, %arg27: memref<8x1x128xf32, #tpu.memory_space<vmem>>, %arg28: memref<8x128xf32, #tpu.memory_space<vmem>>, %arg29: memref<8x128xf32, #tpu.memory_space<vmem>>) attributes {dimension_semantics = [], scalar_prefetch = 0 : i64, scratch_operands = 10 : i64, tpu.core_type = #tpu.core_type<tc>} {
    %c0 = arith.constant 0 : index
    %c0_0 = arith.constant 0 : index
    %0 = vector.load %arg3[%c0, %c0_0] : memref<16x16xbf16, #tpu.memory_space<vmem>>, vector<16x16xbf16>
    %c0_1 = arith.constant 0 : index
    %c0_2 = arith.constant 0 : index
    %1 = vector.load %arg5[%c0_1, %c0_2] : memref<16x128xbf16, #tpu.memory_space<vmem>>, vector<16x128xbf16>
    %cst = arith.constant dense<0.000000e+00> : vector<16x128xf32>
    %2 = tpu.matmul %0, %1, %cst {dimension_numbers = #tpu.dot_dimension_numbers<[1], [0], [0], [1], [0, 0, 1, 1], [], []>} : vector<16x16xbf16>, vector<16x128xbf16>, vector<16x128xf32> -> vector<16x128xf32>
    %c0_3 = arith.constant 0 : index
    %c0_4 = arith.constant 0 : index
    %3 = vector.load %arg6[%c0_3, %c0_4] : memref<1x128xf32, #tpu.memory_space<vmem>>, vector<1x128xf32>
    %4 = vector.broadcast %3 : vector<1x128xf32> to vector<16x128xf32>
    %5 = arith.addf %2, %4 : vector<16x128xf32>
    %cst_5 = arith.constant 0.000000e+00 : f32
    %6 = vector.broadcast %cst_5 : f32 to vector<16x128xf32>
    %7 = arith.cmpf ogt, %5, %6 : vector<16x128xf32>
    %cst_6 = arith.constant 0.00999999977 : f32
    %8 = vector.broadcast %cst_6 : f32 to vector<16x128xf32>
    %9 = arith.mulf %8, %5 : vector<16x128xf32>
    %10 = arith.select %7, %5, %9 : vector<16x128xi1>, vector<16x128xf32>
    %c0_7 = arith.constant 0 : index
    %c0_8 = arith.constant 0 : index
    %11 = vector.load %arg20[%c0_7, %c0_8] : memref<16x128xf32, #tpu.memory_space<vmem>>, vector<16x128xf32>
    tpu.vector_store %arg20[%c0_7, %c0_8], %10 {strides = array<i32>} : memref<16x128xf32, #tpu.memory_space<vmem>>, vector<16x128xf32>,
    %c0_9 = arith.constant 0 : index
    %c0_10 = arith.constant 0 : index
    %12 = vector.load %arg4[%c0_9, %c0_10] : memref<32x8xbf16, #tpu.memory_space<vmem>>, vector<32x8xbf16>
    %c0_11 = arith.constant 0 : index
    %c0_12 = arith.constant 0 : index
    %13 = vector.load %arg7[%c0_11, %c0_12] : memref<8x128xbf16, #tpu.memory_space<vmem>>, vector<8x128xbf16>
    %cst_13 = arith.constant dense<0.000000e+00> : vector<32x128xf32>
    %14 = tpu.matmul %12, %13, %cst_13 {dimension_numbers = #tpu.dot_dimension_numbers<[1], [0], [0], [1], [0, 0, 1, 1], [], []>} : vector<32x8xbf16>, vector<8x128xbf16>, vector<32x128xf32> -> vector<32x128xf32>
    %c0_14 = arith.constant 0 : index
    %c0_15 = arith.constant 0 : index
    %15 = vector.load %arg8[%c0_14, %c0_15] : memref<1x128xf32, #tpu.memory_space<vmem>>, vector<1x128xf32>
    %16 = vector.broadcast %15 : vector<1x128xf32> to vector<32x128xf32>
    %17 = arith.addf %14, %16 : vector<32x128xf32>
    %cst_16 = arith.constant 0.000000e+00 : f32
    %18 = vector.broadcast %cst_16 : f32 to vector<32x128xf32>
    %19 = arith.cmpf ogt, %17, %18 : vector<32x128xf32>
    %cst_17 = arith.constant 0.00999999977 : f32
    %20 = vector.broadcast %cst_17 : f32 to vector<32x128xf32>
    %21 = arith.mulf %20, %17 : vector<32x128xf32>
    %22 = arith.select %19, %17, %21 : vector<32x128xi1>, vector<32x128xf32>
    %c0_i32 = arith.constant 0 : i32
    %c2_i32 = arith.constant 2 : i32
    %23 = arith.addi %c0_i32, %c2_i32 : i32
    %c1_i32 = arith.constant 1 : i32
    scf.for %arg30 = %c0_i32 to %23 step %c1_i32  : i32 {
      %c8_i32_197 = arith.constant 8 : i32
      %183 = arith.muli %arg30, %c8_i32_197 : i32
      %184 = tpu.assume_multiple %183, 8 : i32
      %185 = arith.index_cast %184 : i32 to index
      %c0_198 = arith.constant 0 : index
      %186 = vector.load %arg20[%185, %c0_198] : memref<16x128xf32, #tpu.memory_space<vmem>>, vector<8x128xf32>
      %187 = vector.extract_strided_slice %186 {offsets = [0, 0], sizes = [1, 128], strides = [1, 1]} : vector<8x128xf32> to vector<1x128xf32>
      %c0_i32_199 = arith.constant 0 : i32
      %188 = arith.addi %184, %c0_i32_199 : i32
      %189 = arith.index_cast %188 : i32 to index
      %c0_200 = arith.constant 0 : index
      %c0_201 = arith.constant 0 : index
      %190 = vector.load %arg21[%189, %c0_200, %c0_201] : memref<16x1x128xf32, #tpu.memory_space<vmem>>, vector<1x1x128xf32>
      %191 = vector.shape_cast %190 : vector<1x1x128xf32> to vector<1x128xf32>
      %192 = vector.shape_cast %187 : vector<1x128xf32> to vector<1x1x128xf32>
      tpu.vector_store %arg21[%189, %c0_200, %c0_201], %192 {strides = array<i32>} : memref<16x1x128xf32, #tpu.memory_space<vmem>>, vector<1x1x128xf32>,
      %193 = vector.extract_strided_slice %186 {offsets = [1, 0], sizes = [1, 128], strides = [1, 1]} : vector<8x128xf32> to vector<1x128xf32>
      %c1_i32_202 = arith.constant 1 : i32
      %194 = arith.addi %184, %c1_i32_202 : i32
      %195 = arith.index_cast %194 : i32 to index
      %c0_203 = arith.constant 0 : index
      %c0_204 = arith.constant 0 : index
      %196 = vector.load %arg21[%195, %c0_203, %c0_204] : memref<16x1x128xf32, #tpu.memory_space<vmem>>, vector<1x1x128xf32>
      %197 = vector.shape_cast %196 : vector<1x1x128xf32> to vector<1x128xf32>
      %198 = vector.shape_cast %193 : vector<1x128xf32> to vector<1x1x128xf32>
      tpu.vector_store %arg21[%195, %c0_203, %c0_204], %198 {strides = array<i32>} : memref<16x1x128xf32, #tpu.memory_space<vmem>>, vector<1x1x128xf32>,
      %199 = vector.extract_strided_slice %186 {offsets = [2, 0], sizes = [1, 128], strides = [1, 1]} : vector<8x128xf32> to vector<1x128xf32>
      %c2_i32_205 = arith.constant 2 : i32
      %200 = arith.addi %184, %c2_i32_205 : i32
      %201 = arith.index_cast %200 : i32 to index
      %c0_206 = arith.constant 0 : index
      %c0_207 = arith.constant 0 : index
      %202 = vector.load %arg21[%201, %c0_206, %c0_207] : memref<16x1x128xf32, #tpu.memory_space<vmem>>, vector<1x1x128xf32>
      %203 = vector.shape_cast %202 : vector<1x1x128xf32> to vector<1x128xf32>
      %204 = vector.shape_cast %199 : vector<1x128xf32> to vector<1x1x128xf32>
      tpu.vector_store %arg21[%201, %c0_206, %c0_207], %204 {strides = array<i32>} : memref<16x1x128xf32, #tpu.memory_space<vmem>>, vector<1x1x128xf32>,
      %205 = vector.extract_strided_slice %186 {offsets = [3, 0], sizes = [1, 128], strides = [1, 1]} : vector<8x128xf32> to vector<1x128xf32>
      %c3_i32_208 = arith.constant 3 : i32
      %206 = arith.addi %184, %c3_i32_208 : i32
      %207 = arith.index_cast %206 : i32 to index
      %c0_209 = arith.constant 0 : index
      %c0_210 = arith.constant 0 : index
      %208 = vector.load %arg21[%207, %c0_209, %c0_210] : memref<16x1x128xf32, #tpu.memory_space<vmem>>, vector<1x1x128xf32>
      %209 = vector.shape_cast %208 : vector<1x1x128xf32> to vector<1x128xf32>
      %210 = vector.shape_cast %205 : vector<1x128xf32> to vector<1x1x128xf32>
      tpu.vector_store %arg21[%207, %c0_209, %c0_210], %210 {strides = array<i32>} : memref<16x1x128xf32, #tpu.memory_space<vmem>>, vector<1x1x128xf32>,
      %211 = vector.extract_strided_slice %186 {offsets = [4, 0], sizes = [1, 128], strides = [1, 1]} : vector<8x128xf32> to vector<1x128xf32>
      %c4_i32_211 = arith.constant 4 : i32
      %212 = arith.addi %184, %c4_i32_211 : i32
      %213 = arith.index_cast %212 : i32 to index
      %c0_212 = arith.constant 0 : index
      %c0_213 = arith.constant 0 : index
      %214 = vector.load %arg21[%213, %c0_212, %c0_213] : memref<16x1x128xf32, #tpu.memory_space<vmem>>, vector<1x1x128xf32>
      %215 = vector.shape_cast %214 : vector<1x1x128xf32> to vector<1x128xf32>
      %216 = vector.shape_cast %211 : vector<1x128xf32> to vector<1x1x128xf32>
      tpu.vector_store %arg21[%213, %c0_212, %c0_213], %216 {strides = array<i32>} : memref<16x1x128xf32, #tpu.memory_space<vmem>>, vector<1x1x128xf32>,
      %217 = vector.extract_strided_slice %186 {offsets = [5, 0], sizes = [1, 128], strides = [1, 1]} : vector<8x128xf32> to vector<1x128xf32>
      %c5_i32_214 = arith.constant 5 : i32
      %218 = arith.addi %184, %c5_i32_214 : i32
      %219 = arith.index_cast %218 : i32 to index
      %c0_215 = arith.constant 0 : index
      %c0_216 = arith.constant 0 : index
      %220 = vector.load %arg21[%219, %c0_215, %c0_216] : memref<16x1x128xf32, #tpu.memory_space<vmem>>, vector<1x1x128xf32>
      %221 = vector.shape_cast %220 : vector<1x1x128xf32> to vector<1x128xf32>
      %222 = vector.shape_cast %217 : vector<1x128xf32> to vector<1x1x128xf32>
      tpu.vector_store %arg21[%219, %c0_215, %c0_216], %222 {strides = array<i32>} : memref<16x1x128xf32, #tpu.memory_space<vmem>>, vector<1x1x128xf32>,
      %223 = vector.extract_strided_slice %186 {offsets = [6, 0], sizes = [1, 128], strides = [1, 1]} : vector<8x128xf32> to vector<1x128xf32>
      %c6_i32_217 = arith.constant 6 : i32
      %224 = arith.addi %184, %c6_i32_217 : i32
      %225 = arith.index_cast %224 : i32 to index
      %c0_218 = arith.constant 0 : index
      %c0_219 = arith.constant 0 : index
      %226 = vector.load %arg21[%225, %c0_218, %c0_219] : memref<16x1x128xf32, #tpu.memory_space<vmem>>, vector<1x1x128xf32>
      %227 = vector.shape_cast %226 : vector<1x1x128xf32> to vector<1x128xf32>
      %228 = vector.shape_cast %223 : vector<1x128xf32> to vector<1x1x128xf32>
      tpu.vector_store %arg21[%225, %c0_218, %c0_219], %228 {strides = array<i32>} : memref<16x1x128xf32, #tpu.memory_space<vmem>>, vector<1x1x128xf32>,
      %229 = vector.extract_strided_slice %186 {offsets = [7, 0], sizes = [1, 128], strides = [1, 1]} : vector<8x128xf32> to vector<1x128xf32>
      %c7_i32_220 = arith.constant 7 : i32
      %230 = arith.addi %184, %c7_i32_220 : i32
      %231 = arith.index_cast %230 : i32 to index
      %c0_221 = arith.constant 0 : index
      %c0_222 = arith.constant 0 : index
      %232 = vector.load %arg21[%231, %c0_221, %c0_222] : memref<16x1x128xf32, #tpu.memory_space<vmem>>, vector<1x1x128xf32>
      %233 = vector.shape_cast %232 : vector<1x1x128xf32> to vector<1x128xf32>
      %234 = vector.shape_cast %229 : vector<1x128xf32> to vector<1x1x128xf32>
      tpu.vector_store %arg21[%231, %c0_221, %c0_222], %234 {strides = array<i32>} : memref<16x1x128xf32, #tpu.memory_space<vmem>>, vector<1x1x128xf32>,
    }
    %c2_i32_18 = arith.constant 2 : i32
    %c0_i32_19 = arith.constant 0 : i32
    %c4_i32 = arith.constant 4 : i32
    %24 = arith.addi %c0_i32_19, %c4_i32 : i32
    %c1_i32_20 = arith.constant 1 : i32
    scf.for %arg30 = %c0_i32_19 to %24 step %c1_i32_20  : i32 {
      %c8_i32_197 = arith.constant 8 : i32
      %183 = arith.muli %arg30, %c8_i32_197 : i32
      %184 = tpu.assume_multiple %183, 8 : i32
      %c0_i32_198 = arith.constant 0 : i32
      %185 = arith.addi %184, %c0_i32_198 : i32
      %186 = arith.index_cast %185 : i32 to index
      %187 = memref.load %arg0[%186] : memref<32xi32, #tpu.memory_space<smem>>
      %188 = arith.index_cast %187 : i32 to index
      %c0_199 = arith.constant 0 : index
      %c0_200 = arith.constant 0 : index
      %189 = vector.load %arg21[%188, %c0_199, %c0_200] : memref<16x1x128xf32, #tpu.memory_space<vmem>>, vector<1x1x128xf32>
      %190 = vector.shape_cast %189 : vector<1x1x128xf32> to vector<1x128xf32>
      %c0_201 = arith.constant 0 : index
      %c0_202 = arith.constant 0 : index
      %191 = vector.load %arg29[%c0_201, %c0_202] : memref<8x128xf32, #tpu.memory_space<vmem>>, vector<1x128xf32>
      tpu.vector_store %arg29[%c0_201, %c0_202], %190 {strides = array<i32>} : memref<8x128xf32, #tpu.memory_space<vmem>>, vector<1x128xf32>,
      %c1_i32_203 = arith.constant 1 : i32
      %192 = arith.addi %184, %c1_i32_203 : i32
      %193 = arith.index_cast %192 : i32 to index
      %194 = memref.load %arg0[%193] : memref<32xi32, #tpu.memory_space<smem>>
      %195 = arith.index_cast %194 : i32 to index
      %c0_204 = arith.constant 0 : index
      %c0_205 = arith.constant 0 : index
      %196 = vector.load %arg21[%195, %c0_204, %c0_205] : memref<16x1x128xf32, #tpu.memory_space<vmem>>, vector<1x1x128xf32>
      %197 = vector.shape_cast %196 : vector<1x1x128xf32> to vector<1x128xf32>
      %c1_206 = arith.constant 1 : index
      %c0_207 = arith.constant 0 : index
      %198 = vector.load %arg29[%c1_206, %c0_207] : memref<8x128xf32, #tpu.memory_space<vmem>>, vector<1x128xf32>
      tpu.vector_store %arg29[%c1_206, %c0_207], %197 {strides = array<i32>} : memref<8x128xf32, #tpu.memory_space<vmem>>, vector<1x128xf32>,
      %c2_i32_208 = arith.constant 2 : i32
      %199 = arith.addi %184, %c2_i32_208 : i32
      %200 = arith.index_cast %199 : i32 to index
      %201 = memref.load %arg0[%200] : memref<32xi32, #tpu.memory_space<smem>>
      %202 = arith.index_cast %201 : i32 to index
      %c0_209 = arith.constant 0 : index
      %c0_210 = arith.constant 0 : index
      %203 = vector.load %arg21[%202, %c0_209, %c0_210] : memref<16x1x128xf32, #tpu.memory_space<vmem>>, vector<1x1x128xf32>
      %204 = vector.shape_cast %203 : vector<1x1x128xf32> to vector<1x128xf32>
      %c2_211 = arith.constant 2 : index
      %c0_212 = arith.constant 0 : index
      %205 = vector.load %arg29[%c2_211, %c0_212] : memref<8x128xf32, #tpu.memory_space<vmem>>, vector<1x128xf32>
      tpu.vector_store %arg29[%c2_211, %c0_212], %204 {strides = array<i32>} : memref<8x128xf32, #tpu.memory_space<vmem>>, vector<1x128xf32>,
      %c3_i32_213 = arith.constant 3 : i32
      %206 = arith.addi %184, %c3_i32_213 : i32
      %207 = arith.index_cast %206 : i32 to index
      %208 = memref.load %arg0[%207] : memref<32xi32, #tpu.memory_space<smem>>
      %209 = arith.index_cast %208 : i32 to index
      %c0_214 = arith.constant 0 : index
      %c0_215 = arith.constant 0 : index
      %210 = vector.load %arg21[%209, %c0_214, %c0_215] : memref<16x1x128xf32, #tpu.memory_space<vmem>>, vector<1x1x128xf32>
      %211 = vector.shape_cast %210 : vector<1x1x128xf32> to vector<1x128xf32>
      %c3_216 = arith.constant 3 : index
      %c0_217 = arith.constant 0 : index
      %212 = vector.load %arg29[%c3_216, %c0_217] : memref<8x128xf32, #tpu.memory_space<vmem>>, vector<1x128xf32>
      tpu.vector_store %arg29[%c3_216, %c0_217], %211 {strides = array<i32>} : memref<8x128xf32, #tpu.memory_space<vmem>>, vector<1x128xf32>,
      %c4_i32_218 = arith.constant 4 : i32
      %213 = arith.addi %184, %c4_i32_218 : i32
      %214 = arith.index_cast %213 : i32 to index
      %215 = memref.load %arg0[%214] : memref<32xi32, #tpu.memory_space<smem>>
      %216 = arith.index_cast %215 : i32 to index
      %c0_219 = arith.constant 0 : index
      %c0_220 = arith.constant 0 : index
      %217 = vector.load %arg21[%216, %c0_219, %c0_220] : memref<16x1x128xf32, #tpu.memory_space<vmem>>, vector<1x1x128xf32>
      %218 = vector.shape_cast %217 : vector<1x1x128xf32> to vector<1x128xf32>
      %c4_221 = arith.constant 4 : index
      %c0_222 = arith.constant 0 : index
      %219 = vector.load %arg29[%c4_221, %c0_222] : memref<8x128xf32, #tpu.memory_space<vmem>>, vector<1x128xf32>
      tpu.vector_store %arg29[%c4_221, %c0_222], %218 {strides = array<i32>} : memref<8x128xf32, #tpu.memory_space<vmem>>, vector<1x128xf32>,
      %c5_i32_223 = arith.constant 5 : i32
      %220 = arith.addi %184, %c5_i32_223 : i32
      %221 = arith.index_cast %220 : i32 to index
      %222 = memref.load %arg0[%221] : memref<32xi32, #tpu.memory_space<smem>>
      %223 = arith.index_cast %222 : i32 to index
      %c0_224 = arith.constant 0 : index
      %c0_225 = arith.constant 0 : index
      %224 = vector.load %arg21[%223, %c0_224, %c0_225] : memref<16x1x128xf32, #tpu.memory_space<vmem>>, vector<1x1x128xf32>
      %225 = vector.shape_cast %224 : vector<1x1x128xf32> to vector<1x128xf32>
      %c5_226 = arith.constant 5 : index
      %c0_227 = arith.constant 0 : index
      %226 = vector.load %arg29[%c5_226, %c0_227] : memref<8x128xf32, #tpu.memory_space<vmem>>, vector<1x128xf32>
      tpu.vector_store %arg29[%c5_226, %c0_227], %225 {strides = array<i32>} : memref<8x128xf32, #tpu.memory_space<vmem>>, vector<1x128xf32>,
      %c6_i32_228 = arith.constant 6 : i32
      %227 = arith.addi %184, %c6_i32_228 : i32
      %228 = arith.index_cast %227 : i32 to index
      %229 = memref.load %arg0[%228] : memref<32xi32, #tpu.memory_space<smem>>
      %230 = arith.index_cast %229 : i32 to index
      %c0_229 = arith.constant 0 : index
      %c0_230 = arith.constant 0 : index
      %231 = vector.load %arg21[%230, %c0_229, %c0_230] : memref<16x1x128xf32, #tpu.memory_space<vmem>>, vector<1x1x128xf32>
      %232 = vector.shape_cast %231 : vector<1x1x128xf32> to vector<1x128xf32>
      %c6_231 = arith.constant 6 : index
      %c0_232 = arith.constant 0 : index
      %233 = vector.load %arg29[%c6_231, %c0_232] : memref<8x128xf32, #tpu.memory_space<vmem>>, vector<1x128xf32>
      tpu.vector_store %arg29[%c6_231, %c0_232], %232 {strides = array<i32>} : memref<8x128xf32, #tpu.memory_space<vmem>>, vector<1x128xf32>,
      %c7_i32_233 = arith.constant 7 : i32
      %234 = arith.addi %184, %c7_i32_233 : i32
      %235 = arith.index_cast %234 : i32 to index
      %236 = memref.load %arg0[%235] : memref<32xi32, #tpu.memory_space<smem>>
      %237 = arith.index_cast %236 : i32 to index
      %c0_234 = arith.constant 0 : index
      %c0_235 = arith.constant 0 : index
      %238 = vector.load %arg21[%237, %c0_234, %c0_235] : memref<16x1x128xf32, #tpu.memory_space<vmem>>, vector<1x1x128xf32>
      %239 = vector.shape_cast %238 : vector<1x1x128xf32> to vector<1x128xf32>
      %c7_236 = arith.constant 7 : index
      %c0_237 = arith.constant 0 : index
      %240 = vector.load %arg29[%c7_236, %c0_237] : memref<8x128xf32, #tpu.memory_space<vmem>>, vector<1x128xf32>
      tpu.vector_store %arg29[%c7_236, %c0_237], %239 {strides = array<i32>} : memref<8x128xf32, #tpu.memory_space<vmem>>, vector<1x128xf32>,
      %c0_238 = arith.constant 0 : index
      %c0_239 = arith.constant 0 : index
      %241 = vector.load %arg29[%c0_238, %c0_239] : memref<8x128xf32, #tpu.memory_space<vmem>>, vector<8x128xf32>
      %242 = arith.index_cast %184 : i32 to index
      %c0_240 = arith.constant 0 : index
      %243 = vector.load %arg25[%242, %c0_240] : memref<32x128xf32, #tpu.memory_space<vmem>>, vector<8x128xf32>
      tpu.vector_store %arg25[%242, %c0_240], %241 {strides = array<i32>} : memref<32x128xf32, #tpu.memory_space<vmem>>, vector<8x128xf32>,
    }
    %c4_i32_21 = arith.constant 4 : i32
    %c0_22 = arith.constant 0 : index
    %c0_23 = arith.constant 0 : index
    %25 = vector.load %arg25[%c0_22, %c0_23] : memref<32x128xf32, #tpu.memory_space<vmem>>, vector<32x128xf32>
    %26 = tpu.concatenate %25, %22 in 1 : vector<32x128xf32>, vector<32x128xf32> -> vector<32x256xf32>
    %c0_24 = arith.constant 0 : index
    %c0_25 = arith.constant 0 : index
    %27 = vector.load %arg9[%c0_24, %c0_25] : memref<256x128xbf16, #tpu.memory_space<vmem>>, vector<256x128xbf16>
    %28 = arith.truncf %26 : vector<32x256xf32> to vector<32x256xbf16>
    %cst_26 = arith.constant dense<0.000000e+00> : vector<32x128xf32>
    %29 = tpu.matmul %28, %27, %cst_26 {dimension_numbers = #tpu.dot_dimension_numbers<[1], [0], [0], [1], [0, 0, 1, 1], [], []>} : vector<32x256xbf16>, vector<256x128xbf16>, vector<32x128xf32> -> vector<32x128xf32>
    %c0_27 = arith.constant 0 : index
    %c0_28 = arith.constant 0 : index
    %30 = vector.load %arg10[%c0_27, %c0_28] : memref<1x128xf32, #tpu.memory_space<vmem>>, vector<1x128xf32>
    %31 = vector.broadcast %30 : vector<1x128xf32> to vector<32x128xf32>
    %32 = arith.addf %29, %31 : vector<32x128xf32>
    %cst_29 = arith.constant 0.000000e+00 : f32
    %33 = vector.broadcast %cst_29 : f32 to vector<32x128xf32>
    %34 = arith.maximumf %32, %33 : vector<32x128xf32>
    %c0_30 = arith.constant 0 : index
    %c0_31 = arith.constant 0 : index
    %35 = vector.load %arg23[%c0_30, %c0_31] : memref<32x128xf32, #tpu.memory_space<vmem>>, vector<32x128xf32>
    tpu.vector_store %arg23[%c0_30, %c0_31], %34 {strides = array<i32>} : memref<32x128xf32, #tpu.memory_space<vmem>>, vector<32x128xf32>,
    %c0_32 = arith.constant 0 : index
    %c0_33 = arith.constant 0 : index
    %36 = vector.load %arg24[%c0_32, %c0_33] : memref<32x128xf32, #tpu.memory_space<vmem>>, vector<32x128xf32>
    tpu.vector_store %arg24[%c0_32, %c0_33], %34 {strides = array<i32>} : memref<32x128xf32, #tpu.memory_space<vmem>>, vector<32x128xf32>,
    %c0_i32_34 = arith.constant 0 : i32
    %cst_35 = arith.constant 0.000000e+00 : f32
    %37 = vector.broadcast %cst_35 : f32 to vector<16x1x128xf32>
    %c0_36 = arith.constant 0 : index
    %c0_37 = arith.constant 0 : index
    %c0_38 = arith.constant 0 : index
    %38 = vector.load %arg22[%c0_36, %c0_37, %c0_38] : memref<16x1x128xf32, #tpu.memory_space<vmem>>, vector<16x1x128xf32>
    tpu.vector_store %arg22[%c0_36, %c0_37, %c0_38], %37 {strides = array<i32>} : memref<16x1x128xf32, #tpu.memory_space<vmem>>, vector<16x1x128xf32>,
    %c0_i32_39 = arith.constant 0 : i32
    %c4_i32_40 = arith.constant 4 : i32
    %39 = arith.addi %c0_i32_39, %c4_i32_40 : i32
    %c1_i32_41 = arith.constant 1 : i32
    scf.for %arg30 = %c0_i32_39 to %39 step %c1_i32_41  : i32 {
      %c8_i32_197 = arith.constant 8 : i32
      %183 = arith.muli %arg30, %c8_i32_197 : i32
      %184 = tpu.assume_multiple %183, 8 : i32
      %185 = arith.index_cast %184 : i32 to index
      %c0_198 = arith.constant 0 : index
      %186 = vector.load %arg24[%185, %c0_198] : memref<32x128xf32, #tpu.memory_space<vmem>>, vector<8x128xf32>
      %c0_i32_199 = arith.constant 0 : i32
      %187 = arith.addi %184, %c0_i32_199 : i32
      %188 = arith.index_cast %187 : i32 to index
      %189 = memref.load %arg1[%188] : memref<32xi32, #tpu.memory_space<smem>>
      %190 = arith.index_cast %189 : i32 to index
      %c0_200 = arith.constant 0 : index
      %c0_201 = arith.constant 0 : index
      %191 = vector.load %arg22[%190, %c0_200, %c0_201] : memref<16x1x128xf32, #tpu.memory_space<vmem>>, vector<1x1x128xf32>
      %192 = vector.shape_cast %191 : vector<1x1x128xf32> to vector<1x128xf32>
      %193 = vector.extract_strided_slice %186 {offsets = [0, 0], sizes = [1, 128], strides = [1, 1]} : vector<8x128xf32> to vector<1x128xf32>
      %194 = arith.addf %192, %193 : vector<1x128xf32>
      %195 = arith.index_cast %189 : i32 to index
      %c0_202 = arith.constant 0 : index
      %c0_203 = arith.constant 0 : index
      %196 = vector.load %arg22[%195, %c0_202, %c0_203] : memref<16x1x128xf32, #tpu.memory_space<vmem>>, vector<1x1x128xf32>
      %197 = vector.shape_cast %196 : vector<1x1x128xf32> to vector<1x128xf32>
      %198 = vector.shape_cast %194 : vector<1x128xf32> to vector<1x1x128xf32>
      tpu.vector_store %arg22[%195, %c0_202, %c0_203], %198 {strides = array<i32>} : memref<16x1x128xf32, #tpu.memory_space<vmem>>, vector<1x1x128xf32>,
      %c1_i32_204 = arith.constant 1 : i32
      %199 = arith.addi %184, %c1_i32_204 : i32
      %200 = arith.index_cast %199 : i32 to index
      %201 = memref.load %arg1[%200] : memref<32xi32, #tpu.memory_space<smem>>
      %202 = arith.index_cast %201 : i32 to index
      %c0_205 = arith.constant 0 : index
      %c0_206 = arith.constant 0 : index
      %203 = vector.load %arg22[%202, %c0_205, %c0_206] : memref<16x1x128xf32, #tpu.memory_space<vmem>>, vector<1x1x128xf32>
      %204 = vector.shape_cast %203 : vector<1x1x128xf32> to vector<1x128xf32>
      %205 = vector.extract_strided_slice %186 {offsets = [1, 0], sizes = [1, 128], strides = [1, 1]} : vector<8x128xf32> to vector<1x128xf32>
      %206 = arith.addf %204, %205 : vector<1x128xf32>
      %207 = arith.index_cast %201 : i32 to index
      %c0_207 = arith.constant 0 : index
      %c0_208 = arith.constant 0 : index
      %208 = vector.load %arg22[%207, %c0_207, %c0_208] : memref<16x1x128xf32, #tpu.memory_space<vmem>>, vector<1x1x128xf32>
      %209 = vector.shape_cast %208 : vector<1x1x128xf32> to vector<1x128xf32>
      %210 = vector.shape_cast %206 : vector<1x128xf32> to vector<1x1x128xf32>
      tpu.vector_store %arg22[%207, %c0_207, %c0_208], %210 {strides = array<i32>} : memref<16x1x128xf32, #tpu.memory_space<vmem>>, vector<1x1x128xf32>,
      %c2_i32_209 = arith.constant 2 : i32
      %211 = arith.addi %184, %c2_i32_209 : i32
      %212 = arith.index_cast %211 : i32 to index
      %213 = memref.load %arg1[%212] : memref<32xi32, #tpu.memory_space<smem>>
      %214 = arith.index_cast %213 : i32 to index
      %c0_210 = arith.constant 0 : index
      %c0_211 = arith.constant 0 : index
      %215 = vector.load %arg22[%214, %c0_210, %c0_211] : memref<16x1x128xf32, #tpu.memory_space<vmem>>, vector<1x1x128xf32>
      %216 = vector.shape_cast %215 : vector<1x1x128xf32> to vector<1x128xf32>
      %217 = vector.extract_strided_slice %186 {offsets = [2, 0], sizes = [1, 128], strides = [1, 1]} : vector<8x128xf32> to vector<1x128xf32>
      %218 = arith.addf %216, %217 : vector<1x128xf32>
      %219 = arith.index_cast %213 : i32 to index
      %c0_212 = arith.constant 0 : index
      %c0_213 = arith.constant 0 : index
      %220 = vector.load %arg22[%219, %c0_212, %c0_213] : memref<16x1x128xf32, #tpu.memory_space<vmem>>, vector<1x1x128xf32>
      %221 = vector.shape_cast %220 : vector<1x1x128xf32> to vector<1x128xf32>
      %222 = vector.shape_cast %218 : vector<1x128xf32> to vector<1x1x128xf32>
      tpu.vector_store %arg22[%219, %c0_212, %c0_213], %222 {strides = array<i32>} : memref<16x1x128xf32, #tpu.memory_space<vmem>>, vector<1x1x128xf32>,
      %c3_i32_214 = arith.constant 3 : i32
      %223 = arith.addi %184, %c3_i32_214 : i32
      %224 = arith.index_cast %223 : i32 to index
      %225 = memref.load %arg1[%224] : memref<32xi32, #tpu.memory_space<smem>>
      %226 = arith.index_cast %225 : i32 to index
      %c0_215 = arith.constant 0 : index
      %c0_216 = arith.constant 0 : index
      %227 = vector.load %arg22[%226, %c0_215, %c0_216] : memref<16x1x128xf32, #tpu.memory_space<vmem>>, vector<1x1x128xf32>
      %228 = vector.shape_cast %227 : vector<1x1x128xf32> to vector<1x128xf32>
      %229 = vector.extract_strided_slice %186 {offsets = [3, 0], sizes = [1, 128], strides = [1, 1]} : vector<8x128xf32> to vector<1x128xf32>
      %230 = arith.addf %228, %229 : vector<1x128xf32>
      %231 = arith.index_cast %225 : i32 to index
      %c0_217 = arith.constant 0 : index
      %c0_218 = arith.constant 0 : index
      %232 = vector.load %arg22[%231, %c0_217, %c0_218] : memref<16x1x128xf32, #tpu.memory_space<vmem>>, vector<1x1x128xf32>
      %233 = vector.shape_cast %232 : vector<1x1x128xf32> to vector<1x128xf32>
      %234 = vector.shape_cast %230 : vector<1x128xf32> to vector<1x1x128xf32>
      tpu.vector_store %arg22[%231, %c0_217, %c0_218], %234 {strides = array<i32>} : memref<16x1x128xf32, #tpu.memory_space<vmem>>, vector<1x1x128xf32>,
      %c4_i32_219 = arith.constant 4 : i32
      %235 = arith.addi %184, %c4_i32_219 : i32
      %236 = arith.index_cast %235 : i32 to index
      %237 = memref.load %arg1[%236] : memref<32xi32, #tpu.memory_space<smem>>
      %238 = arith.index_cast %237 : i32 to index
      %c0_220 = arith.constant 0 : index
      %c0_221 = arith.constant 0 : index
      %239 = vector.load %arg22[%238, %c0_220, %c0_221] : memref<16x1x128xf32, #tpu.memory_space<vmem>>, vector<1x1x128xf32>
      %240 = vector.shape_cast %239 : vector<1x1x128xf32> to vector<1x128xf32>
      %241 = vector.extract_strided_slice %186 {offsets = [4, 0], sizes = [1, 128], strides = [1, 1]} : vector<8x128xf32> to vector<1x128xf32>
      %242 = arith.addf %240, %241 : vector<1x128xf32>
      %243 = arith.index_cast %237 : i32 to index
      %c0_222 = arith.constant 0 : index
      %c0_223 = arith.constant 0 : index
      %244 = vector.load %arg22[%243, %c0_222, %c0_223] : memref<16x1x128xf32, #tpu.memory_space<vmem>>, vector<1x1x128xf32>
      %245 = vector.shape_cast %244 : vector<1x1x128xf32> to vector<1x128xf32>
      %246 = vector.shape_cast %242 : vector<1x128xf32> to vector<1x1x128xf32>
      tpu.vector_store %arg22[%243, %c0_222, %c0_223], %246 {strides = array<i32>} : memref<16x1x128xf32, #tpu.memory_space<vmem>>, vector<1x1x128xf32>,
      %c5_i32_224 = arith.constant 5 : i32
      %247 = arith.addi %184, %c5_i32_224 : i32
      %248 = arith.index_cast %247 : i32 to index
      %249 = memref.load %arg1[%248] : memref<32xi32, #tpu.memory_space<smem>>
      %250 = arith.index_cast %249 : i32 to index
      %c0_225 = arith.constant 0 : index
      %c0_226 = arith.constant 0 : index
      %251 = vector.load %arg22[%250, %c0_225, %c0_226] : memref<16x1x128xf32, #tpu.memory_space<vmem>>, vector<1x1x128xf32>
      %252 = vector.shape_cast %251 : vector<1x1x128xf32> to vector<1x128xf32>
      %253 = vector.extract_strided_slice %186 {offsets = [5, 0], sizes = [1, 128], strides = [1, 1]} : vector<8x128xf32> to vector<1x128xf32>
      %254 = arith.addf %252, %253 : vector<1x128xf32>
      %255 = arith.index_cast %249 : i32 to index
      %c0_227 = arith.constant 0 : index
      %c0_228 = arith.constant 0 : index
      %256 = vector.load %arg22[%255, %c0_227, %c0_228] : memref<16x1x128xf32, #tpu.memory_space<vmem>>, vector<1x1x128xf32>
      %257 = vector.shape_cast %256 : vector<1x1x128xf32> to vector<1x128xf32>
      %258 = vector.shape_cast %254 : vector<1x128xf32> to vector<1x1x128xf32>
      tpu.vector_store %arg22[%255, %c0_227, %c0_228], %258 {strides = array<i32>} : memref<16x1x128xf32, #tpu.memory_space<vmem>>, vector<1x1x128xf32>,
      %c6_i32_229 = arith.constant 6 : i32
      %259 = arith.addi %184, %c6_i32_229 : i32
      %260 = arith.index_cast %259 : i32 to index
      %261 = memref.load %arg1[%260] : memref<32xi32, #tpu.memory_space<smem>>
      %262 = arith.index_cast %261 : i32 to index
      %c0_230 = arith.constant 0 : index
      %c0_231 = arith.constant 0 : index
      %263 = vector.load %arg22[%262, %c0_230, %c0_231] : memref<16x1x128xf32, #tpu.memory_space<vmem>>, vector<1x1x128xf32>
      %264 = vector.shape_cast %263 : vector<1x1x128xf32> to vector<1x128xf32>
      %265 = vector.extract_strided_slice %186 {offsets = [6, 0], sizes = [1, 128], strides = [1, 1]} : vector<8x128xf32> to vector<1x128xf32>
      %266 = arith.addf %264, %265 : vector<1x128xf32>
      %267 = arith.index_cast %261 : i32 to index
      %c0_232 = arith.constant 0 : index
      %c0_233 = arith.constant 0 : index
      %268 = vector.load %arg22[%267, %c0_232, %c0_233] : memref<16x1x128xf32, #tpu.memory_space<vmem>>, vector<1x1x128xf32>
      %269 = vector.shape_cast %268 : vector<1x1x128xf32> to vector<1x128xf32>
      %270 = vector.shape_cast %266 : vector<1x128xf32> to vector<1x1x128xf32>
      tpu.vector_store %arg22[%267, %c0_232, %c0_233], %270 {strides = array<i32>} : memref<16x1x128xf32, #tpu.memory_space<vmem>>, vector<1x1x128xf32>,
      %c7_i32_234 = arith.constant 7 : i32
      %271 = arith.addi %184, %c7_i32_234 : i32
      %272 = arith.index_cast %271 : i32 to index
      %273 = memref.load %arg1[%272] : memref<32xi32, #tpu.memory_space<smem>>
      %274 = arith.index_cast %273 : i32 to index
      %c0_235 = arith.constant 0 : index
      %c0_236 = arith.constant 0 : index
      %275 = vector.load %arg22[%274, %c0_235, %c0_236] : memref<16x1x128xf32, #tpu.memory_space<vmem>>, vector<1x1x128xf32>
      %276 = vector.shape_cast %275 : vector<1x1x128xf32> to vector<1x128xf32>
      %277 = vector.extract_strided_slice %186 {offsets = [7, 0], sizes = [1, 128], strides = [1, 1]} : vector<8x128xf32> to vector<1x128xf32>
      %278 = arith.addf %276, %277 : vector<1x128xf32>
      %279 = arith.index_cast %273 : i32 to index
      %c0_237 = arith.constant 0 : index
      %c0_238 = arith.constant 0 : index
      %280 = vector.load %arg22[%279, %c0_237, %c0_238] : memref<16x1x128xf32, #tpu.memory_space<vmem>>, vector<1x1x128xf32>
      %281 = vector.shape_cast %280 : vector<1x1x128xf32> to vector<1x128xf32>
      %282 = vector.shape_cast %278 : vector<1x128xf32> to vector<1x1x128xf32>
      tpu.vector_store %arg22[%279, %c0_237, %c0_238], %282 {strides = array<i32>} : memref<16x1x128xf32, #tpu.memory_space<vmem>>, vector<1x1x128xf32>,
    }
    %c4_i32_42 = arith.constant 4 : i32
    %c0_i32_43 = arith.constant 0 : i32
    %c4_i32_44 = arith.constant 4 : i32
    %40 = arith.addi %c0_i32_43, %c4_i32_44 : i32
    %c1_i32_45 = arith.constant 1 : i32
    scf.for %arg30 = %c0_i32_43 to %40 step %c1_i32_45  : i32 {
      %c8_i32_197 = arith.constant 8 : i32
      %183 = arith.muli %arg30, %c8_i32_197 : i32
      %184 = tpu.assume_multiple %183, 8 : i32
      %c0_i32_198 = arith.constant 0 : i32
      %185 = arith.addi %184, %c0_i32_198 : i32
      %186 = arith.index_cast %185 : i32 to index
      %187 = memref.load %arg1[%186] : memref<32xi32, #tpu.memory_space<smem>>
      %188 = arith.index_cast %187 : i32 to index
      %c0_199 = arith.constant 0 : index
      %c0_200 = arith.constant 0 : index
      %189 = vector.load %arg22[%188, %c0_199, %c0_200] : memref<16x1x128xf32, #tpu.memory_space<vmem>>, vector<1x1x128xf32>
      %190 = vector.shape_cast %189 : vector<1x1x128xf32> to vector<1x128xf32>
      %c0_201 = arith.constant 0 : index
      %c0_202 = arith.constant 0 : index
      %191 = vector.load %arg29[%c0_201, %c0_202] : memref<8x128xf32, #tpu.memory_space<vmem>>, vector<1x128xf32>
      tpu.vector_store %arg29[%c0_201, %c0_202], %190 {strides = array<i32>} : memref<8x128xf32, #tpu.memory_space<vmem>>, vector<1x128xf32>,
      %c1_i32_203 = arith.constant 1 : i32
      %192 = arith.addi %184, %c1_i32_203 : i32
      %193 = arith.index_cast %192 : i32 to index
      %194 = memref.load %arg1[%193] : memref<32xi32, #tpu.memory_space<smem>>
      %195 = arith.index_cast %194 : i32 to index
      %c0_204 = arith.constant 0 : index
      %c0_205 = arith.constant 0 : index
      %196 = vector.load %arg22[%195, %c0_204, %c0_205] : memref<16x1x128xf32, #tpu.memory_space<vmem>>, vector<1x1x128xf32>
      %197 = vector.shape_cast %196 : vector<1x1x128xf32> to vector<1x128xf32>
      %c1_206 = arith.constant 1 : index
      %c0_207 = arith.constant 0 : index
      %198 = vector.load %arg29[%c1_206, %c0_207] : memref<8x128xf32, #tpu.memory_space<vmem>>, vector<1x128xf32>
      tpu.vector_store %arg29[%c1_206, %c0_207], %197 {strides = array<i32>} : memref<8x128xf32, #tpu.memory_space<vmem>>, vector<1x128xf32>,
      %c2_i32_208 = arith.constant 2 : i32
      %199 = arith.addi %184, %c2_i32_208 : i32
      %200 = arith.index_cast %199 : i32 to index
      %201 = memref.load %arg1[%200] : memref<32xi32, #tpu.memory_space<smem>>
      %202 = arith.index_cast %201 : i32 to index
      %c0_209 = arith.constant 0 : index
      %c0_210 = arith.constant 0 : index
      %203 = vector.load %arg22[%202, %c0_209, %c0_210] : memref<16x1x128xf32, #tpu.memory_space<vmem>>, vector<1x1x128xf32>
      %204 = vector.shape_cast %203 : vector<1x1x128xf32> to vector<1x128xf32>
      %c2_211 = arith.constant 2 : index
      %c0_212 = arith.constant 0 : index
      %205 = vector.load %arg29[%c2_211, %c0_212] : memref<8x128xf32, #tpu.memory_space<vmem>>, vector<1x128xf32>
      tpu.vector_store %arg29[%c2_211, %c0_212], %204 {strides = array<i32>} : memref<8x128xf32, #tpu.memory_space<vmem>>, vector<1x128xf32>,
      %c3_i32_213 = arith.constant 3 : i32
      %206 = arith.addi %184, %c3_i32_213 : i32
      %207 = arith.index_cast %206 : i32 to index
      %208 = memref.load %arg1[%207] : memref<32xi32, #tpu.memory_space<smem>>
      %209 = arith.index_cast %208 : i32 to index
      %c0_214 = arith.constant 0 : index
      %c0_215 = arith.constant 0 : index
      %210 = vector.load %arg22[%209, %c0_214, %c0_215] : memref<16x1x128xf32, #tpu.memory_space<vmem>>, vector<1x1x128xf32>
      %211 = vector.shape_cast %210 : vector<1x1x128xf32> to vector<1x128xf32>
      %c3_216 = arith.constant 3 : index
      %c0_217 = arith.constant 0 : index
      %212 = vector.load %arg29[%c3_216, %c0_217] : memref<8x128xf32, #tpu.memory_space<vmem>>, vector<1x128xf32>
      tpu.vector_store %arg29[%c3_216, %c0_217], %211 {strides = array<i32>} : memref<8x128xf32, #tpu.memory_space<vmem>>, vector<1x128xf32>,
      %c4_i32_218 = arith.constant 4 : i32
      %213 = arith.addi %184, %c4_i32_218 : i32
      %214 = arith.index_cast %213 : i32 to index
      %215 = memref.load %arg1[%214] : memref<32xi32, #tpu.memory_space<smem>>
      %216 = arith.index_cast %215 : i32 to index
      %c0_219 = arith.constant 0 : index
      %c0_220 = arith.constant 0 : index
      %217 = vector.load %arg22[%216, %c0_219, %c0_220] : memref<16x1x128xf32, #tpu.memory_space<vmem>>, vector<1x1x128xf32>
      %218 = vector.shape_cast %217 : vector<1x1x128xf32> to vector<1x128xf32>
      %c4_221 = arith.constant 4 : index
      %c0_222 = arith.constant 0 : index
      %219 = vector.load %arg29[%c4_221, %c0_222] : memref<8x128xf32, #tpu.memory_space<vmem>>, vector<1x128xf32>
      tpu.vector_store %arg29[%c4_221, %c0_222], %218 {strides = array<i32>} : memref<8x128xf32, #tpu.memory_space<vmem>>, vector<1x128xf32>,
      %c5_i32_223 = arith.constant 5 : i32
      %220 = arith.addi %184, %c5_i32_223 : i32
      %221 = arith.index_cast %220 : i32 to index
      %222 = memref.load %arg1[%221] : memref<32xi32, #tpu.memory_space<smem>>
      %223 = arith.index_cast %222 : i32 to index
      %c0_224 = arith.constant 0 : index
      %c0_225 = arith.constant 0 : index
      %224 = vector.load %arg22[%223, %c0_224, %c0_225] : memref<16x1x128xf32, #tpu.memory_space<vmem>>, vector<1x1x128xf32>
      %225 = vector.shape_cast %224 : vector<1x1x128xf32> to vector<1x128xf32>
      %c5_226 = arith.constant 5 : index
      %c0_227 = arith.constant 0 : index
      %226 = vector.load %arg29[%c5_226, %c0_227] : memref<8x128xf32, #tpu.memory_space<vmem>>, vector<1x128xf32>
      tpu.vector_store %arg29[%c5_226, %c0_227], %225 {strides = array<i32>} : memref<8x128xf32, #tpu.memory_space<vmem>>, vector<1x128xf32>,
      %c6_i32_228 = arith.constant 6 : i32
      %227 = arith.addi %184, %c6_i32_228 : i32
      %228 = arith.index_cast %227 : i32 to index
      %229 = memref.load %arg1[%228] : memref<32xi32, #tpu.memory_space<smem>>
      %230 = arith.index_cast %229 : i32 to index
      %c0_229 = arith.constant 0 : index
      %c0_230 = arith.constant 0 : index
      %231 = vector.load %arg22[%230, %c0_229, %c0_230] : memref<16x1x128xf32, #tpu.memory_space<vmem>>, vector<1x1x128xf32>
      %232 = vector.shape_cast %231 : vector<1x1x128xf32> to vector<1x128xf32>
      %c6_231 = arith.constant 6 : index
      %c0_232 = arith.constant 0 : index
      %233 = vector.load %arg29[%c6_231, %c0_232] : memref<8x128xf32, #tpu.memory_space<vmem>>, vector<1x128xf32>
      tpu.vector_store %arg29[%c6_231, %c0_232], %232 {strides = array<i32>} : memref<8x128xf32, #tpu.memory_space<vmem>>, vector<1x128xf32>,
      %c7_i32_233 = arith.constant 7 : i32
      %234 = arith.addi %184, %c7_i32_233 : i32
      %235 = arith.index_cast %234 : i32 to index
      %236 = memref.load %arg1[%235] : memref<32xi32, #tpu.memory_space<smem>>
      %237 = arith.index_cast %236 : i32 to index
      %c0_234 = arith.constant 0 : index
      %c0_235 = arith.constant 0 : index
      %238 = vector.load %arg22[%237, %c0_234, %c0_235] : memref<16x1x128xf32, #tpu.memory_space<vmem>>, vector<1x1x128xf32>
      %239 = vector.shape_cast %238 : vector<1x1x128xf32> to vector<1x128xf32>
      %c7_236 = arith.constant 7 : index
      %c0_237 = arith.constant 0 : index
      %240 = vector.load %arg29[%c7_236, %c0_237] : memref<8x128xf32, #tpu.memory_space<vmem>>, vector<1x128xf32>
      tpu.vector_store %arg29[%c7_236, %c0_237], %239 {strides = array<i32>} : memref<8x128xf32, #tpu.memory_space<vmem>>, vector<1x128xf32>,
      %c0_238 = arith.constant 0 : index
      %c0_239 = arith.constant 0 : index
      %241 = vector.load %arg29[%c0_238, %c0_239] : memref<8x128xf32, #tpu.memory_space<vmem>>, vector<8x128xf32>
      %242 = arith.index_cast %184 : i32 to index
      %c0_240 = arith.constant 0 : index
      %243 = vector.load %arg25[%242, %c0_240] : memref<32x128xf32, #tpu.memory_space<vmem>>, vector<8x128xf32>
      tpu.vector_store %arg25[%242, %c0_240], %241 {strides = array<i32>} : memref<32x128xf32, #tpu.memory_space<vmem>>, vector<8x128xf32>,
    }
    %c4_i32_46 = arith.constant 4 : i32
    %c0_47 = arith.constant 0 : index
    %c0_48 = arith.constant 0 : index
    %41 = vector.load %arg25[%c0_47, %c0_48] : memref<32x128xf32, #tpu.memory_space<vmem>>, vector<32x128xf32>
    %c0_49 = arith.constant 0 : index
    %c0_50 = arith.constant 0 : index
    %42 = vector.load %arg24[%c0_49, %c0_50] : memref<32x128xf32, #tpu.memory_space<vmem>>, vector<32x128xf32>
    %43 = arith.subf %41, %42 : vector<32x128xf32>
    %c0_51 = arith.constant 0 : index
    %c0_52 = arith.constant 0 : index
    %44 = vector.load %arg23[%c0_51, %c0_52] : memref<32x128xf32, #tpu.memory_space<vmem>>, vector<32x128xf32>
    %45 = arith.index_cast %c0_i32_34 : i32 to index
    %c0_53 = arith.constant 0 : index
    %c0_54 = arith.constant 0 : index
    %46 = vector.load %arg11[%45, %c0_53, %c0_54] : memref<3x128x128xbf16, #tpu.memory_space<vmem>>, vector<1x128x128xbf16>
    %47 = vector.shape_cast %46 : vector<1x128x128xbf16> to vector<128x128xbf16>
    %48 = arith.truncf %43 : vector<32x128xf32> to vector<32x128xbf16>
    %cst_55 = arith.constant dense<0.000000e+00> : vector<32x128xf32>
    %49 = tpu.matmul %48, %47, %cst_55 {dimension_numbers = #tpu.dot_dimension_numbers<[1], [0], [0], [1], [0, 0, 1, 1], [], []>} : vector<32x128xbf16>, vector<128x128xbf16>, vector<32x128xf32> -> vector<32x128xf32>
    %50 = arith.addf %44, %49 : vector<32x128xf32>
    %51 = arith.index_cast %c0_i32_34 : i32 to index
    %c0_56 = arith.constant 0 : index
    %c0_57 = arith.constant 0 : index
    %52 = vector.load %arg12[%51, %c0_56, %c0_57] : memref<3x1x128xf32, #tpu.memory_space<vmem>>, vector<1x1x128xf32>
    %53 = vector.shape_cast %52 : vector<1x1x128xf32> to vector<1x128xf32>
    %54 = vector.broadcast %53 : vector<1x128xf32> to vector<32x128xf32>
    %55 = arith.addf %50, %54 : vector<32x128xf32>
    %cst_58 = arith.constant 0.000000e+00 : f32
    %56 = vector.broadcast %cst_58 : f32 to vector<32x128xf32>
    %57 = arith.maximumf %55, %56 : vector<32x128xf32>
    %c0_59 = arith.constant 0 : index
    %c0_60 = arith.constant 0 : index
    %58 = vector.load %arg24[%c0_59, %c0_60] : memref<32x128xf32, #tpu.memory_space<vmem>>, vector<32x128xf32>
    tpu.vector_store %arg24[%c0_59, %c0_60], %57 {strides = array<i32>} : memref<32x128xf32, #tpu.memory_space<vmem>>, vector<32x128xf32>,
    %c1_i32_61 = arith.constant 1 : i32
    %cst_62 = arith.constant 0.000000e+00 : f32
    %59 = vector.broadcast %cst_62 : f32 to vector<16x1x128xf32>
    %c0_63 = arith.constant 0 : index
    %c0_64 = arith.constant 0 : index
    %c0_65 = arith.constant 0 : index
    %60 = vector.load %arg22[%c0_63, %c0_64, %c0_65] : memref<16x1x128xf32, #tpu.memory_space<vmem>>, vector<16x1x128xf32>
    tpu.vector_store %arg22[%c0_63, %c0_64, %c0_65], %59 {strides = array<i32>} : memref<16x1x128xf32, #tpu.memory_space<vmem>>, vector<16x1x128xf32>,
    %c0_i32_66 = arith.constant 0 : i32
    %c4_i32_67 = arith.constant 4 : i32
    %61 = arith.addi %c0_i32_66, %c4_i32_67 : i32
    %c1_i32_68 = arith.constant 1 : i32
    scf.for %arg30 = %c0_i32_66 to %61 step %c1_i32_68  : i32 {
      %c8_i32_197 = arith.constant 8 : i32
      %183 = arith.muli %arg30, %c8_i32_197 : i32
      %184 = tpu.assume_multiple %183, 8 : i32
      %185 = arith.index_cast %184 : i32 to index
      %c0_198 = arith.constant 0 : index
      %186 = vector.load %arg24[%185, %c0_198] : memref<32x128xf32, #tpu.memory_space<vmem>>, vector<8x128xf32>
      %c0_i32_199 = arith.constant 0 : i32
      %187 = arith.addi %184, %c0_i32_199 : i32
      %188 = arith.index_cast %187 : i32 to index
      %189 = memref.load %arg1[%188] : memref<32xi32, #tpu.memory_space<smem>>
      %190 = arith.index_cast %189 : i32 to index
      %c0_200 = arith.constant 0 : index
      %c0_201 = arith.constant 0 : index
      %191 = vector.load %arg22[%190, %c0_200, %c0_201] : memref<16x1x128xf32, #tpu.memory_space<vmem>>, vector<1x1x128xf32>
      %192 = vector.shape_cast %191 : vector<1x1x128xf32> to vector<1x128xf32>
      %193 = vector.extract_strided_slice %186 {offsets = [0, 0], sizes = [1, 128], strides = [1, 1]} : vector<8x128xf32> to vector<1x128xf32>
      %194 = arith.addf %192, %193 : vector<1x128xf32>
      %195 = arith.index_cast %189 : i32 to index
      %c0_202 = arith.constant 0 : index
      %c0_203 = arith.constant 0 : index
      %196 = vector.load %arg22[%195, %c0_202, %c0_203] : memref<16x1x128xf32, #tpu.memory_space<vmem>>, vector<1x1x128xf32>
      %197 = vector.shape_cast %196 : vector<1x1x128xf32> to vector<1x128xf32>
      %198 = vector.shape_cast %194 : vector<1x128xf32> to vector<1x1x128xf32>
      tpu.vector_store %arg22[%195, %c0_202, %c0_203], %198 {strides = array<i32>} : memref<16x1x128xf32, #tpu.memory_space<vmem>>, vector<1x1x128xf32>,
      %c1_i32_204 = arith.constant 1 : i32
      %199 = arith.addi %184, %c1_i32_204 : i32
      %200 = arith.index_cast %199 : i32 to index
      %201 = memref.load %arg1[%200] : memref<32xi32, #tpu.memory_space<smem>>
      %202 = arith.index_cast %201 : i32 to index
      %c0_205 = arith.constant 0 : index
      %c0_206 = arith.constant 0 : index
      %203 = vector.load %arg22[%202, %c0_205, %c0_206] : memref<16x1x128xf32, #tpu.memory_space<vmem>>, vector<1x1x128xf32>
      %204 = vector.shape_cast %203 : vector<1x1x128xf32> to vector<1x128xf32>
      %205 = vector.extract_strided_slice %186 {offsets = [1, 0], sizes = [1, 128], strides = [1, 1]} : vector<8x128xf32> to vector<1x128xf32>
      %206 = arith.addf %204, %205 : vector<1x128xf32>
      %207 = arith.index_cast %201 : i32 to index
      %c0_207 = arith.constant 0 : index
      %c0_208 = arith.constant 0 : index
      %208 = vector.load %arg22[%207, %c0_207, %c0_208] : memref<16x1x128xf32, #tpu.memory_space<vmem>>, vector<1x1x128xf32>
      %209 = vector.shape_cast %208 : vector<1x1x128xf32> to vector<1x128xf32>
      %210 = vector.shape_cast %206 : vector<1x128xf32> to vector<1x1x128xf32>
      tpu.vector_store %arg22[%207, %c0_207, %c0_208], %210 {strides = array<i32>} : memref<16x1x128xf32, #tpu.memory_space<vmem>>, vector<1x1x128xf32>,
      %c2_i32_209 = arith.constant 2 : i32
      %211 = arith.addi %184, %c2_i32_209 : i32
      %212 = arith.index_cast %211 : i32 to index
      %213 = memref.load %arg1[%212] : memref<32xi32, #tpu.memory_space<smem>>
      %214 = arith.index_cast %213 : i32 to index
      %c0_210 = arith.constant 0 : index
      %c0_211 = arith.constant 0 : index
      %215 = vector.load %arg22[%214, %c0_210, %c0_211] : memref<16x1x128xf32, #tpu.memory_space<vmem>>, vector<1x1x128xf32>
      %216 = vector.shape_cast %215 : vector<1x1x128xf32> to vector<1x128xf32>
      %217 = vector.extract_strided_slice %186 {offsets = [2, 0], sizes = [1, 128], strides = [1, 1]} : vector<8x128xf32> to vector<1x128xf32>
      %218 = arith.addf %216, %217 : vector<1x128xf32>
      %219 = arith.index_cast %213 : i32 to index
      %c0_212 = arith.constant 0 : index
      %c0_213 = arith.constant 0 : index
      %220 = vector.load %arg22[%219, %c0_212, %c0_213] : memref<16x1x128xf32, #tpu.memory_space<vmem>>, vector<1x1x128xf32>
      %221 = vector.shape_cast %220 : vector<1x1x128xf32> to vector<1x128xf32>
      %222 = vector.shape_cast %218 : vector<1x128xf32> to vector<1x1x128xf32>
      tpu.vector_store %arg22[%219, %c0_212, %c0_213], %222 {strides = array<i32>} : memref<16x1x128xf32, #tpu.memory_space<vmem>>, vector<1x1x128xf32>,
      %c3_i32_214 = arith.constant 3 : i32
      %223 = arith.addi %184, %c3_i32_214 : i32
      %224 = arith.index_cast %223 : i32 to index
      %225 = memref.load %arg1[%224] : memref<32xi32, #tpu.memory_space<smem>>
      %226 = arith.index_cast %225 : i32 to index
      %c0_215 = arith.constant 0 : index
      %c0_216 = arith.constant 0 : index
      %227 = vector.load %arg22[%226, %c0_215, %c0_216] : memref<16x1x128xf32, #tpu.memory_space<vmem>>, vector<1x1x128xf32>
      %228 = vector.shape_cast %227 : vector<1x1x128xf32> to vector<1x128xf32>
      %229 = vector.extract_strided_slice %186 {offsets = [3, 0], sizes = [1, 128], strides = [1, 1]} : vector<8x128xf32> to vector<1x128xf32>
      %230 = arith.addf %228, %229 : vector<1x128xf32>
      %231 = arith.index_cast %225 : i32 to index
      %c0_217 = arith.constant 0 : index
      %c0_218 = arith.constant 0 : index
      %232 = vector.load %arg22[%231, %c0_217, %c0_218] : memref<16x1x128xf32, #tpu.memory_space<vmem>>, vector<1x1x128xf32>
      %233 = vector.shape_cast %232 : vector<1x1x128xf32> to vector<1x128xf32>
      %234 = vector.shape_cast %230 : vector<1x128xf32> to vector<1x1x128xf32>
      tpu.vector_store %arg22[%231, %c0_217, %c0_218], %234 {strides = array<i32>} : memref<16x1x128xf32, #tpu.memory_space<vmem>>, vector<1x1x128xf32>,
      %c4_i32_219 = arith.constant 4 : i32
      %235 = arith.addi %184, %c4_i32_219 : i32
      %236 = arith.index_cast %235 : i32 to index
      %237 = memref.load %arg1[%236] : memref<32xi32, #tpu.memory_space<smem>>
      %238 = arith.index_cast %237 : i32 to index
      %c0_220 = arith.constant 0 : index
      %c0_221 = arith.constant 0 : index
      %239 = vector.load %arg22[%238, %c0_220, %c0_221] : memref<16x1x128xf32, #tpu.memory_space<vmem>>, vector<1x1x128xf32>
      %240 = vector.shape_cast %239 : vector<1x1x128xf32> to vector<1x128xf32>
      %241 = vector.extract_strided_slice %186 {offsets = [4, 0], sizes = [1, 128], strides = [1, 1]} : vector<8x128xf32> to vector<1x128xf32>
      %242 = arith.addf %240, %241 : vector<1x128xf32>
      %243 = arith.index_cast %237 : i32 to index
      %c0_222 = arith.constant 0 : index
      %c0_223 = arith.constant 0 : index
      %244 = vector.load %arg22[%243, %c0_222, %c0_223] : memref<16x1x128xf32, #tpu.memory_space<vmem>>, vector<1x1x128xf32>
      %245 = vector.shape_cast %244 : vector<1x1x128xf32> to vector<1x128xf32>
      %246 = vector.shape_cast %242 : vector<1x128xf32> to vector<1x1x128xf32>
      tpu.vector_store %arg22[%243, %c0_222, %c0_223], %246 {strides = array<i32>} : memref<16x1x128xf32, #tpu.memory_space<vmem>>, vector<1x1x128xf32>,
      %c5_i32_224 = arith.constant 5 : i32
      %247 = arith.addi %184, %c5_i32_224 : i32
      %248 = arith.index_cast %247 : i32 to index
      %249 = memref.load %arg1[%248] : memref<32xi32, #tpu.memory_space<smem>>
      %250 = arith.index_cast %249 : i32 to index
      %c0_225 = arith.constant 0 : index
      %c0_226 = arith.constant 0 : index
      %251 = vector.load %arg22[%250, %c0_225, %c0_226] : memref<16x1x128xf32, #tpu.memory_space<vmem>>, vector<1x1x128xf32>
      %252 = vector.shape_cast %251 : vector<1x1x128xf32> to vector<1x128xf32>
      %253 = vector.extract_strided_slice %186 {offsets = [5, 0], sizes = [1, 128], strides = [1, 1]} : vector<8x128xf32> to vector<1x128xf32>
      %254 = arith.addf %252, %253 : vector<1x128xf32>
      %255 = arith.index_cast %249 : i32 to index
      %c0_227 = arith.constant 0 : index
      %c0_228 = arith.constant 0 : index
      %256 = vector.load %arg22[%255, %c0_227, %c0_228] : memref<16x1x128xf32, #tpu.memory_space<vmem>>, vector<1x1x128xf32>
      %257 = vector.shape_cast %256 : vector<1x1x128xf32> to vector<1x128xf32>
      %258 = vector.shape_cast %254 : vector<1x128xf32> to vector<1x1x128xf32>
      tpu.vector_store %arg22[%255, %c0_227, %c0_228], %258 {strides = array<i32>} : memref<16x1x128xf32, #tpu.memory_space<vmem>>, vector<1x1x128xf32>,
      %c6_i32_229 = arith.constant 6 : i32
      %259 = arith.addi %184, %c6_i32_229 : i32
      %260 = arith.index_cast %259 : i32 to index
      %261 = memref.load %arg1[%260] : memref<32xi32, #tpu.memory_space<smem>>
      %262 = arith.index_cast %261 : i32 to index
      %c0_230 = arith.constant 0 : index
      %c0_231 = arith.constant 0 : index
      %263 = vector.load %arg22[%262, %c0_230, %c0_231] : memref<16x1x128xf32, #tpu.memory_space<vmem>>, vector<1x1x128xf32>
      %264 = vector.shape_cast %263 : vector<1x1x128xf32> to vector<1x128xf32>
      %265 = vector.extract_strided_slice %186 {offsets = [6, 0], sizes = [1, 128], strides = [1, 1]} : vector<8x128xf32> to vector<1x128xf32>
      %266 = arith.addf %264, %265 : vector<1x128xf32>
      %267 = arith.index_cast %261 : i32 to index
      %c0_232 = arith.constant 0 : index
      %c0_233 = arith.constant 0 : index
      %268 = vector.load %arg22[%267, %c0_232, %c0_233] : memref<16x1x128xf32, #tpu.memory_space<vmem>>, vector<1x1x128xf32>
      %269 = vector.shape_cast %268 : vector<1x1x128xf32> to vector<1x128xf32>
      %270 = vector.shape_cast %266 : vector<1x128xf32> to vector<1x1x128xf32>
      tpu.vector_store %arg22[%267, %c0_232, %c0_233], %270 {strides = array<i32>} : memref<16x1x128xf32, #tpu.memory_space<vmem>>, vector<1x1x128xf32>,
      %c7_i32_234 = arith.constant 7 : i32
      %271 = arith.addi %184, %c7_i32_234 : i32
      %272 = arith.index_cast %271 : i32 to index
      %273 = memref.load %arg1[%272] : memref<32xi32, #tpu.memory_space<smem>>
      %274 = arith.index_cast %273 : i32 to index
      %c0_235 = arith.constant 0 : index
      %c0_236 = arith.constant 0 : index
      %275 = vector.load %arg22[%274, %c0_235, %c0_236] : memref<16x1x128xf32, #tpu.memory_space<vmem>>, vector<1x1x128xf32>
      %276 = vector.shape_cast %275 : vector<1x1x128xf32> to vector<1x128xf32>
      %277 = vector.extract_strided_slice %186 {offsets = [7, 0], sizes = [1, 128], strides = [1, 1]} : vector<8x128xf32> to vector<1x128xf32>
      %278 = arith.addf %276, %277 : vector<1x128xf32>
      %279 = arith.index_cast %273 : i32 to index
      %c0_237 = arith.constant 0 : index
      %c0_238 = arith.constant 0 : index
      %280 = vector.load %arg22[%279, %c0_237, %c0_238] : memref<16x1x128xf32, #tpu.memory_space<vmem>>, vector<1x1x128xf32>
      %281 = vector.shape_cast %280 : vector<1x1x128xf32> to vector<1x128xf32>
      %282 = vector.shape_cast %278 : vector<1x128xf32> to vector<1x1x128xf32>
      tpu.vector_store %arg22[%279, %c0_237, %c0_238], %282 {strides = array<i32>} : memref<16x1x128xf32, #tpu.memory_space<vmem>>, vector<1x1x128xf32>,
    }
    %c4_i32_69 = arith.constant 4 : i32
    %c0_i32_70 = arith.constant 0 : i32
    %c4_i32_71 = arith.constant 4 : i32
    %62 = arith.addi %c0_i32_70, %c4_i32_71 : i32
    %c1_i32_72 = arith.constant 1 : i32
    scf.for %arg30 = %c0_i32_70 to %62 step %c1_i32_72  : i32 {
      %c8_i32_197 = arith.constant 8 : i32
      %183 = arith.muli %arg30, %c8_i32_197 : i32
      %184 = tpu.assume_multiple %183, 8 : i32
      %c0_i32_198 = arith.constant 0 : i32
      %185 = arith.addi %184, %c0_i32_198 : i32
      %186 = arith.index_cast %185 : i32 to index
      %187 = memref.load %arg1[%186] : memref<32xi32, #tpu.memory_space<smem>>
      %188 = arith.index_cast %187 : i32 to index
      %c0_199 = arith.constant 0 : index
      %c0_200 = arith.constant 0 : index
      %189 = vector.load %arg22[%188, %c0_199, %c0_200] : memref<16x1x128xf32, #tpu.memory_space<vmem>>, vector<1x1x128xf32>
      %190 = vector.shape_cast %189 : vector<1x1x128xf32> to vector<1x128xf32>
      %c0_201 = arith.constant 0 : index
      %c0_202 = arith.constant 0 : index
      %191 = vector.load %arg29[%c0_201, %c0_202] : memref<8x128xf32, #tpu.memory_space<vmem>>, vector<1x128xf32>
      tpu.vector_store %arg29[%c0_201, %c0_202], %190 {strides = array<i32>} : memref<8x128xf32, #tpu.memory_space<vmem>>, vector<1x128xf32>,
      %c1_i32_203 = arith.constant 1 : i32
      %192 = arith.addi %184, %c1_i32_203 : i32
      %193 = arith.index_cast %192 : i32 to index
      %194 = memref.load %arg1[%193] : memref<32xi32, #tpu.memory_space<smem>>
      %195 = arith.index_cast %194 : i32 to index
      %c0_204 = arith.constant 0 : index
      %c0_205 = arith.constant 0 : index
      %196 = vector.load %arg22[%195, %c0_204, %c0_205] : memref<16x1x128xf32, #tpu.memory_space<vmem>>, vector<1x1x128xf32>
      %197 = vector.shape_cast %196 : vector<1x1x128xf32> to vector<1x128xf32>
      %c1_206 = arith.constant 1 : index
      %c0_207 = arith.constant 0 : index
      %198 = vector.load %arg29[%c1_206, %c0_207] : memref<8x128xf32, #tpu.memory_space<vmem>>, vector<1x128xf32>
      tpu.vector_store %arg29[%c1_206, %c0_207], %197 {strides = array<i32>} : memref<8x128xf32, #tpu.memory_space<vmem>>, vector<1x128xf32>,
      %c2_i32_208 = arith.constant 2 : i32
      %199 = arith.addi %184, %c2_i32_208 : i32
      %200 = arith.index_cast %199 : i32 to index
      %201 = memref.load %arg1[%200] : memref<32xi32, #tpu.memory_space<smem>>
      %202 = arith.index_cast %201 : i32 to index
      %c0_209 = arith.constant 0 : index
      %c0_210 = arith.constant 0 : index
      %203 = vector.load %arg22[%202, %c0_209, %c0_210] : memref<16x1x128xf32, #tpu.memory_space<vmem>>, vector<1x1x128xf32>
      %204 = vector.shape_cast %203 : vector<1x1x128xf32> to vector<1x128xf32>
      %c2_211 = arith.constant 2 : index
      %c0_212 = arith.constant 0 : index
      %205 = vector.load %arg29[%c2_211, %c0_212] : memref<8x128xf32, #tpu.memory_space<vmem>>, vector<1x128xf32>
      tpu.vector_store %arg29[%c2_211, %c0_212], %204 {strides = array<i32>} : memref<8x128xf32, #tpu.memory_space<vmem>>, vector<1x128xf32>,
      %c3_i32_213 = arith.constant 3 : i32
      %206 = arith.addi %184, %c3_i32_213 : i32
      %207 = arith.index_cast %206 : i32 to index
      %208 = memref.load %arg1[%207] : memref<32xi32, #tpu.memory_space<smem>>
      %209 = arith.index_cast %208 : i32 to index
      %c0_214 = arith.constant 0 : index
      %c0_215 = arith.constant 0 : index
      %210 = vector.load %arg22[%209, %c0_214, %c0_215] : memref<16x1x128xf32, #tpu.memory_space<vmem>>, vector<1x1x128xf32>
      %211 = vector.shape_cast %210 : vector<1x1x128xf32> to vector<1x128xf32>
      %c3_216 = arith.constant 3 : index
      %c0_217 = arith.constant 0 : index
      %212 = vector.load %arg29[%c3_216, %c0_217] : memref<8x128xf32, #tpu.memory_space<vmem>>, vector<1x128xf32>
      tpu.vector_store %arg29[%c3_216, %c0_217], %211 {strides = array<i32>} : memref<8x128xf32, #tpu.memory_space<vmem>>, vector<1x128xf32>,
      %c4_i32_218 = arith.constant 4 : i32
      %213 = arith.addi %184, %c4_i32_218 : i32
      %214 = arith.index_cast %213 : i32 to index
      %215 = memref.load %arg1[%214] : memref<32xi32, #tpu.memory_space<smem>>
      %216 = arith.index_cast %215 : i32 to index
      %c0_219 = arith.constant 0 : index
      %c0_220 = arith.constant 0 : index
      %217 = vector.load %arg22[%216, %c0_219, %c0_220] : memref<16x1x128xf32, #tpu.memory_space<vmem>>, vector<1x1x128xf32>
      %218 = vector.shape_cast %217 : vector<1x1x128xf32> to vector<1x128xf32>
      %c4_221 = arith.constant 4 : index
      %c0_222 = arith.constant 0 : index
      %219 = vector.load %arg29[%c4_221, %c0_222] : memref<8x128xf32, #tpu.memory_space<vmem>>, vector<1x128xf32>
      tpu.vector_store %arg29[%c4_221, %c0_222], %218 {strides = array<i32>} : memref<8x128xf32, #tpu.memory_space<vmem>>, vector<1x128xf32>,
      %c5_i32_223 = arith.constant 5 : i32
      %220 = arith.addi %184, %c5_i32_223 : i32
      %221 = arith.index_cast %220 : i32 to index
      %222 = memref.load %arg1[%221] : memref<32xi32, #tpu.memory_space<smem>>
      %223 = arith.index_cast %222 : i32 to index
      %c0_224 = arith.constant 0 : index
      %c0_225 = arith.constant 0 : index
      %224 = vector.load %arg22[%223, %c0_224, %c0_225] : memref<16x1x128xf32, #tpu.memory_space<vmem>>, vector<1x1x128xf32>
      %225 = vector.shape_cast %224 : vector<1x1x128xf32> to vector<1x128xf32>
      %c5_226 = arith.constant 5 : index
      %c0_227 = arith.constant 0 : index
      %226 = vector.load %arg29[%c5_226, %c0_227] : memref<8x128xf32, #tpu.memory_space<vmem>>, vector<1x128xf32>
      tpu.vector_store %arg29[%c5_226, %c0_227], %225 {strides = array<i32>} : memref<8x128xf32, #tpu.memory_space<vmem>>, vector<1x128xf32>,
      %c6_i32_228 = arith.constant 6 : i32
      %227 = arith.addi %184, %c6_i32_228 : i32
      %228 = arith.index_cast %227 : i32 to index
      %229 = memref.load %arg1[%228] : memref<32xi32, #tpu.memory_space<smem>>
      %230 = arith.index_cast %229 : i32 to index
      %c0_229 = arith.constant 0 : index
      %c0_230 = arith.constant 0 : index
      %231 = vector.load %arg22[%230, %c0_229, %c0_230] : memref<16x1x128xf32, #tpu.memory_space<vmem>>, vector<1x1x128xf32>
      %232 = vector.shape_cast %231 : vector<1x1x128xf32> to vector<1x128xf32>
      %c6_231 = arith.constant 6 : index
      %c0_232 = arith.constant 0 : index
      %233 = vector.load %arg29[%c6_231, %c0_232] : memref<8x128xf32, #tpu.memory_space<vmem>>, vector<1x128xf32>
      tpu.vector_store %arg29[%c6_231, %c0_232], %232 {strides = array<i32>} : memref<8x128xf32, #tpu.memory_space<vmem>>, vector<1x128xf32>,
      %c7_i32_233 = arith.constant 7 : i32
      %234 = arith.addi %184, %c7_i32_233 : i32
      %235 = arith.index_cast %234 : i32 to index
      %236 = memref.load %arg1[%235] : memref<32xi32, #tpu.memory_space<smem>>
      %237 = arith.index_cast %236 : i32 to index
      %c0_234 = arith.constant 0 : index
      %c0_235 = arith.constant 0 : index
      %238 = vector.load %arg22[%237, %c0_234, %c0_235] : memref<16x1x128xf32, #tpu.memory_space<vmem>>, vector<1x1x128xf32>
      %239 = vector.shape_cast %238 : vector<1x1x128xf32> to vector<1x128xf32>
      %c7_236 = arith.constant 7 : index
      %c0_237 = arith.constant 0 : index
      %240 = vector.load %arg29[%c7_236, %c0_237] : memref<8x128xf32, #tpu.memory_space<vmem>>, vector<1x128xf32>
      tpu.vector_store %arg29[%c7_236, %c0_237], %239 {strides = array<i32>} : memref<8x128xf32, #tpu.memory_space<vmem>>, vector<1x128xf32>,
      %c0_238 = arith.constant 0 : index
      %c0_239 = arith.constant 0 : index
      %241 = vector.load %arg29[%c0_238, %c0_239] : memref<8x128xf32, #tpu.memory_space<vmem>>, vector<8x128xf32>
      %242 = arith.index_cast %184 : i32 to index
      %c0_240 = arith.constant 0 : index
      %243 = vector.load %arg25[%242, %c0_240] : memref<32x128xf32, #tpu.memory_space<vmem>>, vector<8x128xf32>
      tpu.vector_store %arg25[%242, %c0_240], %241 {strides = array<i32>} : memref<32x128xf32, #tpu.memory_space<vmem>>, vector<8x128xf32>,
    }
    %c4_i32_73 = arith.constant 4 : i32
    %c0_74 = arith.constant 0 : index
    %c0_75 = arith.constant 0 : index
    %63 = vector.load %arg25[%c0_74, %c0_75] : memref<32x128xf32, #tpu.memory_space<vmem>>, vector<32x128xf32>
    %c0_76 = arith.constant 0 : index
    %c0_77 = arith.constant 0 : index
    %64 = vector.load %arg24[%c0_76, %c0_77] : memref<32x128xf32, #tpu.memory_space<vmem>>, vector<32x128xf32>
    %65 = arith.subf %63, %64 : vector<32x128xf32>
    %c0_78 = arith.constant 0 : index
    %c0_79 = arith.constant 0 : index
    %66 = vector.load %arg23[%c0_78, %c0_79] : memref<32x128xf32, #tpu.memory_space<vmem>>, vector<32x128xf32>
    %67 = arith.index_cast %c1_i32_61 : i32 to index
    %c0_80 = arith.constant 0 : index
    %c0_81 = arith.constant 0 : index
    %68 = vector.load %arg11[%67, %c0_80, %c0_81] : memref<3x128x128xbf16, #tpu.memory_space<vmem>>, vector<1x128x128xbf16>
    %69 = vector.shape_cast %68 : vector<1x128x128xbf16> to vector<128x128xbf16>
    %70 = arith.truncf %65 : vector<32x128xf32> to vector<32x128xbf16>
    %cst_82 = arith.constant dense<0.000000e+00> : vector<32x128xf32>
    %71 = tpu.matmul %70, %69, %cst_82 {dimension_numbers = #tpu.dot_dimension_numbers<[1], [0], [0], [1], [0, 0, 1, 1], [], []>} : vector<32x128xbf16>, vector<128x128xbf16>, vector<32x128xf32> -> vector<32x128xf32>
    %72 = arith.addf %66, %71 : vector<32x128xf32>
    %73 = arith.index_cast %c1_i32_61 : i32 to index
    %c0_83 = arith.constant 0 : index
    %c0_84 = arith.constant 0 : index
    %74 = vector.load %arg12[%73, %c0_83, %c0_84] : memref<3x1x128xf32, #tpu.memory_space<vmem>>, vector<1x1x128xf32>
    %75 = vector.shape_cast %74 : vector<1x1x128xf32> to vector<1x128xf32>
    %76 = vector.broadcast %75 : vector<1x128xf32> to vector<32x128xf32>
    %77 = arith.addf %72, %76 : vector<32x128xf32>
    %cst_85 = arith.constant 0.000000e+00 : f32
    %78 = vector.broadcast %cst_85 : f32 to vector<32x128xf32>
    %79 = arith.maximumf %77, %78 : vector<32x128xf32>
    %c0_86 = arith.constant 0 : index
    %c0_87 = arith.constant 0 : index
    %80 = vector.load %arg24[%c0_86, %c0_87] : memref<32x128xf32, #tpu.memory_space<vmem>>, vector<32x128xf32>
    tpu.vector_store %arg24[%c0_86, %c0_87], %79 {strides = array<i32>} : memref<32x128xf32, #tpu.memory_space<vmem>>, vector<32x128xf32>,
    %c2_i32_88 = arith.constant 2 : i32
    %cst_89 = arith.constant 0.000000e+00 : f32
    %81 = vector.broadcast %cst_89 : f32 to vector<16x1x128xf32>
    %c0_90 = arith.constant 0 : index
    %c0_91 = arith.constant 0 : index
    %c0_92 = arith.constant 0 : index
    %82 = vector.load %arg22[%c0_90, %c0_91, %c0_92] : memref<16x1x128xf32, #tpu.memory_space<vmem>>, vector<16x1x128xf32>
    tpu.vector_store %arg22[%c0_90, %c0_91, %c0_92], %81 {strides = array<i32>} : memref<16x1x128xf32, #tpu.memory_space<vmem>>, vector<16x1x128xf32>,
    %c0_i32_93 = arith.constant 0 : i32
    %c4_i32_94 = arith.constant 4 : i32
    %83 = arith.addi %c0_i32_93, %c4_i32_94 : i32
    %c1_i32_95 = arith.constant 1 : i32
    scf.for %arg30 = %c0_i32_93 to %83 step %c1_i32_95  : i32 {
      %c8_i32_197 = arith.constant 8 : i32
      %183 = arith.muli %arg30, %c8_i32_197 : i32
      %184 = tpu.assume_multiple %183, 8 : i32
      %185 = arith.index_cast %184 : i32 to index
      %c0_198 = arith.constant 0 : index
      %186 = vector.load %arg24[%185, %c0_198] : memref<32x128xf32, #tpu.memory_space<vmem>>, vector<8x128xf32>
      %c0_i32_199 = arith.constant 0 : i32
      %187 = arith.addi %184, %c0_i32_199 : i32
      %188 = arith.index_cast %187 : i32 to index
      %189 = memref.load %arg1[%188] : memref<32xi32, #tpu.memory_space<smem>>
      %190 = arith.index_cast %189 : i32 to index
      %c0_200 = arith.constant 0 : index
      %c0_201 = arith.constant 0 : index
      %191 = vector.load %arg22[%190, %c0_200, %c0_201] : memref<16x1x128xf32, #tpu.memory_space<vmem>>, vector<1x1x128xf32>
      %192 = vector.shape_cast %191 : vector<1x1x128xf32> to vector<1x128xf32>
      %193 = vector.extract_strided_slice %186 {offsets = [0, 0], sizes = [1, 128], strides = [1, 1]} : vector<8x128xf32> to vector<1x128xf32>
      %194 = arith.addf %192, %193 : vector<1x128xf32>
      %195 = arith.index_cast %189 : i32 to index
      %c0_202 = arith.constant 0 : index
      %c0_203 = arith.constant 0 : index
      %196 = vector.load %arg22[%195, %c0_202, %c0_203] : memref<16x1x128xf32, #tpu.memory_space<vmem>>, vector<1x1x128xf32>
      %197 = vector.shape_cast %196 : vector<1x1x128xf32> to vector<1x128xf32>
      %198 = vector.shape_cast %194 : vector<1x128xf32> to vector<1x1x128xf32>
      tpu.vector_store %arg22[%195, %c0_202, %c0_203], %198 {strides = array<i32>} : memref<16x1x128xf32, #tpu.memory_space<vmem>>, vector<1x1x128xf32>,
      %c1_i32_204 = arith.constant 1 : i32
      %199 = arith.addi %184, %c1_i32_204 : i32
      %200 = arith.index_cast %199 : i32 to index
      %201 = memref.load %arg1[%200] : memref<32xi32, #tpu.memory_space<smem>>
      %202 = arith.index_cast %201 : i32 to index
      %c0_205 = arith.constant 0 : index
      %c0_206 = arith.constant 0 : index
      %203 = vector.load %arg22[%202, %c0_205, %c0_206] : memref<16x1x128xf32, #tpu.memory_space<vmem>>, vector<1x1x128xf32>
      %204 = vector.shape_cast %203 : vector<1x1x128xf32> to vector<1x128xf32>
      %205 = vector.extract_strided_slice %186 {offsets = [1, 0], sizes = [1, 128], strides = [1, 1]} : vector<8x128xf32> to vector<1x128xf32>
      %206 = arith.addf %204, %205 : vector<1x128xf32>
      %207 = arith.index_cast %201 : i32 to index
      %c0_207 = arith.constant 0 : index
      %c0_208 = arith.constant 0 : index
      %208 = vector.load %arg22[%207, %c0_207, %c0_208] : memref<16x1x128xf32, #tpu.memory_space<vmem>>, vector<1x1x128xf32>
      %209 = vector.shape_cast %208 : vector<1x1x128xf32> to vector<1x128xf32>
      %210 = vector.shape_cast %206 : vector<1x128xf32> to vector<1x1x128xf32>
      tpu.vector_store %arg22[%207, %c0_207, %c0_208], %210 {strides = array<i32>} : memref<16x1x128xf32, #tpu.memory_space<vmem>>, vector<1x1x128xf32>,
      %c2_i32_209 = arith.constant 2 : i32
      %211 = arith.addi %184, %c2_i32_209 : i32
      %212 = arith.index_cast %211 : i32 to index
      %213 = memref.load %arg1[%212] : memref<32xi32, #tpu.memory_space<smem>>
      %214 = arith.index_cast %213 : i32 to index
      %c0_210 = arith.constant 0 : index
      %c0_211 = arith.constant 0 : index
      %215 = vector.load %arg22[%214, %c0_210, %c0_211] : memref<16x1x128xf32, #tpu.memory_space<vmem>>, vector<1x1x128xf32>
      %216 = vector.shape_cast %215 : vector<1x1x128xf32> to vector<1x128xf32>
      %217 = vector.extract_strided_slice %186 {offsets = [2, 0], sizes = [1, 128], strides = [1, 1]} : vector<8x128xf32> to vector<1x128xf32>
      %218 = arith.addf %216, %217 : vector<1x128xf32>
      %219 = arith.index_cast %213 : i32 to index
      %c0_212 = arith.constant 0 : index
      %c0_213 = arith.constant 0 : index
      %220 = vector.load %arg22[%219, %c0_212, %c0_213] : memref<16x1x128xf32, #tpu.memory_space<vmem>>, vector<1x1x128xf32>
      %221 = vector.shape_cast %220 : vector<1x1x128xf32> to vector<1x128xf32>
      %222 = vector.shape_cast %218 : vector<1x128xf32> to vector<1x1x128xf32>
      tpu.vector_store %arg22[%219, %c0_212, %c0_213], %222 {strides = array<i32>} : memref<16x1x128xf32, #tpu.memory_space<vmem>>, vector<1x1x128xf32>,
      %c3_i32_214 = arith.constant 3 : i32
      %223 = arith.addi %184, %c3_i32_214 : i32
      %224 = arith.index_cast %223 : i32 to index
      %225 = memref.load %arg1[%224] : memref<32xi32, #tpu.memory_space<smem>>
      %226 = arith.index_cast %225 : i32 to index
      %c0_215 = arith.constant 0 : index
      %c0_216 = arith.constant 0 : index
      %227 = vector.load %arg22[%226, %c0_215, %c0_216] : memref<16x1x128xf32, #tpu.memory_space<vmem>>, vector<1x1x128xf32>
      %228 = vector.shape_cast %227 : vector<1x1x128xf32> to vector<1x128xf32>
      %229 = vector.extract_strided_slice %186 {offsets = [3, 0], sizes = [1, 128], strides = [1, 1]} : vector<8x128xf32> to vector<1x128xf32>
      %230 = arith.addf %228, %229 : vector<1x128xf32>
      %231 = arith.index_cast %225 : i32 to index
      %c0_217 = arith.constant 0 : index
      %c0_218 = arith.constant 0 : index
      %232 = vector.load %arg22[%231, %c0_217, %c0_218] : memref<16x1x128xf32, #tpu.memory_space<vmem>>, vector<1x1x128xf32>
      %233 = vector.shape_cast %232 : vector<1x1x128xf32> to vector<1x128xf32>
      %234 = vector.shape_cast %230 : vector<1x128xf32> to vector<1x1x128xf32>
      tpu.vector_store %arg22[%231, %c0_217, %c0_218], %234 {strides = array<i32>} : memref<16x1x128xf32, #tpu.memory_space<vmem>>, vector<1x1x128xf32>,
      %c4_i32_219 = arith.constant 4 : i32
      %235 = arith.addi %184, %c4_i32_219 : i32
      %236 = arith.index_cast %235 : i32 to index
      %237 = memref.load %arg1[%236] : memref<32xi32, #tpu.memory_space<smem>>
      %238 = arith.index_cast %237 : i32 to index
      %c0_220 = arith.constant 0 : index
      %c0_221 = arith.constant 0 : index
      %239 = vector.load %arg22[%238, %c0_220, %c0_221] : memref<16x1x128xf32, #tpu.memory_space<vmem>>, vector<1x1x128xf32>
      %240 = vector.shape_cast %239 : vector<1x1x128xf32> to vector<1x128xf32>
      %241 = vector.extract_strided_slice %186 {offsets = [4, 0], sizes = [1, 128], strides = [1, 1]} : vector<8x128xf32> to vector<1x128xf32>
      %242 = arith.addf %240, %241 : vector<1x128xf32>
      %243 = arith.index_cast %237 : i32 to index
      %c0_222 = arith.constant 0 : index
      %c0_223 = arith.constant 0 : index
      %244 = vector.load %arg22[%243, %c0_222, %c0_223] : memref<16x1x128xf32, #tpu.memory_space<vmem>>, vector<1x1x128xf32>
      %245 = vector.shape_cast %244 : vector<1x1x128xf32> to vector<1x128xf32>
      %246 = vector.shape_cast %242 : vector<1x128xf32> to vector<1x1x128xf32>
      tpu.vector_store %arg22[%243, %c0_222, %c0_223], %246 {strides = array<i32>} : memref<16x1x128xf32, #tpu.memory_space<vmem>>, vector<1x1x128xf32>,
      %c5_i32_224 = arith.constant 5 : i32
      %247 = arith.addi %184, %c5_i32_224 : i32
      %248 = arith.index_cast %247 : i32 to index
      %249 = memref.load %arg1[%248] : memref<32xi32, #tpu.memory_space<smem>>
      %250 = arith.index_cast %249 : i32 to index
      %c0_225 = arith.constant 0 : index
      %c0_226 = arith.constant 0 : index
      %251 = vector.load %arg22[%250, %c0_225, %c0_226] : memref<16x1x128xf32, #tpu.memory_space<vmem>>, vector<1x1x128xf32>
      %252 = vector.shape_cast %251 : vector<1x1x128xf32> to vector<1x128xf32>
      %253 = vector.extract_strided_slice %186 {offsets = [5, 0], sizes = [1, 128], strides = [1, 1]} : vector<8x128xf32> to vector<1x128xf32>
      %254 = arith.addf %252, %253 : vector<1x128xf32>
      %255 = arith.index_cast %249 : i32 to index
      %c0_227 = arith.constant 0 : index
      %c0_228 = arith.constant 0 : index
      %256 = vector.load %arg22[%255, %c0_227, %c0_228] : memref<16x1x128xf32, #tpu.memory_space<vmem>>, vector<1x1x128xf32>
      %257 = vector.shape_cast %256 : vector<1x1x128xf32> to vector<1x128xf32>
      %258 = vector.shape_cast %254 : vector<1x128xf32> to vector<1x1x128xf32>
      tpu.vector_store %arg22[%255, %c0_227, %c0_228], %258 {strides = array<i32>} : memref<16x1x128xf32, #tpu.memory_space<vmem>>, vector<1x1x128xf32>,
      %c6_i32_229 = arith.constant 6 : i32
      %259 = arith.addi %184, %c6_i32_229 : i32
      %260 = arith.index_cast %259 : i32 to index
      %261 = memref.load %arg1[%260] : memref<32xi32, #tpu.memory_space<smem>>
      %262 = arith.index_cast %261 : i32 to index
      %c0_230 = arith.constant 0 : index
      %c0_231 = arith.constant 0 : index
      %263 = vector.load %arg22[%262, %c0_230, %c0_231] : memref<16x1x128xf32, #tpu.memory_space<vmem>>, vector<1x1x128xf32>
      %264 = vector.shape_cast %263 : vector<1x1x128xf32> to vector<1x128xf32>
      %265 = vector.extract_strided_slice %186 {offsets = [6, 0], sizes = [1, 128], strides = [1, 1]} : vector<8x128xf32> to vector<1x128xf32>
      %266 = arith.addf %264, %265 : vector<1x128xf32>
      %267 = arith.index_cast %261 : i32 to index
      %c0_232 = arith.constant 0 : index
      %c0_233 = arith.constant 0 : index
      %268 = vector.load %arg22[%267, %c0_232, %c0_233] : memref<16x1x128xf32, #tpu.memory_space<vmem>>, vector<1x1x128xf32>
      %269 = vector.shape_cast %268 : vector<1x1x128xf32> to vector<1x128xf32>
      %270 = vector.shape_cast %266 : vector<1x128xf32> to vector<1x1x128xf32>
      tpu.vector_store %arg22[%267, %c0_232, %c0_233], %270 {strides = array<i32>} : memref<16x1x128xf32, #tpu.memory_space<vmem>>, vector<1x1x128xf32>,
      %c7_i32_234 = arith.constant 7 : i32
      %271 = arith.addi %184, %c7_i32_234 : i32
      %272 = arith.index_cast %271 : i32 to index
      %273 = memref.load %arg1[%272] : memref<32xi32, #tpu.memory_space<smem>>
      %274 = arith.index_cast %273 : i32 to index
      %c0_235 = arith.constant 0 : index
      %c0_236 = arith.constant 0 : index
      %275 = vector.load %arg22[%274, %c0_235, %c0_236] : memref<16x1x128xf32, #tpu.memory_space<vmem>>, vector<1x1x128xf32>
      %276 = vector.shape_cast %275 : vector<1x1x128xf32> to vector<1x128xf32>
      %277 = vector.extract_strided_slice %186 {offsets = [7, 0], sizes = [1, 128], strides = [1, 1]} : vector<8x128xf32> to vector<1x128xf32>
      %278 = arith.addf %276, %277 : vector<1x128xf32>
      %279 = arith.index_cast %273 : i32 to index
      %c0_237 = arith.constant 0 : index
      %c0_238 = arith.constant 0 : index
      %280 = vector.load %arg22[%279, %c0_237, %c0_238] : memref<16x1x128xf32, #tpu.memory_space<vmem>>, vector<1x1x128xf32>
      %281 = vector.shape_cast %280 : vector<1x1x128xf32> to vector<1x128xf32>
      %282 = vector.shape_cast %278 : vector<1x128xf32> to vector<1x1x128xf32>
      tpu.vector_store %arg22[%279, %c0_237, %c0_238], %282 {strides = array<i32>} : memref<16x1x128xf32, #tpu.memory_space<vmem>>, vector<1x1x128xf32>,
    }
    %c4_i32_96 = arith.constant 4 : i32
    %c0_i32_97 = arith.constant 0 : i32
    %c4_i32_98 = arith.constant 4 : i32
    %84 = arith.addi %c0_i32_97, %c4_i32_98 : i32
    %c1_i32_99 = arith.constant 1 : i32
    scf.for %arg30 = %c0_i32_97 to %84 step %c1_i32_99  : i32 {
      %c8_i32_197 = arith.constant 8 : i32
      %183 = arith.muli %arg30, %c8_i32_197 : i32
      %184 = tpu.assume_multiple %183, 8 : i32
      %c0_i32_198 = arith.constant 0 : i32
      %185 = arith.addi %184, %c0_i32_198 : i32
      %186 = arith.index_cast %185 : i32 to index
      %187 = memref.load %arg1[%186] : memref<32xi32, #tpu.memory_space<smem>>
      %188 = arith.index_cast %187 : i32 to index
      %c0_199 = arith.constant 0 : index
      %c0_200 = arith.constant 0 : index
      %189 = vector.load %arg22[%188, %c0_199, %c0_200] : memref<16x1x128xf32, #tpu.memory_space<vmem>>, vector<1x1x128xf32>
      %190 = vector.shape_cast %189 : vector<1x1x128xf32> to vector<1x128xf32>
      %c0_201 = arith.constant 0 : index
      %c0_202 = arith.constant 0 : index
      %191 = vector.load %arg29[%c0_201, %c0_202] : memref<8x128xf32, #tpu.memory_space<vmem>>, vector<1x128xf32>
      tpu.vector_store %arg29[%c0_201, %c0_202], %190 {strides = array<i32>} : memref<8x128xf32, #tpu.memory_space<vmem>>, vector<1x128xf32>,
      %c1_i32_203 = arith.constant 1 : i32
      %192 = arith.addi %184, %c1_i32_203 : i32
      %193 = arith.index_cast %192 : i32 to index
      %194 = memref.load %arg1[%193] : memref<32xi32, #tpu.memory_space<smem>>
      %195 = arith.index_cast %194 : i32 to index
      %c0_204 = arith.constant 0 : index
      %c0_205 = arith.constant 0 : index
      %196 = vector.load %arg22[%195, %c0_204, %c0_205] : memref<16x1x128xf32, #tpu.memory_space<vmem>>, vector<1x1x128xf32>
      %197 = vector.shape_cast %196 : vector<1x1x128xf32> to vector<1x128xf32>
      %c1_206 = arith.constant 1 : index
      %c0_207 = arith.constant 0 : index
      %198 = vector.load %arg29[%c1_206, %c0_207] : memref<8x128xf32, #tpu.memory_space<vmem>>, vector<1x128xf32>
      tpu.vector_store %arg29[%c1_206, %c0_207], %197 {strides = array<i32>} : memref<8x128xf32, #tpu.memory_space<vmem>>, vector<1x128xf32>,
      %c2_i32_208 = arith.constant 2 : i32
      %199 = arith.addi %184, %c2_i32_208 : i32
      %200 = arith.index_cast %199 : i32 to index
      %201 = memref.load %arg1[%200] : memref<32xi32, #tpu.memory_space<smem>>
      %202 = arith.index_cast %201 : i32 to index
      %c0_209 = arith.constant 0 : index
      %c0_210 = arith.constant 0 : index
      %203 = vector.load %arg22[%202, %c0_209, %c0_210] : memref<16x1x128xf32, #tpu.memory_space<vmem>>, vector<1x1x128xf32>
      %204 = vector.shape_cast %203 : vector<1x1x128xf32> to vector<1x128xf32>
      %c2_211 = arith.constant 2 : index
      %c0_212 = arith.constant 0 : index
      %205 = vector.load %arg29[%c2_211, %c0_212] : memref<8x128xf32, #tpu.memory_space<vmem>>, vector<1x128xf32>
      tpu.vector_store %arg29[%c2_211, %c0_212], %204 {strides = array<i32>} : memref<8x128xf32, #tpu.memory_space<vmem>>, vector<1x128xf32>,
      %c3_i32_213 = arith.constant 3 : i32
      %206 = arith.addi %184, %c3_i32_213 : i32
      %207 = arith.index_cast %206 : i32 to index
      %208 = memref.load %arg1[%207] : memref<32xi32, #tpu.memory_space<smem>>
      %209 = arith.index_cast %208 : i32 to index
      %c0_214 = arith.constant 0 : index
      %c0_215 = arith.constant 0 : index
      %210 = vector.load %arg22[%209, %c0_214, %c0_215] : memref<16x1x128xf32, #tpu.memory_space<vmem>>, vector<1x1x128xf32>
      %211 = vector.shape_cast %210 : vector<1x1x128xf32> to vector<1x128xf32>
      %c3_216 = arith.constant 3 : index
      %c0_217 = arith.constant 0 : index
      %212 = vector.load %arg29[%c3_216, %c0_217] : memref<8x128xf32, #tpu.memory_space<vmem>>, vector<1x128xf32>
      tpu.vector_store %arg29[%c3_216, %c0_217], %211 {strides = array<i32>} : memref<8x128xf32, #tpu.memory_space<vmem>>, vector<1x128xf32>,
      %c4_i32_218 = arith.constant 4 : i32
      %213 = arith.addi %184, %c4_i32_218 : i32
      %214 = arith.index_cast %213 : i32 to index
      %215 = memref.load %arg1[%214] : memref<32xi32, #tpu.memory_space<smem>>
      %216 = arith.index_cast %215 : i32 to index
      %c0_219 = arith.constant 0 : index
      %c0_220 = arith.constant 0 : index
      %217 = vector.load %arg22[%216, %c0_219, %c0_220] : memref<16x1x128xf32, #tpu.memory_space<vmem>>, vector<1x1x128xf32>
      %218 = vector.shape_cast %217 : vector<1x1x128xf32> to vector<1x128xf32>
      %c4_221 = arith.constant 4 : index
      %c0_222 = arith.constant 0 : index
      %219 = vector.load %arg29[%c4_221, %c0_222] : memref<8x128xf32, #tpu.memory_space<vmem>>, vector<1x128xf32>
      tpu.vector_store %arg29[%c4_221, %c0_222], %218 {strides = array<i32>} : memref<8x128xf32, #tpu.memory_space<vmem>>, vector<1x128xf32>,
      %c5_i32_223 = arith.constant 5 : i32
      %220 = arith.addi %184, %c5_i32_223 : i32
      %221 = arith.index_cast %220 : i32 to index
      %222 = memref.load %arg1[%221] : memref<32xi32, #tpu.memory_space<smem>>
      %223 = arith.index_cast %222 : i32 to index
      %c0_224 = arith.constant 0 : index
      %c0_225 = arith.constant 0 : index
      %224 = vector.load %arg22[%223, %c0_224, %c0_225] : memref<16x1x128xf32, #tpu.memory_space<vmem>>, vector<1x1x128xf32>
      %225 = vector.shape_cast %224 : vector<1x1x128xf32> to vector<1x128xf32>
      %c5_226 = arith.constant 5 : index
      %c0_227 = arith.constant 0 : index
      %226 = vector.load %arg29[%c5_226, %c0_227] : memref<8x128xf32, #tpu.memory_space<vmem>>, vector<1x128xf32>
      tpu.vector_store %arg29[%c5_226, %c0_227], %225 {strides = array<i32>} : memref<8x128xf32, #tpu.memory_space<vmem>>, vector<1x128xf32>,
      %c6_i32_228 = arith.constant 6 : i32
      %227 = arith.addi %184, %c6_i32_228 : i32
      %228 = arith.index_cast %227 : i32 to index
      %229 = memref.load %arg1[%228] : memref<32xi32, #tpu.memory_space<smem>>
      %230 = arith.index_cast %229 : i32 to index
      %c0_229 = arith.constant 0 : index
      %c0_230 = arith.constant 0 : index
      %231 = vector.load %arg22[%230, %c0_229, %c0_230] : memref<16x1x128xf32, #tpu.memory_space<vmem>>, vector<1x1x128xf32>
      %232 = vector.shape_cast %231 : vector<1x1x128xf32> to vector<1x128xf32>
      %c6_231 = arith.constant 6 : index
      %c0_232 = arith.constant 0 : index
      %233 = vector.load %arg29[%c6_231, %c0_232] : memref<8x128xf32, #tpu.memory_space<vmem>>, vector<1x128xf32>
      tpu.vector_store %arg29[%c6_231, %c0_232], %232 {strides = array<i32>} : memref<8x128xf32, #tpu.memory_space<vmem>>, vector<1x128xf32>,
      %c7_i32_233 = arith.constant 7 : i32
      %234 = arith.addi %184, %c7_i32_233 : i32
      %235 = arith.index_cast %234 : i32 to index
      %236 = memref.load %arg1[%235] : memref<32xi32, #tpu.memory_space<smem>>
      %237 = arith.index_cast %236 : i32 to index
      %c0_234 = arith.constant 0 : index
      %c0_235 = arith.constant 0 : index
      %238 = vector.load %arg22[%237, %c0_234, %c0_235] : memref<16x1x128xf32, #tpu.memory_space<vmem>>, vector<1x1x128xf32>
      %239 = vector.shape_cast %238 : vector<1x1x128xf32> to vector<1x128xf32>
      %c7_236 = arith.constant 7 : index
      %c0_237 = arith.constant 0 : index
      %240 = vector.load %arg29[%c7_236, %c0_237] : memref<8x128xf32, #tpu.memory_space<vmem>>, vector<1x128xf32>
      tpu.vector_store %arg29[%c7_236, %c0_237], %239 {strides = array<i32>} : memref<8x128xf32, #tpu.memory_space<vmem>>, vector<1x128xf32>,
      %c0_238 = arith.constant 0 : index
      %c0_239 = arith.constant 0 : index
      %241 = vector.load %arg29[%c0_238, %c0_239] : memref<8x128xf32, #tpu.memory_space<vmem>>, vector<8x128xf32>
      %242 = arith.index_cast %184 : i32 to index
      %c0_240 = arith.constant 0 : index
      %243 = vector.load %arg25[%242, %c0_240] : memref<32x128xf32, #tpu.memory_space<vmem>>, vector<8x128xf32>
      tpu.vector_store %arg25[%242, %c0_240], %241 {strides = array<i32>} : memref<32x128xf32, #tpu.memory_space<vmem>>, vector<8x128xf32>,
    }
    %c4_i32_100 = arith.constant 4 : i32
    %c0_101 = arith.constant 0 : index
    %c0_102 = arith.constant 0 : index
    %85 = vector.load %arg25[%c0_101, %c0_102] : memref<32x128xf32, #tpu.memory_space<vmem>>, vector<32x128xf32>
    %c0_103 = arith.constant 0 : index
    %c0_104 = arith.constant 0 : index
    %86 = vector.load %arg24[%c0_103, %c0_104] : memref<32x128xf32, #tpu.memory_space<vmem>>, vector<32x128xf32>
    %87 = arith.subf %85, %86 : vector<32x128xf32>
    %c0_105 = arith.constant 0 : index
    %c0_106 = arith.constant 0 : index
    %88 = vector.load %arg23[%c0_105, %c0_106] : memref<32x128xf32, #tpu.memory_space<vmem>>, vector<32x128xf32>
    %89 = arith.index_cast %c2_i32_88 : i32 to index
    %c0_107 = arith.constant 0 : index
    %c0_108 = arith.constant 0 : index
    %90 = vector.load %arg11[%89, %c0_107, %c0_108] : memref<3x128x128xbf16, #tpu.memory_space<vmem>>, vector<1x128x128xbf16>
    %91 = vector.shape_cast %90 : vector<1x128x128xbf16> to vector<128x128xbf16>
    %92 = arith.truncf %87 : vector<32x128xf32> to vector<32x128xbf16>
    %cst_109 = arith.constant dense<0.000000e+00> : vector<32x128xf32>
    %93 = tpu.matmul %92, %91, %cst_109 {dimension_numbers = #tpu.dot_dimension_numbers<[1], [0], [0], [1], [0, 0, 1, 1], [], []>} : vector<32x128xbf16>, vector<128x128xbf16>, vector<32x128xf32> -> vector<32x128xf32>
    %94 = arith.addf %88, %93 : vector<32x128xf32>
    %95 = arith.index_cast %c2_i32_88 : i32 to index
    %c0_110 = arith.constant 0 : index
    %c0_111 = arith.constant 0 : index
    %96 = vector.load %arg12[%95, %c0_110, %c0_111] : memref<3x1x128xf32, #tpu.memory_space<vmem>>, vector<1x1x128xf32>
    %97 = vector.shape_cast %96 : vector<1x1x128xf32> to vector<1x128xf32>
    %98 = vector.broadcast %97 : vector<1x128xf32> to vector<32x128xf32>
    %99 = arith.addf %94, %98 : vector<32x128xf32>
    %cst_112 = arith.constant 0.000000e+00 : f32
    %100 = vector.broadcast %cst_112 : f32 to vector<32x128xf32>
    %101 = arith.maximumf %99, %100 : vector<32x128xf32>
    %c0_113 = arith.constant 0 : index
    %c0_114 = arith.constant 0 : index
    %102 = vector.load %arg24[%c0_113, %c0_114] : memref<32x128xf32, #tpu.memory_space<vmem>>, vector<32x128xf32>
    tpu.vector_store %arg24[%c0_113, %c0_114], %101 {strides = array<i32>} : memref<32x128xf32, #tpu.memory_space<vmem>>, vector<32x128xf32>,
    %c3_i32 = arith.constant 3 : i32
    %cst_115 = arith.constant 0.000000e+00 : f32
    %103 = vector.broadcast %cst_115 : f32 to vector<16x1x128xf32>
    %c0_116 = arith.constant 0 : index
    %c0_117 = arith.constant 0 : index
    %c0_118 = arith.constant 0 : index
    %104 = vector.load %arg22[%c0_116, %c0_117, %c0_118] : memref<16x1x128xf32, #tpu.memory_space<vmem>>, vector<16x1x128xf32>
    tpu.vector_store %arg22[%c0_116, %c0_117, %c0_118], %103 {strides = array<i32>} : memref<16x1x128xf32, #tpu.memory_space<vmem>>, vector<16x1x128xf32>,
    %c0_i32_119 = arith.constant 0 : i32
    %c4_i32_120 = arith.constant 4 : i32
    %105 = arith.addi %c0_i32_119, %c4_i32_120 : i32
    %c1_i32_121 = arith.constant 1 : i32
    scf.for %arg30 = %c0_i32_119 to %105 step %c1_i32_121  : i32 {
      %c8_i32_197 = arith.constant 8 : i32
      %183 = arith.muli %arg30, %c8_i32_197 : i32
      %184 = tpu.assume_multiple %183, 8 : i32
      %185 = arith.index_cast %184 : i32 to index
      %c0_198 = arith.constant 0 : index
      %186 = vector.load %arg24[%185, %c0_198] : memref<32x128xf32, #tpu.memory_space<vmem>>, vector<8x128xf32>
      %c0_i32_199 = arith.constant 0 : i32
      %187 = arith.addi %184, %c0_i32_199 : i32
      %188 = arith.index_cast %187 : i32 to index
      %189 = memref.load %arg1[%188] : memref<32xi32, #tpu.memory_space<smem>>
      %190 = arith.index_cast %189 : i32 to index
      %c0_200 = arith.constant 0 : index
      %c0_201 = arith.constant 0 : index
      %191 = vector.load %arg22[%190, %c0_200, %c0_201] : memref<16x1x128xf32, #tpu.memory_space<vmem>>, vector<1x1x128xf32>
      %192 = vector.shape_cast %191 : vector<1x1x128xf32> to vector<1x128xf32>
      %193 = vector.extract_strided_slice %186 {offsets = [0, 0], sizes = [1, 128], strides = [1, 1]} : vector<8x128xf32> to vector<1x128xf32>
      %194 = arith.addf %192, %193 : vector<1x128xf32>
      %195 = arith.index_cast %189 : i32 to index
      %c0_202 = arith.constant 0 : index
      %c0_203 = arith.constant 0 : index
      %196 = vector.load %arg22[%195, %c0_202, %c0_203] : memref<16x1x128xf32, #tpu.memory_space<vmem>>, vector<1x1x128xf32>
      %197 = vector.shape_cast %196 : vector<1x1x128xf32> to vector<1x128xf32>
      %198 = vector.shape_cast %194 : vector<1x128xf32> to vector<1x1x128xf32>
      tpu.vector_store %arg22[%195, %c0_202, %c0_203], %198 {strides = array<i32>} : memref<16x1x128xf32, #tpu.memory_space<vmem>>, vector<1x1x128xf32>,
      %c1_i32_204 = arith.constant 1 : i32
      %199 = arith.addi %184, %c1_i32_204 : i32
      %200 = arith.index_cast %199 : i32 to index
      %201 = memref.load %arg1[%200] : memref<32xi32, #tpu.memory_space<smem>>
      %202 = arith.index_cast %201 : i32 to index
      %c0_205 = arith.constant 0 : index
      %c0_206 = arith.constant 0 : index
      %203 = vector.load %arg22[%202, %c0_205, %c0_206] : memref<16x1x128xf32, #tpu.memory_space<vmem>>, vector<1x1x128xf32>
      %204 = vector.shape_cast %203 : vector<1x1x128xf32> to vector<1x128xf32>
      %205 = vector.extract_strided_slice %186 {offsets = [1, 0], sizes = [1, 128], strides = [1, 1]} : vector<8x128xf32> to vector<1x128xf32>
      %206 = arith.addf %204, %205 : vector<1x128xf32>
      %207 = arith.index_cast %201 : i32 to index
      %c0_207 = arith.constant 0 : index
      %c0_208 = arith.constant 0 : index
      %208 = vector.load %arg22[%207, %c0_207, %c0_208] : memref<16x1x128xf32, #tpu.memory_space<vmem>>, vector<1x1x128xf32>
      %209 = vector.shape_cast %208 : vector<1x1x128xf32> to vector<1x128xf32>
      %210 = vector.shape_cast %206 : vector<1x128xf32> to vector<1x1x128xf32>
      tpu.vector_store %arg22[%207, %c0_207, %c0_208], %210 {strides = array<i32>} : memref<16x1x128xf32, #tpu.memory_space<vmem>>, vector<1x1x128xf32>,
      %c2_i32_209 = arith.constant 2 : i32
      %211 = arith.addi %184, %c2_i32_209 : i32
      %212 = arith.index_cast %211 : i32 to index
      %213 = memref.load %arg1[%212] : memref<32xi32, #tpu.memory_space<smem>>
      %214 = arith.index_cast %213 : i32 to index
      %c0_210 = arith.constant 0 : index
      %c0_211 = arith.constant 0 : index
      %215 = vector.load %arg22[%214, %c0_210, %c0_211] : memref<16x1x128xf32, #tpu.memory_space<vmem>>, vector<1x1x128xf32>
      %216 = vector.shape_cast %215 : vector<1x1x128xf32> to vector<1x128xf32>
      %217 = vector.extract_strided_slice %186 {offsets = [2, 0], sizes = [1, 128], strides = [1, 1]} : vector<8x128xf32> to vector<1x128xf32>
      %218 = arith.addf %216, %217 : vector<1x128xf32>
      %219 = arith.index_cast %213 : i32 to index
      %c0_212 = arith.constant 0 : index
      %c0_213 = arith.constant 0 : index
      %220 = vector.load %arg22[%219, %c0_212, %c0_213] : memref<16x1x128xf32, #tpu.memory_space<vmem>>, vector<1x1x128xf32>
      %221 = vector.shape_cast %220 : vector<1x1x128xf32> to vector<1x128xf32>
      %222 = vector.shape_cast %218 : vector<1x128xf32> to vector<1x1x128xf32>
      tpu.vector_store %arg22[%219, %c0_212, %c0_213], %222 {strides = array<i32>} : memref<16x1x128xf32, #tpu.memory_space<vmem>>, vector<1x1x128xf32>,
      %c3_i32_214 = arith.constant 3 : i32
      %223 = arith.addi %184, %c3_i32_214 : i32
      %224 = arith.index_cast %223 : i32 to index
      %225 = memref.load %arg1[%224] : memref<32xi32, #tpu.memory_space<smem>>
      %226 = arith.index_cast %225 : i32 to index
      %c0_215 = arith.constant 0 : index
      %c0_216 = arith.constant 0 : index
      %227 = vector.load %arg22[%226, %c0_215, %c0_216] : memref<16x1x128xf32, #tpu.memory_space<vmem>>, vector<1x1x128xf32>
      %228 = vector.shape_cast %227 : vector<1x1x128xf32> to vector<1x128xf32>
      %229 = vector.extract_strided_slice %186 {offsets = [3, 0], sizes = [1, 128], strides = [1, 1]} : vector<8x128xf32> to vector<1x128xf32>
      %230 = arith.addf %228, %229 : vector<1x128xf32>
      %231 = arith.index_cast %225 : i32 to index
      %c0_217 = arith.constant 0 : index
      %c0_218 = arith.constant 0 : index
      %232 = vector.load %arg22[%231, %c0_217, %c0_218] : memref<16x1x128xf32, #tpu.memory_space<vmem>>, vector<1x1x128xf32>
      %233 = vector.shape_cast %232 : vector<1x1x128xf32> to vector<1x128xf32>
      %234 = vector.shape_cast %230 : vector<1x128xf32> to vector<1x1x128xf32>
      tpu.vector_store %arg22[%231, %c0_217, %c0_218], %234 {strides = array<i32>} : memref<16x1x128xf32, #tpu.memory_space<vmem>>, vector<1x1x128xf32>,
      %c4_i32_219 = arith.constant 4 : i32
      %235 = arith.addi %184, %c4_i32_219 : i32
      %236 = arith.index_cast %235 : i32 to index
      %237 = memref.load %arg1[%236] : memref<32xi32, #tpu.memory_space<smem>>
      %238 = arith.index_cast %237 : i32 to index
      %c0_220 = arith.constant 0 : index
      %c0_221 = arith.constant 0 : index
      %239 = vector.load %arg22[%238, %c0_220, %c0_221] : memref<16x1x128xf32, #tpu.memory_space<vmem>>, vector<1x1x128xf32>
      %240 = vector.shape_cast %239 : vector<1x1x128xf32> to vector<1x128xf32>
      %241 = vector.extract_strided_slice %186 {offsets = [4, 0], sizes = [1, 128], strides = [1, 1]} : vector<8x128xf32> to vector<1x128xf32>
      %242 = arith.addf %240, %241 : vector<1x128xf32>
      %243 = arith.index_cast %237 : i32 to index
      %c0_222 = arith.constant 0 : index
      %c0_223 = arith.constant 0 : index
      %244 = vector.load %arg22[%243, %c0_222, %c0_223] : memref<16x1x128xf32, #tpu.memory_space<vmem>>, vector<1x1x128xf32>
      %245 = vector.shape_cast %244 : vector<1x1x128xf32> to vector<1x128xf32>
      %246 = vector.shape_cast %242 : vector<1x128xf32> to vector<1x1x128xf32>
      tpu.vector_store %arg22[%243, %c0_222, %c0_223], %246 {strides = array<i32>} : memref<16x1x128xf32, #tpu.memory_space<vmem>>, vector<1x1x128xf32>,
      %c5_i32_224 = arith.constant 5 : i32
      %247 = arith.addi %184, %c5_i32_224 : i32
      %248 = arith.index_cast %247 : i32 to index
      %249 = memref.load %arg1[%248] : memref<32xi32, #tpu.memory_space<smem>>
      %250 = arith.index_cast %249 : i32 to index
      %c0_225 = arith.constant 0 : index
      %c0_226 = arith.constant 0 : index
      %251 = vector.load %arg22[%250, %c0_225, %c0_226] : memref<16x1x128xf32, #tpu.memory_space<vmem>>, vector<1x1x128xf32>
      %252 = vector.shape_cast %251 : vector<1x1x128xf32> to vector<1x128xf32>
      %253 = vector.extract_strided_slice %186 {offsets = [5, 0], sizes = [1, 128], strides = [1, 1]} : vector<8x128xf32> to vector<1x128xf32>
      %254 = arith.addf %252, %253 : vector<1x128xf32>
      %255 = arith.index_cast %249 : i32 to index
      %c0_227 = arith.constant 0 : index
      %c0_228 = arith.constant 0 : index
      %256 = vector.load %arg22[%255, %c0_227, %c0_228] : memref<16x1x128xf32, #tpu.memory_space<vmem>>, vector<1x1x128xf32>
      %257 = vector.shape_cast %256 : vector<1x1x128xf32> to vector<1x128xf32>
      %258 = vector.shape_cast %254 : vector<1x128xf32> to vector<1x1x128xf32>
      tpu.vector_store %arg22[%255, %c0_227, %c0_228], %258 {strides = array<i32>} : memref<16x1x128xf32, #tpu.memory_space<vmem>>, vector<1x1x128xf32>,
      %c6_i32_229 = arith.constant 6 : i32
      %259 = arith.addi %184, %c6_i32_229 : i32
      %260 = arith.index_cast %259 : i32 to index
      %261 = memref.load %arg1[%260] : memref<32xi32, #tpu.memory_space<smem>>
      %262 = arith.index_cast %261 : i32 to index
      %c0_230 = arith.constant 0 : index
      %c0_231 = arith.constant 0 : index
      %263 = vector.load %arg22[%262, %c0_230, %c0_231] : memref<16x1x128xf32, #tpu.memory_space<vmem>>, vector<1x1x128xf32>
      %264 = vector.shape_cast %263 : vector<1x1x128xf32> to vector<1x128xf32>
      %265 = vector.extract_strided_slice %186 {offsets = [6, 0], sizes = [1, 128], strides = [1, 1]} : vector<8x128xf32> to vector<1x128xf32>
      %266 = arith.addf %264, %265 : vector<1x128xf32>
      %267 = arith.index_cast %261 : i32 to index
      %c0_232 = arith.constant 0 : index
      %c0_233 = arith.constant 0 : index
      %268 = vector.load %arg22[%267, %c0_232, %c0_233] : memref<16x1x128xf32, #tpu.memory_space<vmem>>, vector<1x1x128xf32>
      %269 = vector.shape_cast %268 : vector<1x1x128xf32> to vector<1x128xf32>
      %270 = vector.shape_cast %266 : vector<1x128xf32> to vector<1x1x128xf32>
      tpu.vector_store %arg22[%267, %c0_232, %c0_233], %270 {strides = array<i32>} : memref<16x1x128xf32, #tpu.memory_space<vmem>>, vector<1x1x128xf32>,
      %c7_i32_234 = arith.constant 7 : i32
      %271 = arith.addi %184, %c7_i32_234 : i32
      %272 = arith.index_cast %271 : i32 to index
      %273 = memref.load %arg1[%272] : memref<32xi32, #tpu.memory_space<smem>>
      %274 = arith.index_cast %273 : i32 to index
      %c0_235 = arith.constant 0 : index
      %c0_236 = arith.constant 0 : index
      %275 = vector.load %arg22[%274, %c0_235, %c0_236] : memref<16x1x128xf32, #tpu.memory_space<vmem>>, vector<1x1x128xf32>
      %276 = vector.shape_cast %275 : vector<1x1x128xf32> to vector<1x128xf32>
      %277 = vector.extract_strided_slice %186 {offsets = [7, 0], sizes = [1, 128], strides = [1, 1]} : vector<8x128xf32> to vector<1x128xf32>
      %278 = arith.addf %276, %277 : vector<1x128xf32>
      %279 = arith.index_cast %273 : i32 to index
      %c0_237 = arith.constant 0 : index
      %c0_238 = arith.constant 0 : index
      %280 = vector.load %arg22[%279, %c0_237, %c0_238] : memref<16x1x128xf32, #tpu.memory_space<vmem>>, vector<1x1x128xf32>
      %281 = vector.shape_cast %280 : vector<1x1x128xf32> to vector<1x128xf32>
      %282 = vector.shape_cast %278 : vector<1x128xf32> to vector<1x1x128xf32>
      tpu.vector_store %arg22[%279, %c0_237, %c0_238], %282 {strides = array<i32>} : memref<16x1x128xf32, #tpu.memory_space<vmem>>, vector<1x1x128xf32>,
    }
    %c4_i32_122 = arith.constant 4 : i32
    %c0_i32_123 = arith.constant 0 : i32
    %c2_i32_124 = arith.constant 2 : i32
    %106 = arith.addi %c0_i32_123, %c2_i32_124 : i32
    %c1_i32_125 = arith.constant 1 : i32
    scf.for %arg30 = %c0_i32_123 to %106 step %c1_i32_125  : i32 {
      %c8_i32_197 = arith.constant 8 : i32
      %183 = arith.muli %arg30, %c8_i32_197 : i32
      %184 = tpu.assume_multiple %183, 8 : i32
      %c0_i32_198 = arith.constant 0 : i32
      %185 = arith.addi %184, %c0_i32_198 : i32
      %186 = arith.index_cast %185 : i32 to index
      %c0_199 = arith.constant 0 : index
      %c0_200 = arith.constant 0 : index
      %187 = vector.load %arg22[%186, %c0_199, %c0_200] : memref<16x1x128xf32, #tpu.memory_space<vmem>>, vector<1x1x128xf32>
      %188 = vector.shape_cast %187 : vector<1x1x128xf32> to vector<1x128xf32>
      %c0_201 = arith.constant 0 : index
      %c0_202 = arith.constant 0 : index
      %189 = vector.load %arg29[%c0_201, %c0_202] : memref<8x128xf32, #tpu.memory_space<vmem>>, vector<1x128xf32>
      tpu.vector_store %arg29[%c0_201, %c0_202], %188 {strides = array<i32>} : memref<8x128xf32, #tpu.memory_space<vmem>>, vector<1x128xf32>,
      %c1_i32_203 = arith.constant 1 : i32
      %190 = arith.addi %184, %c1_i32_203 : i32
      %191 = arith.index_cast %190 : i32 to index
      %c0_204 = arith.constant 0 : index
      %c0_205 = arith.constant 0 : index
      %192 = vector.load %arg22[%191, %c0_204, %c0_205] : memref<16x1x128xf32, #tpu.memory_space<vmem>>, vector<1x1x128xf32>
      %193 = vector.shape_cast %192 : vector<1x1x128xf32> to vector<1x128xf32>
      %c1_206 = arith.constant 1 : index
      %c0_207 = arith.constant 0 : index
      %194 = vector.load %arg29[%c1_206, %c0_207] : memref<8x128xf32, #tpu.memory_space<vmem>>, vector<1x128xf32>
      tpu.vector_store %arg29[%c1_206, %c0_207], %193 {strides = array<i32>} : memref<8x128xf32, #tpu.memory_space<vmem>>, vector<1x128xf32>,
      %c2_i32_208 = arith.constant 2 : i32
      %195 = arith.addi %184, %c2_i32_208 : i32
      %196 = arith.index_cast %195 : i32 to index
      %c0_209 = arith.constant 0 : index
      %c0_210 = arith.constant 0 : index
      %197 = vector.load %arg22[%196, %c0_209, %c0_210] : memref<16x1x128xf32, #tpu.memory_space<vmem>>, vector<1x1x128xf32>
      %198 = vector.shape_cast %197 : vector<1x1x128xf32> to vector<1x128xf32>
      %c2_211 = arith.constant 2 : index
      %c0_212 = arith.constant 0 : index
      %199 = vector.load %arg29[%c2_211, %c0_212] : memref<8x128xf32, #tpu.memory_space<vmem>>, vector<1x128xf32>
      tpu.vector_store %arg29[%c2_211, %c0_212], %198 {strides = array<i32>} : memref<8x128xf32, #tpu.memory_space<vmem>>, vector<1x128xf32>,
      %c3_i32_213 = arith.constant 3 : i32
      %200 = arith.addi %184, %c3_i32_213 : i32
      %201 = arith.index_cast %200 : i32 to index
      %c0_214 = arith.constant 0 : index
      %c0_215 = arith.constant 0 : index
      %202 = vector.load %arg22[%201, %c0_214, %c0_215] : memref<16x1x128xf32, #tpu.memory_space<vmem>>, vector<1x1x128xf32>
      %203 = vector.shape_cast %202 : vector<1x1x128xf32> to vector<1x128xf32>
      %c3_216 = arith.constant 3 : index
      %c0_217 = arith.constant 0 : index
      %204 = vector.load %arg29[%c3_216, %c0_217] : memref<8x128xf32, #tpu.memory_space<vmem>>, vector<1x128xf32>
      tpu.vector_store %arg29[%c3_216, %c0_217], %203 {strides = array<i32>} : memref<8x128xf32, #tpu.memory_space<vmem>>, vector<1x128xf32>,
      %c4_i32_218 = arith.constant 4 : i32
      %205 = arith.addi %184, %c4_i32_218 : i32
      %206 = arith.index_cast %205 : i32 to index
      %c0_219 = arith.constant 0 : index
      %c0_220 = arith.constant 0 : index
      %207 = vector.load %arg22[%206, %c0_219, %c0_220] : memref<16x1x128xf32, #tpu.memory_space<vmem>>, vector<1x1x128xf32>
      %208 = vector.shape_cast %207 : vector<1x1x128xf32> to vector<1x128xf32>
      %c4_221 = arith.constant 4 : index
      %c0_222 = arith.constant 0 : index
      %209 = vector.load %arg29[%c4_221, %c0_222] : memref<8x128xf32, #tpu.memory_space<vmem>>, vector<1x128xf32>
      tpu.vector_store %arg29[%c4_221, %c0_222], %208 {strides = array<i32>} : memref<8x128xf32, #tpu.memory_space<vmem>>, vector<1x128xf32>,
      %c5_i32_223 = arith.constant 5 : i32
      %210 = arith.addi %184, %c5_i32_223 : i32
      %211 = arith.index_cast %210 : i32 to index
      %c0_224 = arith.constant 0 : index
      %c0_225 = arith.constant 0 : index
      %212 = vector.load %arg22[%211, %c0_224, %c0_225] : memref<16x1x128xf32, #tpu.memory_space<vmem>>, vector<1x1x128xf32>
      %213 = vector.shape_cast %212 : vector<1x1x128xf32> to vector<1x128xf32>
      %c5_226 = arith.constant 5 : index
      %c0_227 = arith.constant 0 : index
      %214 = vector.load %arg29[%c5_226, %c0_227] : memref<8x128xf32, #tpu.memory_space<vmem>>, vector<1x128xf32>
      tpu.vector_store %arg29[%c5_226, %c0_227], %213 {strides = array<i32>} : memref<8x128xf32, #tpu.memory_space<vmem>>, vector<1x128xf32>,
      %c6_i32_228 = arith.constant 6 : i32
      %215 = arith.addi %184, %c6_i32_228 : i32
      %216 = arith.index_cast %215 : i32 to index
      %c0_229 = arith.constant 0 : index
      %c0_230 = arith.constant 0 : index
      %217 = vector.load %arg22[%216, %c0_229, %c0_230] : memref<16x1x128xf32, #tpu.memory_space<vmem>>, vector<1x1x128xf32>
      %218 = vector.shape_cast %217 : vector<1x1x128xf32> to vector<1x128xf32>
      %c6_231 = arith.constant 6 : index
      %c0_232 = arith.constant 0 : index
      %219 = vector.load %arg29[%c6_231, %c0_232] : memref<8x128xf32, #tpu.memory_space<vmem>>, vector<1x128xf32>
      tpu.vector_store %arg29[%c6_231, %c0_232], %218 {strides = array<i32>} : memref<8x128xf32, #tpu.memory_space<vmem>>, vector<1x128xf32>,
      %c7_i32_233 = arith.constant 7 : i32
      %220 = arith.addi %184, %c7_i32_233 : i32
      %221 = arith.index_cast %220 : i32 to index
      %c0_234 = arith.constant 0 : index
      %c0_235 = arith.constant 0 : index
      %222 = vector.load %arg22[%221, %c0_234, %c0_235] : memref<16x1x128xf32, #tpu.memory_space<vmem>>, vector<1x1x128xf32>
      %223 = vector.shape_cast %222 : vector<1x1x128xf32> to vector<1x128xf32>
      %c7_236 = arith.constant 7 : index
      %c0_237 = arith.constant 0 : index
      %224 = vector.load %arg29[%c7_236, %c0_237] : memref<8x128xf32, #tpu.memory_space<vmem>>, vector<1x128xf32>
      tpu.vector_store %arg29[%c7_236, %c0_237], %223 {strides = array<i32>} : memref<8x128xf32, #tpu.memory_space<vmem>>, vector<1x128xf32>,
      %c0_238 = arith.constant 0 : index
      %c0_239 = arith.constant 0 : index
      %225 = vector.load %arg29[%c0_238, %c0_239] : memref<8x128xf32, #tpu.memory_space<vmem>>, vector<8x128xf32>
      %226 = arith.index_cast %184 : i32 to index
      %c0_240 = arith.constant 0 : index
      %227 = vector.load %arg26[%226, %c0_240] : memref<16x128xf32, #tpu.memory_space<vmem>>, vector<8x128xf32>
      tpu.vector_store %arg26[%226, %c0_240], %225 {strides = array<i32>} : memref<16x128xf32, #tpu.memory_space<vmem>>, vector<8x128xf32>,
    }
    %c2_i32_126 = arith.constant 2 : i32
    %c0_127 = arith.constant 0 : index
    %c0_128 = arith.constant 0 : index
    %107 = vector.load %arg20[%c0_127, %c0_128] : memref<16x128xf32, #tpu.memory_space<vmem>>, vector<16x128xf32>
    %c0_129 = arith.constant 0 : index
    %c0_130 = arith.constant 0 : index
    %108 = vector.load %arg26[%c0_129, %c0_130] : memref<16x128xf32, #tpu.memory_space<vmem>>, vector<16x128xf32>
    %109 = tpu.concatenate %107, %108 in 1 : vector<16x128xf32>, vector<16x128xf32> -> vector<16x256xf32>
    %c0_131 = arith.constant 0 : index
    %c0_132 = arith.constant 0 : index
    %110 = vector.load %arg13[%c0_131, %c0_132] : memref<256x128xbf16, #tpu.memory_space<vmem>>, vector<256x128xbf16>
    %111 = arith.truncf %109 : vector<16x256xf32> to vector<16x256xbf16>
    %cst_133 = arith.constant dense<0.000000e+00> : vector<16x128xf32>
    %112 = tpu.matmul %111, %110, %cst_133 {dimension_numbers = #tpu.dot_dimension_numbers<[1], [0], [0], [1], [0, 0, 1, 1], [], []>} : vector<16x256xbf16>, vector<256x128xbf16>, vector<16x128xf32> -> vector<16x128xf32>
    %c0_134 = arith.constant 0 : index
    %c0_135 = arith.constant 0 : index
    %113 = vector.load %arg14[%c0_134, %c0_135] : memref<1x128xf32, #tpu.memory_space<vmem>>, vector<1x128xf32>
    %114 = vector.broadcast %113 : vector<1x128xf32> to vector<16x128xf32>
    %115 = arith.addf %112, %114 : vector<16x128xf32>
    %cst_136 = arith.constant 0.000000e+00 : f32
    %116 = vector.broadcast %cst_136 : f32 to vector<16x128xf32>
    %117 = arith.maximumf %115, %116 : vector<16x128xf32>
    %c0_137 = arith.constant 0 : index
    %c0_138 = arith.constant 0 : index
    %118 = vector.load %arg20[%c0_137, %c0_138] : memref<16x128xf32, #tpu.memory_space<vmem>>, vector<16x128xf32>
    tpu.vector_store %arg20[%c0_137, %c0_138], %117 {strides = array<i32>} : memref<16x128xf32, #tpu.memory_space<vmem>>, vector<16x128xf32>,
    %cst_139 = arith.constant 0.000000e+00 : f32
    %119 = vector.broadcast %cst_139 : f32 to vector<8x1x128xf32>
    %c0_140 = arith.constant 0 : index
    %c0_141 = arith.constant 0 : index
    %c0_142 = arith.constant 0 : index
    %120 = vector.load %arg27[%c0_140, %c0_141, %c0_142] : memref<8x1x128xf32, #tpu.memory_space<vmem>>, vector<8x1x128xf32>
    tpu.vector_store %arg27[%c0_140, %c0_141, %c0_142], %119 {strides = array<i32>} : memref<8x1x128xf32, #tpu.memory_space<vmem>>, vector<8x1x128xf32>,
    %c0_i32_143 = arith.constant 0 : i32
    %c2_i32_144 = arith.constant 2 : i32
    %121 = arith.addi %c0_i32_143, %c2_i32_144 : i32
    %c1_i32_145 = arith.constant 1 : i32
    scf.for %arg30 = %c0_i32_143 to %121 step %c1_i32_145  : i32 {
      %c8_i32_197 = arith.constant 8 : i32
      %183 = arith.muli %arg30, %c8_i32_197 : i32
      %184 = tpu.assume_multiple %183, 8 : i32
      %185 = arith.index_cast %184 : i32 to index
      %c0_198 = arith.constant 0 : index
      %186 = vector.load %arg20[%185, %c0_198] : memref<16x128xf32, #tpu.memory_space<vmem>>, vector<8x128xf32>
      %c0_i32_199 = arith.constant 0 : i32
      %187 = arith.addi %184, %c0_i32_199 : i32
      %188 = arith.index_cast %187 : i32 to index
      %189 = memref.load %arg2[%188] : memref<16xi32, #tpu.memory_space<smem>>
      %190 = arith.index_cast %189 : i32 to index
      %c0_200 = arith.constant 0 : index
      %c0_201 = arith.constant 0 : index
      %191 = vector.load %arg27[%190, %c0_200, %c0_201] : memref<8x1x128xf32, #tpu.memory_space<vmem>>, vector<1x1x128xf32>
      %192 = vector.shape_cast %191 : vector<1x1x128xf32> to vector<1x128xf32>
      %193 = vector.extract_strided_slice %186 {offsets = [0, 0], sizes = [1, 128], strides = [1, 1]} : vector<8x128xf32> to vector<1x128xf32>
      %194 = arith.addf %192, %193 : vector<1x128xf32>
      %195 = arith.index_cast %189 : i32 to index
      %c0_202 = arith.constant 0 : index
      %c0_203 = arith.constant 0 : index
      %196 = vector.load %arg27[%195, %c0_202, %c0_203] : memref<8x1x128xf32, #tpu.memory_space<vmem>>, vector<1x1x128xf32>
      %197 = vector.shape_cast %196 : vector<1x1x128xf32> to vector<1x128xf32>
      %198 = vector.shape_cast %194 : vector<1x128xf32> to vector<1x1x128xf32>
      tpu.vector_store %arg27[%195, %c0_202, %c0_203], %198 {strides = array<i32>} : memref<8x1x128xf32, #tpu.memory_space<vmem>>, vector<1x1x128xf32>,
      %c1_i32_204 = arith.constant 1 : i32
      %199 = arith.addi %184, %c1_i32_204 : i32
      %200 = arith.index_cast %199 : i32 to index
      %201 = memref.load %arg2[%200] : memref<16xi32, #tpu.memory_space<smem>>
      %202 = arith.index_cast %201 : i32 to index
      %c0_205 = arith.constant 0 : index
      %c0_206 = arith.constant 0 : index
      %203 = vector.load %arg27[%202, %c0_205, %c0_206] : memref<8x1x128xf32, #tpu.memory_space<vmem>>, vector<1x1x128xf32>
      %204 = vector.shape_cast %203 : vector<1x1x128xf32> to vector<1x128xf32>
      %205 = vector.extract_strided_slice %186 {offsets = [1, 0], sizes = [1, 128], strides = [1, 1]} : vector<8x128xf32> to vector<1x128xf32>
      %206 = arith.addf %204, %205 : vector<1x128xf32>
      %207 = arith.index_cast %201 : i32 to index
      %c0_207 = arith.constant 0 : index
      %c0_208 = arith.constant 0 : index
      %208 = vector.load %arg27[%207, %c0_207, %c0_208] : memref<8x1x128xf32, #tpu.memory_space<vmem>>, vector<1x1x128xf32>
      %209 = vector.shape_cast %208 : vector<1x1x128xf32> to vector<1x128xf32>
      %210 = vector.shape_cast %206 : vector<1x128xf32> to vector<1x1x128xf32>
      tpu.vector_store %arg27[%207, %c0_207, %c0_208], %210 {strides = array<i32>} : memref<8x1x128xf32, #tpu.memory_space<vmem>>, vector<1x1x128xf32>,
      %c2_i32_209 = arith.constant 2 : i32
      %211 = arith.addi %184, %c2_i32_209 : i32
      %212 = arith.index_cast %211 : i32 to index
      %213 = memref.load %arg2[%212] : memref<16xi32, #tpu.memory_space<smem>>
      %214 = arith.index_cast %213 : i32 to index
      %c0_210 = arith.constant 0 : index
      %c0_211 = arith.constant 0 : index
      %215 = vector.load %arg27[%214, %c0_210, %c0_211] : memref<8x1x128xf32, #tpu.memory_space<vmem>>, vector<1x1x128xf32>
      %216 = vector.shape_cast %215 : vector<1x1x128xf32> to vector<1x128xf32>
      %217 = vector.extract_strided_slice %186 {offsets = [2, 0], sizes = [1, 128], strides = [1, 1]} : vector<8x128xf32> to vector<1x128xf32>
      %218 = arith.addf %216, %217 : vector<1x128xf32>
      %219 = arith.index_cast %213 : i32 to index
      %c0_212 = arith.constant 0 : index
      %c0_213 = arith.constant 0 : index
      %220 = vector.load %arg27[%219, %c0_212, %c0_213] : memref<8x1x128xf32, #tpu.memory_space<vmem>>, vector<1x1x128xf32>
      %221 = vector.shape_cast %220 : vector<1x1x128xf32> to vector<1x128xf32>
      %222 = vector.shape_cast %218 : vector<1x128xf32> to vector<1x1x128xf32>
      tpu.vector_store %arg27[%219, %c0_212, %c0_213], %222 {strides = array<i32>} : memref<8x1x128xf32, #tpu.memory_space<vmem>>, vector<1x1x128xf32>,
      %c3_i32_214 = arith.constant 3 : i32
      %223 = arith.addi %184, %c3_i32_214 : i32
      %224 = arith.index_cast %223 : i32 to index
      %225 = memref.load %arg2[%224] : memref<16xi32, #tpu.memory_space<smem>>
      %226 = arith.index_cast %225 : i32 to index
      %c0_215 = arith.constant 0 : index
      %c0_216 = arith.constant 0 : index
      %227 = vector.load %arg27[%226, %c0_215, %c0_216] : memref<8x1x128xf32, #tpu.memory_space<vmem>>, vector<1x1x128xf32>
      %228 = vector.shape_cast %227 : vector<1x1x128xf32> to vector<1x128xf32>
      %229 = vector.extract_strided_slice %186 {offsets = [3, 0], sizes = [1, 128], strides = [1, 1]} : vector<8x128xf32> to vector<1x128xf32>
      %230 = arith.addf %228, %229 : vector<1x128xf32>
      %231 = arith.index_cast %225 : i32 to index
      %c0_217 = arith.constant 0 : index
      %c0_218 = arith.constant 0 : index
      %232 = vector.load %arg27[%231, %c0_217, %c0_218] : memref<8x1x128xf32, #tpu.memory_space<vmem>>, vector<1x1x128xf32>
      %233 = vector.shape_cast %232 : vector<1x1x128xf32> to vector<1x128xf32>
      %234 = vector.shape_cast %230 : vector<1x128xf32> to vector<1x1x128xf32>
      tpu.vector_store %arg27[%231, %c0_217, %c0_218], %234 {strides = array<i32>} : memref<8x1x128xf32, #tpu.memory_space<vmem>>, vector<1x1x128xf32>,
      %c4_i32_219 = arith.constant 4 : i32
      %235 = arith.addi %184, %c4_i32_219 : i32
      %236 = arith.index_cast %235 : i32 to index
      %237 = memref.load %arg2[%236] : memref<16xi32, #tpu.memory_space<smem>>
      %238 = arith.index_cast %237 : i32 to index
      %c0_220 = arith.constant 0 : index
      %c0_221 = arith.constant 0 : index
      %239 = vector.load %arg27[%238, %c0_220, %c0_221] : memref<8x1x128xf32, #tpu.memory_space<vmem>>, vector<1x1x128xf32>
      %240 = vector.shape_cast %239 : vector<1x1x128xf32> to vector<1x128xf32>
      %241 = vector.extract_strided_slice %186 {offsets = [4, 0], sizes = [1, 128], strides = [1, 1]} : vector<8x128xf32> to vector<1x128xf32>
      %242 = arith.addf %240, %241 : vector<1x128xf32>
      %243 = arith.index_cast %237 : i32 to index
      %c0_222 = arith.constant 0 : index
      %c0_223 = arith.constant 0 : index
      %244 = vector.load %arg27[%243, %c0_222, %c0_223] : memref<8x1x128xf32, #tpu.memory_space<vmem>>, vector<1x1x128xf32>
      %245 = vector.shape_cast %244 : vector<1x1x128xf32> to vector<1x128xf32>
      %246 = vector.shape_cast %242 : vector<1x128xf32> to vector<1x1x128xf32>
      tpu.vector_store %arg27[%243, %c0_222, %c0_223], %246 {strides = array<i32>} : memref<8x1x128xf32, #tpu.memory_space<vmem>>, vector<1x1x128xf32>,
      %c5_i32_224 = arith.constant 5 : i32
      %247 = arith.addi %184, %c5_i32_224 : i32
      %248 = arith.index_cast %247 : i32 to index
      %249 = memref.load %arg2[%248] : memref<16xi32, #tpu.memory_space<smem>>
      %250 = arith.index_cast %249 : i32 to index
      %c0_225 = arith.constant 0 : index
      %c0_226 = arith.constant 0 : index
      %251 = vector.load %arg27[%250, %c0_225, %c0_226] : memref<8x1x128xf32, #tpu.memory_space<vmem>>, vector<1x1x128xf32>
      %252 = vector.shape_cast %251 : vector<1x1x128xf32> to vector<1x128xf32>
      %253 = vector.extract_strided_slice %186 {offsets = [5, 0], sizes = [1, 128], strides = [1, 1]} : vector<8x128xf32> to vector<1x128xf32>
      %254 = arith.addf %252, %253 : vector<1x128xf32>
      %255 = arith.index_cast %249 : i32 to index
      %c0_227 = arith.constant 0 : index
      %c0_228 = arith.constant 0 : index
      %256 = vector.load %arg27[%255, %c0_227, %c0_228] : memref<8x1x128xf32, #tpu.memory_space<vmem>>, vector<1x1x128xf32>
      %257 = vector.shape_cast %256 : vector<1x1x128xf32> to vector<1x128xf32>
      %258 = vector.shape_cast %254 : vector<1x128xf32> to vector<1x1x128xf32>
      tpu.vector_store %arg27[%255, %c0_227, %c0_228], %258 {strides = array<i32>} : memref<8x1x128xf32, #tpu.memory_space<vmem>>, vector<1x1x128xf32>,
      %c6_i32_229 = arith.constant 6 : i32
      %259 = arith.addi %184, %c6_i32_229 : i32
      %260 = arith.index_cast %259 : i32 to index
      %261 = memref.load %arg2[%260] : memref<16xi32, #tpu.memory_space<smem>>
      %262 = arith.index_cast %261 : i32 to index
      %c0_230 = arith.constant 0 : index
      %c0_231 = arith.constant 0 : index
      %263 = vector.load %arg27[%262, %c0_230, %c0_231] : memref<8x1x128xf32, #tpu.memory_space<vmem>>, vector<1x1x128xf32>
      %264 = vector.shape_cast %263 : vector<1x1x128xf32> to vector<1x128xf32>
      %265 = vector.extract_strided_slice %186 {offsets = [6, 0], sizes = [1, 128], strides = [1, 1]} : vector<8x128xf32> to vector<1x128xf32>
      %266 = arith.addf %264, %265 : vector<1x128xf32>
      %267 = arith.index_cast %261 : i32 to index
      %c0_232 = arith.constant 0 : index
      %c0_233 = arith.constant 0 : index
      %268 = vector.load %arg27[%267, %c0_232, %c0_233] : memref<8x1x128xf32, #tpu.memory_space<vmem>>, vector<1x1x128xf32>
      %269 = vector.shape_cast %268 : vector<1x1x128xf32> to vector<1x128xf32>
      %270 = vector.shape_cast %266 : vector<1x128xf32> to vector<1x1x128xf32>
      tpu.vector_store %arg27[%267, %c0_232, %c0_233], %270 {strides = array<i32>} : memref<8x1x128xf32, #tpu.memory_space<vmem>>, vector<1x1x128xf32>,
      %c7_i32_234 = arith.constant 7 : i32
      %271 = arith.addi %184, %c7_i32_234 : i32
      %272 = arith.index_cast %271 : i32 to index
      %273 = memref.load %arg2[%272] : memref<16xi32, #tpu.memory_space<smem>>
      %274 = arith.index_cast %273 : i32 to index
      %c0_235 = arith.constant 0 : index
      %c0_236 = arith.constant 0 : index
      %275 = vector.load %arg27[%274, %c0_235, %c0_236] : memref<8x1x128xf32, #tpu.memory_space<vmem>>, vector<1x1x128xf32>
      %276 = vector.shape_cast %275 : vector<1x1x128xf32> to vector<1x128xf32>
      %277 = vector.extract_strided_slice %186 {offsets = [7, 0], sizes = [1, 128], strides = [1, 1]} : vector<8x128xf32> to vector<1x128xf32>
      %278 = arith.addf %276, %277 : vector<1x128xf32>
      %279 = arith.index_cast %273 : i32 to index
      %c0_237 = arith.constant 0 : index
      %c0_238 = arith.constant 0 : index
      %280 = vector.load %arg27[%279, %c0_237, %c0_238] : memref<8x1x128xf32, #tpu.memory_space<vmem>>, vector<1x1x128xf32>
      %281 = vector.shape_cast %280 : vector<1x1x128xf32> to vector<1x128xf32>
      %282 = vector.shape_cast %278 : vector<1x128xf32> to vector<1x1x128xf32>
      tpu.vector_store %arg27[%279, %c0_237, %c0_238], %282 {strides = array<i32>} : memref<8x1x128xf32, #tpu.memory_space<vmem>>, vector<1x1x128xf32>,
    }
    %c2_i32_146 = arith.constant 2 : i32
    %c0_i32_147 = arith.constant 0 : i32
    %c8_i32 = arith.constant 8 : i32
    %122 = arith.muli %c0_i32_147, %c8_i32 : i32
    %123 = tpu.assume_multiple %122, 8 : i32
    %c0_i32_148 = arith.constant 0 : i32
    %124 = arith.addi %123, %c0_i32_148 : i32
    %125 = arith.index_cast %124 : i32 to index
    %c0_149 = arith.constant 0 : index
    %c0_150 = arith.constant 0 : index
    %126 = vector.load %arg27[%125, %c0_149, %c0_150] : memref<8x1x128xf32, #tpu.memory_space<vmem>>, vector<1x1x128xf32>
    %127 = vector.shape_cast %126 : vector<1x1x128xf32> to vector<1x128xf32>
    %c0_151 = arith.constant 0 : index
    %c0_152 = arith.constant 0 : index
    %128 = vector.load %arg29[%c0_151, %c0_152] : memref<8x128xf32, #tpu.memory_space<vmem>>, vector<1x128xf32>
    tpu.vector_store %arg29[%c0_151, %c0_152], %127 {strides = array<i32>} : memref<8x128xf32, #tpu.memory_space<vmem>>, vector<1x128xf32>,
    %c1_i32_153 = arith.constant 1 : i32
    %129 = arith.addi %123, %c1_i32_153 : i32
    %130 = arith.index_cast %129 : i32 to index
    %c0_154 = arith.constant 0 : index
    %c0_155 = arith.constant 0 : index
    %131 = vector.load %arg27[%130, %c0_154, %c0_155] : memref<8x1x128xf32, #tpu.memory_space<vmem>>, vector<1x1x128xf32>
    %132 = vector.shape_cast %131 : vector<1x1x128xf32> to vector<1x128xf32>
    %c1 = arith.constant 1 : index
    %c0_156 = arith.constant 0 : index
    %133 = vector.load %arg29[%c1, %c0_156] : memref<8x128xf32, #tpu.memory_space<vmem>>, vector<1x128xf32>
    tpu.vector_store %arg29[%c1, %c0_156], %132 {strides = array<i32>} : memref<8x128xf32, #tpu.memory_space<vmem>>, vector<1x128xf32>,
    %c2_i32_157 = arith.constant 2 : i32
    %134 = arith.addi %123, %c2_i32_157 : i32
    %135 = arith.index_cast %134 : i32 to index
    %c0_158 = arith.constant 0 : index
    %c0_159 = arith.constant 0 : index
    %136 = vector.load %arg27[%135, %c0_158, %c0_159] : memref<8x1x128xf32, #tpu.memory_space<vmem>>, vector<1x1x128xf32>
    %137 = vector.shape_cast %136 : vector<1x1x128xf32> to vector<1x128xf32>
    %c2 = arith.constant 2 : index
    %c0_160 = arith.constant 0 : index
    %138 = vector.load %arg29[%c2, %c0_160] : memref<8x128xf32, #tpu.memory_space<vmem>>, vector<1x128xf32>
    tpu.vector_store %arg29[%c2, %c0_160], %137 {strides = array<i32>} : memref<8x128xf32, #tpu.memory_space<vmem>>, vector<1x128xf32>,
    %c3_i32_161 = arith.constant 3 : i32
    %139 = arith.addi %123, %c3_i32_161 : i32
    %140 = arith.index_cast %139 : i32 to index
    %c0_162 = arith.constant 0 : index
    %c0_163 = arith.constant 0 : index
    %141 = vector.load %arg27[%140, %c0_162, %c0_163] : memref<8x1x128xf32, #tpu.memory_space<vmem>>, vector<1x1x128xf32>
    %142 = vector.shape_cast %141 : vector<1x1x128xf32> to vector<1x128xf32>
    %c3 = arith.constant 3 : index
    %c0_164 = arith.constant 0 : index
    %143 = vector.load %arg29[%c3, %c0_164] : memref<8x128xf32, #tpu.memory_space<vmem>>, vector<1x128xf32>
    tpu.vector_store %arg29[%c3, %c0_164], %142 {strides = array<i32>} : memref<8x128xf32, #tpu.memory_space<vmem>>, vector<1x128xf32>,
    %c4_i32_165 = arith.constant 4 : i32
    %144 = arith.addi %123, %c4_i32_165 : i32
    %145 = arith.index_cast %144 : i32 to index
    %c0_166 = arith.constant 0 : index
    %c0_167 = arith.constant 0 : index
    %146 = vector.load %arg27[%145, %c0_166, %c0_167] : memref<8x1x128xf32, #tpu.memory_space<vmem>>, vector<1x1x128xf32>
    %147 = vector.shape_cast %146 : vector<1x1x128xf32> to vector<1x128xf32>
    %c4 = arith.constant 4 : index
    %c0_168 = arith.constant 0 : index
    %148 = vector.load %arg29[%c4, %c0_168] : memref<8x128xf32, #tpu.memory_space<vmem>>, vector<1x128xf32>
    tpu.vector_store %arg29[%c4, %c0_168], %147 {strides = array<i32>} : memref<8x128xf32, #tpu.memory_space<vmem>>, vector<1x128xf32>,
    %c5_i32 = arith.constant 5 : i32
    %149 = arith.addi %123, %c5_i32 : i32
    %150 = arith.index_cast %149 : i32 to index
    %c0_169 = arith.constant 0 : index
    %c0_170 = arith.constant 0 : index
    %151 = vector.load %arg27[%150, %c0_169, %c0_170] : memref<8x1x128xf32, #tpu.memory_space<vmem>>, vector<1x1x128xf32>
    %152 = vector.shape_cast %151 : vector<1x1x128xf32> to vector<1x128xf32>
    %c5 = arith.constant 5 : index
    %c0_171 = arith.constant 0 : index
    %153 = vector.load %arg29[%c5, %c0_171] : memref<8x128xf32, #tpu.memory_space<vmem>>, vector<1x128xf32>
    tpu.vector_store %arg29[%c5, %c0_171], %152 {strides = array<i32>} : memref<8x128xf32, #tpu.memory_space<vmem>>, vector<1x128xf32>,
    %c6_i32 = arith.constant 6 : i32
    %154 = arith.addi %123, %c6_i32 : i32
    %155 = arith.index_cast %154 : i32 to index
    %c0_172 = arith.constant 0 : index
    %c0_173 = arith.constant 0 : index
    %156 = vector.load %arg27[%155, %c0_172, %c0_173] : memref<8x1x128xf32, #tpu.memory_space<vmem>>, vector<1x1x128xf32>
    %157 = vector.shape_cast %156 : vector<1x1x128xf32> to vector<1x128xf32>
    %c6 = arith.constant 6 : index
    %c0_174 = arith.constant 0 : index
    %158 = vector.load %arg29[%c6, %c0_174] : memref<8x128xf32, #tpu.memory_space<vmem>>, vector<1x128xf32>
    tpu.vector_store %arg29[%c6, %c0_174], %157 {strides = array<i32>} : memref<8x128xf32, #tpu.memory_space<vmem>>, vector<1x128xf32>,
    %c7_i32 = arith.constant 7 : i32
    %159 = arith.addi %123, %c7_i32 : i32
    %160 = arith.index_cast %159 : i32 to index
    %c0_175 = arith.constant 0 : index
    %c0_176 = arith.constant 0 : index
    %161 = vector.load %arg27[%160, %c0_175, %c0_176] : memref<8x1x128xf32, #tpu.memory_space<vmem>>, vector<1x1x128xf32>
    %162 = vector.shape_cast %161 : vector<1x1x128xf32> to vector<1x128xf32>
    %c7 = arith.constant 7 : index
    %c0_177 = arith.constant 0 : index
    %163 = vector.load %arg29[%c7, %c0_177] : memref<8x128xf32, #tpu.memory_space<vmem>>, vector<1x128xf32>
    tpu.vector_store %arg29[%c7, %c0_177], %162 {strides = array<i32>} : memref<8x128xf32, #tpu.memory_space<vmem>>, vector<1x128xf32>,
    %c0_178 = arith.constant 0 : index
    %c0_179 = arith.constant 0 : index
    %164 = vector.load %arg29[%c0_178, %c0_179] : memref<8x128xf32, #tpu.memory_space<vmem>>, vector<8x128xf32>
    %165 = arith.index_cast %123 : i32 to index
    %c0_180 = arith.constant 0 : index
    %166 = vector.load %arg28[%165, %c0_180] : memref<8x128xf32, #tpu.memory_space<vmem>>, vector<8x128xf32>
    tpu.vector_store %arg28[%165, %c0_180], %164 {strides = array<i32>} : memref<8x128xf32, #tpu.memory_space<vmem>>, vector<8x128xf32>,
    %c1_i32_181 = arith.constant 1 : i32
    %c0_182 = arith.constant 0 : index
    %c0_183 = arith.constant 0 : index
    %167 = vector.load %arg28[%c0_182, %c0_183] : memref<8x128xf32, #tpu.memory_space<vmem>>, vector<8x128xf32>
    %c0_184 = arith.constant 0 : index
    %c0_185 = arith.constant 0 : index
    %168 = vector.load %arg15[%c0_184, %c0_185] : memref<128x64xbf16, #tpu.memory_space<vmem>>, vector<128x64xbf16>
    %169 = arith.truncf %167 : vector<8x128xf32> to vector<8x128xbf16>
    %cst_186 = arith.constant dense<0.000000e+00> : vector<8x64xf32>
    %170 = tpu.matmul %169, %168, %cst_186 {dimension_numbers = #tpu.dot_dimension_numbers<[1], [0], [0], [1], [0, 0, 1, 1], [], []>} : vector<8x128xbf16>, vector<128x64xbf16>, vector<8x64xf32> -> vector<8x64xf32>
    %c0_187 = arith.constant 0 : index
    %c0_188 = arith.constant 0 : index
    %171 = vector.load %arg16[%c0_187, %c0_188] : memref<1x64xf32, #tpu.memory_space<vmem>>, vector<1x64xf32>
    %172 = vector.broadcast %171 : vector<1x64xf32> to vector<8x64xf32>
    %173 = arith.addf %170, %172 : vector<8x64xf32>
    %cst_189 = arith.constant 0.000000e+00 : f32
    %174 = vector.broadcast %cst_189 : f32 to vector<8x64xf32>
    %175 = arith.maximumf %173, %174 : vector<8x64xf32>
    %c0_190 = arith.constant 0 : index
    %c0_191 = arith.constant 0 : index
    %176 = vector.load %arg17[%c0_190, %c0_191] : memref<64x128xbf16, #tpu.memory_space<vmem>>, vector<64x128xbf16>
    %177 = arith.truncf %175 : vector<8x64xf32> to vector<8x64xbf16>
    %cst_192 = arith.constant dense<0.000000e+00> : vector<8x128xf32>
    %178 = tpu.matmul %177, %176, %cst_192 {dimension_numbers = #tpu.dot_dimension_numbers<[1], [0], [0], [1], [0, 0, 1, 1], [], []>} : vector<8x64xbf16>, vector<64x128xbf16>, vector<8x128xf32> -> vector<8x128xf32>
    %c0_193 = arith.constant 0 : index
    %c0_194 = arith.constant 0 : index
    %179 = vector.load %arg18[%c0_193, %c0_194] : memref<1x128xf32, #tpu.memory_space<vmem>>, vector<1x128xf32>
    %180 = vector.broadcast %179 : vector<1x128xf32> to vector<8x128xf32>
    %181 = arith.addf %178, %180 : vector<8x128xf32>
    %c0_195 = arith.constant 0 : index
    %c0_196 = arith.constant 0 : index
    %182 = vector.load %arg19[%c0_195, %c0_196] : memref<8x128xf32, #tpu.memory_space<vmem>>, vector<8x128xf32>
    tpu.vector_store %arg19[%c0_195, %c0_196], %181 {strides = array<i32>} : memref<8x128xf32, #tpu.memory_space<vmem>>, vector<8x128xf32>,
    return
  }
}

</mosaic_0001>

<llo_original>
// kernel: tpu_custom_call.1
$region0: #{tpu_custom_call.1}
  #allocation0 [shape = 'u32[]', space=smem, size = 0x4, offset = 0x4, fixed_abs, tag = 'smem constant byte address 0x4 - core index']
  #allocation1 [shape = 'u32[72,128]{1,0:T(1,128)}', space=vmem, size = 0x9000, scoped, tag = 'internal scratch']
  #allocation2 [shape = 'f32[16,128]{1,0:T(8,128)}', space=vmem, size = 0x2000, scoped, tag = 'scratch operand']
  #allocation3 [shape = 'f32[16,1,128]{2,1,0:T(1,128)}', space=vmem, size = 0x2000, scoped, tag = 'scratch operand']
  #allocation4 [shape = 'f32[16,1,128]{2,1,0:T(1,128)}', space=vmem, size = 0x2000, scoped, tag = 'scratch operand']
  #allocation5 [shape = 'f32[32,128]{1,0:T(8,128)}', space=vmem, size = 0x4000, scoped, tag = 'scratch operand']
  #allocation6 [shape = 'f32[32,128]{1,0:T(8,128)}', space=vmem, size = 0x4000, scoped, tag = 'scratch operand']
  #allocation7 [shape = 'f32[32,128]{1,0:T(8,128)}', space=vmem, size = 0x4000, scoped, tag = 'scratch operand']
  #allocation8 [shape = 'f32[16,128]{1,0:T(8,128)}', space=vmem, size = 0x2000, scoped, tag = 'scratch operand']
  #allocation9 [shape = 'f32[8,1,128]{2,1,0:T(1,128)}', space=vmem, size = 0x1000, scoped, tag = 'scratch operand']
  #allocation10 [shape = 'f32[8,128]{1,0:T(8,128)}', space=vmem, size = 0x1000, scoped, tag = 'scratch operand']
  #allocation11 [shape = 'f32[8,128]{1,0:T(8,128)}', space=vmem, size = 0x1000, scoped, tag = 'scratch operand']
  %s0 = inlined_call_operand.hbm [shape: s32[32], index: 0, kind: input, shape index: {}]
  %s1 = inlined_call_operand.hbm [shape: s32[32], index: 1, kind: input, shape index: {}]
  %s2 = inlined_call_operand.hbm [shape: s32[16], index: 2, kind: input, shape index: {}]
  %s3 = inlined_call_operand.hbm [shape: bf16[16,16], index: 3, kind: input, shape index: {}]
  %s4 = inlined_call_operand.vmem [shape: bf16[32,8], index: 4, kind: input, shape index: {}]
  %s5 = inlined_call_operand.hbm [shape: bf16[16,128], index: 5, kind: input, shape index: {}]
  %s6 = inlined_call_operand.hbm [shape: f32[1,128], index: 6, kind: input, shape index: {}]
  %s7 = inlined_call_operand.hbm [shape: bf16[8,128], index: 7, kind: input, shape index: {}]
  %s8 = inlined_call_operand.hbm [shape: f32[1,128], index: 8, kind: input, shape index: {}]
  %s9 = inlined_call_operand.hbm [shape: bf16[256,128], index: 9, kind: input, shape index: {}]
  %s10 = inlined_call_operand.hbm [shape: f32[1,128], index: 10, kind: input, shape index: {}]
  %s11 = inlined_call_operand.hbm [shape: bf16[3,128,128], index: 11, kind: input, shape index: {}]
  %s12 = inlined_call_operand.hbm [shape: f32[3,1,128], index: 12, kind: input, shape index: {}]
  %s13 = inlined_call_operand.vmem [shape: bf16[256,128], index: 13, kind: input, shape index: {}]
  %s14 = inlined_call_operand.vmem [shape: f32[1,128], index: 14, kind: input, shape index: {}]
  %s15 = inlined_call_operand.vmem [shape: bf16[128,64], index: 15, kind: input, shape index: {}]
  %s16 = inlined_call_operand.vmem [shape: f32[1,64], index: 16, kind: input, shape index: {}]
  %s17 = inlined_call_operand.hbm [shape: bf16[64,128], index: 17, kind: input, shape index: {}]
  %s18 = inlined_call_operand.vmem [shape: f32[1,128], index: 18, kind: input, shape index: {}]
  %s19 = inlined_call_operand.hbm [shape: f32[8,128], index: 19, kind: output, shape index: {}]
  %s20 = sld [smem:[#allocation0]]
  $region215: #{tpu_custom_call.1} parent=0
    _
  %s22 = ssub.s32 1, %s20
  %s23 = scalar_select 0, %s22, %s20
  $region1: #{tpu_custom_call.1} parent=0
    #allocation12 [shape = 'u8[512]{0}', space=smem, size = 0x200, scoped, tag = 'input window, operand 0, single buffered']
    #allocation13 [shape = 's32[1]{0}', space=sflag, size = 0x4, scoped, tag = 'scoped memory for tpu_custom_call.1']
    #allocation14 [shape = 's32[1]{0}', space=sflag, size = 0x4, scoped, tag = 'scoped memory for tpu_custom_call.1']
    #allocation15 [shape = 's32[1]{0}', space=sflag, size = 0x4, scoped, tag = 'scoped memory for tpu_custom_call.1']
    #allocation16 [shape = 'u8[512]{0}', space=smem, size = 0x200, scoped, tag = 'input window, operand 1, single buffered']
    #allocation17 [shape = 's32[1]{0}', space=sflag, size = 0x4, scoped, tag = 'scoped memory for tpu_custom_call.1']
    #allocation18 [shape = 'u8[512]{0}', space=smem, size = 0x200, scoped, tag = 'input window, operand 2, single buffered']
    #allocation19 [shape = 'u8[4096]{0}', space=vmem, size = 0x1000, scoped, tag = 'input window, operand 3, single buffered']
    #allocation20 [shape = 'u8[4096]{0}', space=vmem, size = 0x1000, scoped, tag = 'input window, operand 5, single buffered']
    #allocation21 [shape = 's32[1]{0}', space=sflag, size = 0x4, scoped, tag = 'scoped memory for tpu_custom_call.1']
    #allocation22 [shape = 'u8[512]{0}', space=vmem, size = 0x400, scoped, tag = 'input window, operand 6, single buffered']
    #allocation23 [shape = 'u8[2048]{0}', space=vmem, size = 0x800, scoped, tag = 'input window, operand 7, single buffered']
    #allocation24 [shape = 's32[1]{0}', space=sflag, size = 0x4, scoped, tag = 'scoped memory for tpu_custom_call.1']
    #allocation25 [shape = 'u8[512]{0}', space=vmem, size = 0x400, scoped, tag = 'input window, operand 8, single buffered']
    #allocation26 [shape = 'u8[65536]{0}', space=vmem, size = 0x10000, scoped, tag = 'input window, operand 9, single buffered']
    #allocation27 [shape = 's32[1]{0}', space=sflag, size = 0x4, scoped, tag = 'scoped memory for tpu_custom_call.1']
    #allocation28 [shape = 'u8[512]{0}', space=vmem, size = 0x400, scoped, tag = 'input window, operand 10, single buffered']
    #allocation29 [shape = 'u8[98304]{0}', space=vmem, size = 0x18000, scoped, tag = 'input window, operand 11, single buffered']
    #allocation30 [shape = 's32[1]{0}', space=sflag, size = 0x4, scoped, tag = 'scoped memory for tpu_custom_call.1']
    #allocation31 [shape = 'u8[1536]{0}', space=vmem, size = 0x800, scoped, tag = 'input window, operand 12, single buffered']
    #allocation32 [shape = 'u8[16384]{0}', space=vmem, size = 0x4000, scoped, tag = 'input window, operand 17, single buffered']
    #allocation33 [shape = 's32[1]{0}', space=sflag, size = 0x4, scoped, tag = 'scoped memory for tpu_custom_call.1']
    #allocation34 [shape = 'u8[4096]{0}', space=vmem, size = 0x1000, scoped, tag = 'output window, operand 0, single buffered']
    %24 = vsyncpa [#allocation15], 0
    %25 = vsyncpa [#allocation17], 0
    %26 = vsyncpa [#allocation13], 0
    %27 = vsyncpa [#allocation21], 0
    %28 = vsyncpa [#allocation24], 0
    %29 = vsyncpa [#allocation27], 0
    %30 = vsyncpa [#allocation30], 0
    %31 = vsyncpa [#allocation33], 0
    %32 = vsyncpa [#allocation14], 0
    // Predicated region
    $region2: #{tpu_custom_call.1} parent=1 // pred_check
      _
    $region3: #{tpu_custom_call.1} parent=1 // pred_check_branch
      %34 = sbr.rel (0) target = $region5
    $region4: #{tpu_custom_call.1} parent=1 // pred_region
      %36 = vsyncadd [#allocation15], 0
      %s38 = sshll.u32 %s0, 4
      %s39 = int_to_ptr.hbm [resolvable:$true] %s38
      %41 = dma.hbm_to_smem %s39, 16, [#allocation12], [#allocation15]
    $region5: #{tpu_custom_call.1} parent=1 // pred_fallthru
      _
    // Predicated region
    $region6: #{tpu_custom_call.1} parent=1 // pred_check
      _
    $region7: #{tpu_custom_call.1} parent=1 // pred_check_branch
      %43 = sbr.rel (0) target = $region9
    $region8: #{tpu_custom_call.1} parent=1 // pred_region
      %45 = vsyncadd [#allocation17], 0
      %s47 = sshll.u32 %s1, 4
      %s48 = int_to_ptr.hbm [resolvable:$true] %s47
      %50 = dma.hbm_to_smem %s48, 16, [#allocation16], [#allocation17]
    $region9: #{tpu_custom_call.1} parent=1 // pred_fallthru
      _
    // Predicated region
    $region10: #{tpu_custom_call.1} parent=1 // pred_check
      _
    $region11: #{tpu_custom_call.1} parent=1 // pred_check_branch
      %52 = sbr.rel (0) target = $region13
    $region12: #{tpu_custom_call.1} parent=1 // pred_region
      %54 = vsyncadd [#allocation17], 0
      %s56 = sshll.u32 %s2, 4
      %s57 = int_to_ptr.hbm [resolvable:$true] %s56
      %59 = dma.hbm_to_smem %s57, 16, [#allocation18], [#allocation17]
    $region13: #{tpu_custom_call.1} parent=1 // pred_fallthru
      _
    // Predicated region
    $region14: #{tpu_custom_call.1} parent=1 // pred_check
      _
    $region15: #{tpu_custom_call.1} parent=1 // pred_check_branch
      %61 = sbr.rel (0) target = $region17
    $region16: #{tpu_custom_call.1} parent=1 // pred_region
      %63 = vsyncadd [#allocation13], 0
      %s64 = sshll.u32 %s3, 4
      %s65 = int_to_ptr.hbm [resolvable:$true] %s64
      %s66 = sshll.u32 [#allocation19], 4
      %s67 = int_to_ptr.vmem [resolvable:$true] %s66
      %72 = dma.hbm_to_vmem [thread:$0]  %s65, 128, %s67, [#allocation13], 64, 64, 4
    $region17: #{tpu_custom_call.1} parent=1 // pred_fallthru
      _
    // Predicated region
    $region18: #{tpu_custom_call.1} parent=1 // pred_check
      _
    $region19: #{tpu_custom_call.1} parent=1 // pred_check_branch
      %74 = sbr.rel (0) target = $region21
    $region20: #{tpu_custom_call.1} parent=1 // pred_region
      _
    $region21: #{tpu_custom_call.1} parent=1 // pred_fallthru
      _
    // Predicated region
    $region22: #{tpu_custom_call.1} parent=1 // pred_check
      _
    $region23: #{tpu_custom_call.1} parent=1 // pred_check_branch
      %76 = sbr.rel (0) target = $region25
    $region24: #{tpu_custom_call.1} parent=1 // pred_region
      %78 = vsyncadd [#allocation21], 0
      %s79 = sshll.u32 %s5, 4
      %s80 = int_to_ptr.hbm [resolvable:$true] %s79
      %s81 = sshll.u32 [#allocation20], 4
      %s82 = int_to_ptr.vmem [resolvable:$true] %s81
      %87 = dma.hbm_to_vmem [thread:$0]  %s80, 128, %s82, [#allocation21], 64, 64, 4
    $region25: #{tpu_custom_call.1} parent=1 // pred_fallthru
      _
    // Predicated region
    $region26: #{tpu_custom_call.1} parent=1 // pred_check
      _
    $region27: #{tpu_custom_call.1} parent=1 // pred_check_branch
      %89 = sbr.rel (0) target = $region29
    $region28: #{tpu_custom_call.1} parent=1 // pred_region
      %91 = vsyncadd [#allocation21], 0
      %s93 = sshll.u32 %s6, 4
      %s94 = int_to_ptr.hbm [resolvable:$true] %s93
      %s95 = sshll.u32 [#allocation22], 4
      %s96 = int_to_ptr.vmem [resolvable:$true] %s95
      %98 = dma.hbm_to_vmem [thread:$0]  %s94, 16, %s96, [#allocation21]
    $region29: #{tpu_custom_call.1} parent=1 // pred_fallthru
      _
    // Predicated region
    $region30: #{tpu_custom_call.1} parent=1 // pred_check
      _
    $region31: #{tpu_custom_call.1} parent=1 // pred_check_branch
      %100 = sbr.rel (0) target = $region33
    $region32: #{tpu_custom_call.1} parent=1 // pred_region
      %102 = vsyncadd [#allocation24], 0
      %s104 = sshll.u32 %s7, 4
      %s105 = int_to_ptr.hbm [resolvable:$true] %s104
      %s106 = sshll.u32 [#allocation23], 4
      %s107 = int_to_ptr.vmem [resolvable:$true] %s106
      %109 = dma.hbm_to_vmem [thread:$0]  %s105, 64, %s107, [#allocation24]
    $region33: #{tpu_custom_call.1} parent=1 // pred_fallthru
      _
    // Predicated region
    $region34: #{tpu_custom_call.1} parent=1 // pred_check
      _
    $region35: #{tpu_custom_call.1} parent=1 // pred_check_branch
      %111 = sbr.rel (0) target = $region37
    $region36: #{tpu_custom_call.1} parent=1 // pred_region
      %113 = vsyncadd [#allocation24], 0
      %s115 = sshll.u32 %s8, 4
      %s116 = int_to_ptr.hbm [resolvable:$true] %s115
      %s117 = sshll.u32 [#allocation25], 4
      %s118 = int_to_ptr.vmem [resolvable:$true] %s117
      %120 = dma.hbm_to_vmem [thread:$0]  %s116, 16, %s118, [#allocation24]
    $region37: #{tpu_custom_call.1} parent=1 // pred_fallthru
      _
    // Predicated region
    $region38: #{tpu_custom_call.1} parent=1 // pred_check
      _
    $region39: #{tpu_custom_call.1} parent=1 // pred_check_branch
      %122 = sbr.rel (0) target = $region41
    $region40: #{tpu_custom_call.1} parent=1 // pred_region
      %124 = vsyncadd [#allocation27], 0
      %s125 = sshll.u32 %s9, 4
      %s126 = int_to_ptr.hbm [resolvable:$true] %s125
      %s127 = sshll.u32 [#allocation26], 4
      %s128 = int_to_ptr.vmem [resolvable:$true] %s127
      %133 = dma.hbm_to_vmem [thread:$0]  %s126, 2048, %s128, [#allocation27], 64, 64, 4
    $region41: #{tpu_custom_call.1} parent=1 // pred_fallthru
      _
    // Predicated region
    $region42: #{tpu_custom_call.1} parent=1 // pred_check
      _
    $region43: #{tpu_custom_call.1} parent=1 // pred_check_branch
      %135 = sbr.rel (0) target = $region45
    $region44: #{tpu_custom_call.1} parent=1 // pred_region
      %137 = vsyncadd [#allocation27], 0
      %s139 = sshll.u32 %s10, 4
      %s140 = int_to_ptr.hbm [resolvable:$true] %s139
      %s141 = sshll.u32 [#allocation28], 4
      %s142 = int_to_ptr.vmem [resolvable:$true] %s141
      %144 = dma.hbm_to_vmem [thread:$0]  %s140, 16, %s142, [#allocation27]
    $region45: #{tpu_custom_call.1} parent=1 // pred_fallthru
      _
    // Predicated region
    $region46: #{tpu_custom_call.1} parent=1 // pred_check
      _
    $region47: #{tpu_custom_call.1} parent=1 // pred_check_branch
      %146 = sbr.rel (0) target = $region49
    $region48: #{tpu_custom_call.1} parent=1 // pred_region
      %148 = vsyncadd [#allocation30], 0
      %s149 = sshll.u32 %s11, 4
      %s150 = int_to_ptr.hbm [resolvable:$true] %s149
      %s151 = sshll.u32 [#allocation29], 4
      %s152 = int_to_ptr.vmem [resolvable:$true] %s151
      %157 = dma.hbm_to_vmem [thread:$0]  %s150, 3072, %s152, [#allocation30], 64, 64, 4
    $region49: #{tpu_custom_call.1} parent=1 // pred_fallthru
      _
    // Predicated region
    $region50: #{tpu_custom_call.1} parent=1 // pred_check
      _
    $region51: #{tpu_custom_call.1} parent=1 // pred_check_branch
      %159 = sbr.rel (0) target = $region53
    $region52: #{tpu_custom_call.1} parent=1 // pred_region
      %161 = vsyncadd [#allocation30], 0
      %s162 = sshll.u32 %s12, 4
      %s163 = int_to_ptr.hbm [resolvable:$true] %s162
      %s164 = sshll.u32 [#allocation31], 4
      %s165 = int_to_ptr.vmem [resolvable:$true] %s164
      %170 = dma.hbm_to_vmem [thread:$0]  %s163, 48, %s165, [#allocation30], 16, 16, 1
    $region53: #{tpu_custom_call.1} parent=1 // pred_fallthru
      _
    // Predicated region
    $region54: #{tpu_custom_call.1} parent=1 // pred_check
      _
    $region55: #{tpu_custom_call.1} parent=1 // pred_check_branch
      %172 = sbr.rel (0) target = $region57
    $region56: #{tpu_custom_call.1} parent=1 // pred_region
      _
    $region57: #{tpu_custom_call.1} parent=1 // pred_fallthru
      _
    // Predicated region
    $region58: #{tpu_custom_call.1} parent=1 // pred_check
      _
    $region59: #{tpu_custom_call.1} parent=1 // pred_check_branch
      %174 = sbr.rel (0) target = $region61
    $region60: #{tpu_custom_call.1} parent=1 // pred_region
      _
    $region61: #{tpu_custom_call.1} parent=1 // pred_fallthru
      _
    // Predicated region
    $region62: #{tpu_custom_call.1} parent=1 // pred_check
      _
    $region63: #{tpu_custom_call.1} parent=1 // pred_check_branch
      %176 = sbr.rel (0) target = $region65
    $region64: #{tpu_custom_call.1} parent=1 // pred_region
      _
    $region65: #{tpu_custom_call.1} parent=1 // pred_fallthru
      _
    // Predicated region
    $region66: #{tpu_custom_call.1} parent=1 // pred_check
      _
    $region67: #{tpu_custom_call.1} parent=1 // pred_check_branch
      %178 = sbr.rel (0) target = $region69
    $region68: #{tpu_custom_call.1} parent=1 // pred_region
      _
    $region69: #{tpu_custom_call.1} parent=1 // pred_fallthru
      _
    // Predicated region
    $region70: #{tpu_custom_call.1} parent=1 // pred_check
      _
    $region71: #{tpu_custom_call.1} parent=1 // pred_check_branch
      %180 = sbr.rel (0) target = $region73
    $region72: #{tpu_custom_call.1} parent=1 // pred_region
      %182 = vsyncadd [#allocation33], 0
      %s183 = sshll.u32 %s17, 4
      %s184 = int_to_ptr.hbm [resolvable:$true] %s183
      %s185 = sshll.u32 [#allocation32], 4
      %s186 = int_to_ptr.vmem [resolvable:$true] %s185
      %191 = dma.hbm_to_vmem [thread:$0]  %s184, 512, %s186, [#allocation33], 64, 64, 4
    $region73: #{tpu_custom_call.1} parent=1 // pred_fallthru
      _
    // Predicated region
    $region74: #{tpu_custom_call.1} parent=1 // pred_check
      _
    $region75: #{tpu_custom_call.1} parent=1 // pred_check_branch
      %193 = sbr.rel (0) target = $region77
    $region76: #{tpu_custom_call.1} parent=1 // pred_region
      _
    $region77: #{tpu_custom_call.1} parent=1 // pred_fallthru
      _
    // Predicated region
    $region78: #{tpu_custom_call.1} parent=1 // pred_check
      _
    $region79: #{tpu_custom_call.1} parent=1 // pred_check_branch
      %195 = sbr.rel (0) target = $region81
    $region80: #{tpu_custom_call.1} parent=1 // pred_region
      %197 = dma.done [#allocation15], 16
    $region81: #{tpu_custom_call.1} parent=1 // pred_fallthru
      _
    // Predicated region
    $region82: #{tpu_custom_call.1} parent=1 // pred_check
      _
    $region83: #{tpu_custom_call.1} parent=1 // pred_check_branch
      %199 = sbr.rel (0) target = $region85
    $region84: #{tpu_custom_call.1} parent=1 // pred_region
      %201 = dma.done [#allocation17], 16
    $region85: #{tpu_custom_call.1} parent=1 // pred_fallthru
      _
    // Predicated region
    $region86: #{tpu_custom_call.1} parent=1 // pred_check
      _
    $region87: #{tpu_custom_call.1} parent=1 // pred_check_branch
      %203 = sbr.rel (0) target = $region89
    $region88: #{tpu_custom_call.1} parent=1 // pred_region
      %205 = dma.done [#allocation17], 16
    $region89: #{tpu_custom_call.1} parent=1 // pred_fallthru
      _
    // Predicated region
    $region90: #{tpu_custom_call.1} parent=1 // pred_check
      _
    $region91: #{tpu_custom_call.1} parent=1 // pred_check_branch
      %207 = sbr.rel (0) target = $region93
    $region92: #{tpu_custom_call.1} parent=1 // pred_region
      %209 = dma.done [#allocation13], 128
    $region93: #{tpu_custom_call.1} parent=1 // pred_fallthru
      _
    // Predicated region
    $region94: #{tpu_custom_call.1} parent=1 // pred_check
      _
    $region95: #{tpu_custom_call.1} parent=1 // pred_check_branch
      %211 = sbr.rel (0) target = $region97
    $region96: #{tpu_custom_call.1} parent=1 // pred_region
      %213 = dma.done [#allocation21], 128
    $region97: #{tpu_custom_call.1} parent=1 // pred_fallthru
      _
    // Predicated region
    $region98: #{tpu_custom_call.1} parent=1 // pred_check
      _
    $region99: #{tpu_custom_call.1} parent=1 // pred_check_branch
      %215 = sbr.rel (0) target = $region101
    $region100: #{tpu_custom_call.1} parent=1 // pred_region
      %217 = dma.done [#allocation21], 16
    $region101: #{tpu_custom_call.1} parent=1 // pred_fallthru
      _
    // Predicated region
    $region102: #{tpu_custom_call.1} parent=1 // pred_check
      _
    $region103: #{tpu_custom_call.1} parent=1 // pred_check_branch
      %219 = sbr.rel (0) target = $region105
    $region104: #{tpu_custom_call.1} parent=1 // pred_region
      %221 = dma.done [#allocation24], 64
    $region105: #{tpu_custom_call.1} parent=1 // pred_fallthru
      _
    // Predicated region
    $region106: #{tpu_custom_call.1} parent=1 // pred_check
      _
    $region107: #{tpu_custom_call.1} parent=1 // pred_check_branch
      %223 = sbr.rel (0) target = $region109
    $region108: #{tpu_custom_call.1} parent=1 // pred_region
      %225 = dma.done [#allocation24], 16
    $region109: #{tpu_custom_call.1} parent=1 // pred_fallthru
      _
    // Predicated region
    $region110: #{tpu_custom_call.1} parent=1 // pred_check
      _
    $region111: #{tpu_custom_call.1} parent=1 // pred_check_branch
      %227 = sbr.rel (0) target = $region113
    $region112: #{tpu_custom_call.1} parent=1 // pred_region
      %229 = dma.done [#allocation27], 2048
    $region113: #{tpu_custom_call.1} parent=1 // pred_fallthru
      _
    // Predicated region
    $region114: #{tpu_custom_call.1} parent=1 // pred_check
      _
    $region115: #{tpu_custom_call.1} parent=1 // pred_check_branch
      %231 = sbr.rel (0) target = $region117
    $region116: #{tpu_custom_call.1} parent=1 // pred_region
      %233 = dma.done [#allocation27], 16
    $region117: #{tpu_custom_call.1} parent=1 // pred_fallthru
      _
    // Predicated region
    $region118: #{tpu_custom_call.1} parent=1 // pred_check
      _
    $region119: #{tpu_custom_call.1} parent=1 // pred_check_branch
      %235 = sbr.rel (0) target = $region121
    $region120: #{tpu_custom_call.1} parent=1 // pred_region
      %237 = dma.done [#allocation30], 3072
    $region121: #{tpu_custom_call.1} parent=1 // pred_fallthru
      _
    // Predicated region
    $region122: #{tpu_custom_call.1} parent=1 // pred_check
      _
    $region123: #{tpu_custom_call.1} parent=1 // pred_check_branch
      %239 = sbr.rel (0) target = $region125
    $region124: #{tpu_custom_call.1} parent=1 // pred_region
      %241 = dma.done [#allocation30], 48
    $region125: #{tpu_custom_call.1} parent=1 // pred_fallthru
      _
    // Predicated region
    $region126: #{tpu_custom_call.1} parent=1 // pred_check
      _
    $region127: #{tpu_custom_call.1} parent=1 // pred_check_branch
      %243 = sbr.rel (0) target = $region129
    $region128: #{tpu_custom_call.1} parent=1 // pred_region
      %245 = dma.done [#allocation33], 512
    $region129: #{tpu_custom_call.1} parent=1 // pred_fallthru
      _
    %246 = sfence
    %v248 = vld [vmem:[#allocation19] sm:$0xf]
    %v249 = vld [vmem:[#allocation19 + $0x4] sm:$0xf]
    %v250 = vld [vmem:[#allocation20] sm:$0xf]
    %v251 = vld [vmem:[#allocation20 + $0x4] sm:$0xf]
    %v252 = vld [vmem:[#allocation22] sm:$0x1]
    %v254 = vperm.slane %v252, 0
    %v258 = vunpack.c.l.b16 %v248
    %v259 = vunpack.c.l.b16 %v249
    %v260 = vpack.c.b16 %v259, %v258
    %v263 = vunpack.c.l.b16 %v250
    %v264 = vunpack.c.l.b16 %v251
    %v265 = vpack.c.b16 %v264, %v263
    %vm267 = vcmask 130048
    %v269 = vsel %vm267, %v260, 0
    %271 = vmatpush.bf16.msra.mxu0 0
    %272 = vmatpush.bf16.msra.mxu0 0
    %273 = vmatpush.bf16.msra.mxu0 0
    %274 = vmatpush.bf16.msra.mxu0 0
    %275 = vmatpush.bf16.msra.mxu0 0
    %276 = vmatpush.bf16.msra.mxu0 0
    %277 = vmatpush.bf16.msra.mxu0 0
    %278 = vmatpush.bf16.msra.mxu0 %v265
    %279 = vmatmul.bf16.gmra.mxu0 %v269
    %v280 = vpop.f32.mrf.mxu0
    %v281 = vadd.f32 %v254, %v280
    %v282 = vpop.f32.mrf.mxu0
    %v283 = vadd.f32 %v254, %v282
    %284 = vdwg.mxu0
    %vm285 = vcmp.gt.f32.partialorder %v281, 0.0
    %vm286 = vcmp.gt.f32.partialorder %v283, 0.0
    %v287 = vmul.f32 %v281, 0.01
    %v288 = vmul.f32 %v283, 0.01
    %v289 = vsel %vm285, %v281, %v287
    %v290 = vsel %vm286, %v283, %v288
    %291 = vst [vmem:[#allocation2] sm:$0xff] %v289
    %292 = vst [vmem:[#allocation2 + $0x8] sm:$0xff] %v290
    %v293 = vld [vmem:[%s4] sm:$0xf]
    %v294 = vld [vmem:[%s4 + $0x4] sm:$0xf]
    %v295 = vld [vmem:[%s4 + $0x8] sm:$0xf]
    %v296 = vld [vmem:[%s4 + $0xc] sm:$0xf]
    %v297 = vld [vmem:[#allocation23] sm:$0xf]
    %v298 = vld [vmem:[#allocation25] sm:$0x1]
    %v300 = vperm.slane %v298, 0
    %v306 = vunpack.c.l.b16 %v293
    %v307 = vunpack.c.l.b16 %v294
    %v308 = vunpack.c.l.b16 %v295
    %v309 = vunpack.c.l.b16 %v296
    %v310 = vpack.c.b16 %v307, %v306
    %v311 = vpack.c.b16 %v309, %v308
    %vm312 = vcmask 64512
    %v314 = vsel %vm312, %v310, 0
    %v317 = vsel %vm312, %v311, 0
    %vm319 = vcmask 1043456
    %v321 = vsel %vm319, %v297, 0
    %323 = vmatpush.bf16.msra.mxu0 0
    %324 = vmatpush.bf16.msra.mxu0 0
    %325 = vmatpush.bf16.msra.mxu0 0
    %326 = vmatpush.bf16.msra.mxu0 0
    %327 = vmatpush.bf16.msra.mxu0 0
    %328 = vmatpush.bf16.msra.mxu0 0
    %329 = vmatpush.bf16.msra.mxu0 0
    %330 = vmatpush.bf16.msra.mxu0 %v321
    %331 = vmatmul.bf16.gmra.mxu0 %v314
    %v332 = vpop.f32.mrf.mxu0
    %v333 = vadd.f32 %v300, %v332
    %v334 = vpop.f32.mrf.mxu0
    %v335 = vadd.f32 %v300, %v334
    %336 = vmatmul.bf16.gmra.mxu0 %v317
    %v337 = vpop.f32.mrf.mxu0
    %v338 = vadd.f32 %v300, %v337
    %v339 = vpop.f32.mrf.mxu0
    %v340 = vadd.f32 %v300, %v339
    %341 = vdwg.mxu0
    %vm342 = vcmp.gt.f32.partialorder %v333, 0.0
    %vm343 = vcmp.gt.f32.partialorder %v335, 0.0
    %vm344 = vcmp.gt.f32.partialorder %v338, 0.0
    %vm345 = vcmp.gt.f32.partialorder %v340, 0.0
    %v346 = vmul.f32 %v333, 0.01
    %v347 = vmul.f32 %v335, 0.01
    %v348 = vmul.f32 %v338, 0.01
    %v349 = vmul.f32 %v340, 0.01
    %v350 = vsel %vm342, %v333, %v346
    %v351 = vsel %vm343, %v335, %v347
    %v352 = vsel %vm344, %v338, %v348
    %v353 = vsel %vm345, %v340, %v349
    loop: start=0, step=1, limit=2
    $region130: #{tpu_custom_call.1} parent=1 // loop_pre_header
      _
    $region131: #{tpu_custom_call.1} parent=1 // loop_header
      %s355 = sphi 0, %s359
      %p356 = scmp.ge.s32.totalorder %s355, 2
    $region132: #{tpu_custom_call.1} parent=1 // loop_header_branch
      %358 = sbr.rel (%p356) target = $region136
    $region133: #{tpu_custom_call.1} parent=1 // loop_body
      %s360 = smul.u32 %s355, 8
      %s361 = scalar_lea.vmem [#allocation2], %s360
      %v362 = vld [vmem:[%s361] sm:$0xff]
      %s363 = scalar_lea.vmem [#allocation3], %s360
      %364 = vst [vmem:[%s363] sm:$0x1] %v362
      %s365 = sadd.s32 %s360, 1
      %s366 = scalar_lea.vmem [#allocation3], %s365
      %367 = vst [vmem:[%s366 - $0x1] sm:$0x2] %v362
      %s368 = sadd.s32 %s360, 2
      %s369 = scalar_lea.vmem [#allocation3], %s368
      %370 = vst [vmem:[%s369 - $0x2] sm:$0x4] %v362
      %s371 = sadd.s32 %s360, 3
      %s372 = scalar_lea.vmem [#allocation3], %s371
      %373 = vst [vmem:[%s372 - $0x3] sm:$0x8] %v362
      %s374 = sadd.s32 %s360, 4
      %s375 = scalar_lea.vmem [#allocation3], %s374
      %376 = vst [vmem:[%s375 - $0x4] sm:$0x10] %v362
      %s377 = sadd.s32 %s360, 5
      %s378 = scalar_lea.vmem [#allocation3], %s377
      %379 = vst [vmem:[%s378 - $0x5] sm:$0x20] %v362
      %s380 = sadd.s32 %s360, 6
      %s381 = scalar_lea.vmem [#allocation3], %s380
      %382 = vst [vmem:[%s381 - $0x6] sm:$0x40] %v362
      %s383 = sadd.s32 %s360, 7
      %s384 = scalar_lea.vmem [#allocation3], %s383
      %385 = vst [vmem:[%s384 - $0x7] sm:$0x80] %v362
    $region134: #{tpu_custom_call.1} parent=1 // loop_footer
      %s359 = sadd.s32 1, %s355
    $region135: #{tpu_custom_call.1} parent=1 // loop_footer_branch
      %354 = sbr.rel target = $region131
    $region136: #{tpu_custom_call.1} parent=1 // loop_exit
      _
    loop: start=0, step=1, limit=4
    $region137: #{tpu_custom_call.1} parent=1 // loop_pre_header
      _
    $region138: #{tpu_custom_call.1} parent=1 // loop_header
      %s387 = sphi 0, %s391
      %p388 = scmp.ge.s32.totalorder %s387, 4
    $region139: #{tpu_custom_call.1} parent=1 // loop_header_branch
      %390 = sbr.rel (%p388) target = $region143
    $region140: #{tpu_custom_call.1} parent=1 // loop_body
      %s392 = smul.u32 %s387, 8
      %s393 = sld [smem:[#allocation12 + %s392]]
      %s394 = scalar_lea.vmem [#allocation3], %s393
      %v395 = vld [vmem:[%s394] sm:$0x1]
      %396 = vst [vmem:[#allocation11] sm:$0x1] %v395
      %s397 = sadd.s32 %s392, 1
      %s398 = sld [smem:[#allocation12 + %s397]]
      %s399 = scalar_lea.vmem [#allocation3], %s398
      %v400 = vld [vmem:[%s399] sm:$0x1]
      %401 = vst [vmem:[#allocation11 + $0x1] sm:$0x1] %v400
      %s402 = sadd.s32 %s392, 2
      %s403 = sld [smem:[#allocation12 + %s402]]
      %s404 = scalar_lea.vmem [#allocation3], %s403
      %v405 = vld [vmem:[%s404] sm:$0x1]
      %406 = vst [vmem:[#allocation11 + $0x2] sm:$0x1] %v405
      %s407 = sadd.s32 %s392, 3
      %s408 = sld [smem:[#allocation12 + %s407]]
      %s409 = scalar_lea.vmem [#allocation3], %s408
      %v410 = vld [vmem:[%s409] sm:$0x1]
      %411 = vst [vmem:[#allocation11 + $0x3] sm:$0x1] %v410
      %s412 = sadd.s32 %s392, 4
      %s413 = sld [smem:[#allocation12 + %s412]]
      %s414 = scalar_lea.vmem [#allocation3], %s413
      %v415 = vld [vmem:[%s414] sm:$0x1]
      %416 = vst [vmem:[#allocation11 + $0x4] sm:$0x1] %v415
      %s417 = sadd.s32 %s392, 5
      %s418 = sld [smem:[#allocation12 + %s417]]
      %s419 = scalar_lea.vmem [#allocation3], %s418
      %v420 = vld [vmem:[%s419] sm:$0x1]
      %421 = vst [vmem:[#allocation11 + $0x5] sm:$0x1] %v420
      %s422 = sadd.s32 %s392, 6
      %s423 = sld [smem:[#allocation12 + %s422]]
      %s424 = scalar_lea.vmem [#allocation3], %s423
      %v425 = vld [vmem:[%s424] sm:$0x1]
      %426 = vst [vmem:[#allocation11 + $0x6] sm:$0x1] %v425
      %s427 = sadd.s32 %s392, 7
      %s428 = sld [smem:[#allocation12 + %s427]]
      %s429 = scalar_lea.vmem [#allocation3], %s428
      %v430 = vld [vmem:[%s429] sm:$0x1]
      %431 = vst [vmem:[#allocation11 + $0x7] sm:$0x1] %v430
      %v432 = vld [vmem:[#allocation11] sm:$0xff]
      %s433 = scalar_lea.vmem [#allocation7], %s392
      %434 = vst [vmem:[%s433] sm:$0xff] %v432
    $region141: #{tpu_custom_call.1} parent=1 // loop_footer
      %s391 = sadd.s32 1, %s387
    $region142: #{tpu_custom_call.1} parent=1 // loop_footer_branch
      %386 = sbr.rel target = $region138
    $region143: #{tpu_custom_call.1} parent=1 // loop_exit
      _
    %v435 = vld [vmem:[#allocation7] sm:$0xff]
    %v436 = vld [vmem:[#allocation7 + $0x8] sm:$0xff]
    %v437 = vld [vmem:[#allocation7 + $0x10] sm:$0xff]
    %v438 = vld [vmem:[#allocation7 + $0x18] sm:$0xff]
    %v439 = vld [vmem:[#allocation26] sm:$0xf]
    %v440 = vld [vmem:[#allocation26 + $0x4] sm:$0xf]
    %v441 = vld [vmem:[#allocation26 + $0x8] sm:$0xf]
    %v442 = vld [vmem:[#allocation26 + $0xc] sm:$0xf]
    %v443 = vld [vmem:[#allocation26 + $0x10] sm:$0xf]
    %v444 = vld [vmem:[#allocation26 + $0x14] sm:$0xf]
    %v445 = vld [vmem:[#allocation26 + $0x18] sm:$0xf]
    %v446 = vld [vmem:[#allocation26 + $0x1c] sm:$0xf]
    %v447 = vld [vmem:[#allocation26 + $0x20] sm:$0xf]
    %v448 = vld [vmem:[#allocation26 + $0x24] sm:$0xf]
    %v449 = vld [vmem:[#allocation26 + $0x28] sm:$0xf]
    %v450 = vld [vmem:[#allocation26 + $0x2c] sm:$0xf]
    %v451 = vld [vmem:[#allocation26 + $0x30] sm:$0xf]
    %v452 = vld [vmem:[#allocation26 + $0x34] sm:$0xf]
    %v453 = vld [vmem:[#allocation26 + $0x38] sm:$0xf]
    %v454 = vld [vmem:[#allocation26 + $0x3c] sm:$0xf]
    %v455 = vld [vmem:[#allocation26 + $0x40] sm:$0xf]
    %v456 = vld [vmem:[#allocation26 + $0x44] sm:$0xf]
    %v457 = vld [vmem:[#allocation26 + $0x48] sm:$0xf]
    %v458 = vld [vmem:[#allocation26 + $0x4c] sm:$0xf]
    %v459 = vld [vmem:[#allocation26 + $0x50] sm:$0xf]
    %v460 = vld [vmem:[#allocation26 + $0x54] sm:$0xf]
    %v461 = vld [vmem:[#allocation26 + $0x58] sm:$0xf]
    %v462 = vld [vmem:[#allocation26 + $0x5c] sm:$0xf]
    %v463 = vld [vmem:[#allocation26 + $0x60] sm:$0xf]
    %v464 = vld [vmem:[#allocation26 + $0x64] sm:$0xf]
    %v465 = vld [vmem:[#allocation26 + $0x68] sm:$0xf]
    %v466 = vld [vmem:[#allocation26 + $0x6c] sm:$0xf]
    %v467 = vld [vmem:[#allocation26 + $0x70] sm:$0xf]
    %v468 = vld [vmem:[#allocation26 + $0x74] sm:$0xf]
    %v469 = vld [vmem:[#allocation26 + $0x78] sm:$0xf]
    %v470 = vld [vmem:[#allocation26 + $0x7c] sm:$0xf]
    %v471 = vpack.c.bf16 %v436, %v435
    %v472 = vpack.c.bf16 %v351, %v350
    %v473 = vpack.c.bf16 %v438, %v437
    %v474 = vpack.c.bf16 %v353, %v352
    %v475 = vld [vmem:[#allocation28] sm:$0x1]
    %v477 = vperm.slane %v475, 0
    %v511 = vunpack.c.l.b16 %v439
    %v512 = vunpack.c.l.b16 %v440
    %v513 = vunpack.c.l.b16 %v441
    %v514 = vunpack.c.l.b16 %v442
    %v515 = vunpack.c.l.b16 %v443
    %v516 = vunpack.c.l.b16 %v444
    %v517 = vunpack.c.l.b16 %v445
    %v518 = vunpack.c.l.b16 %v446
    %v519 = vunpack.c.l.b16 %v447
    %v520 = vunpack.c.l.b16 %v448
    %v521 = vunpack.c.l.b16 %v449
    %v522 = vunpack.c.l.b16 %v450
    %v523 = vunpack.c.l.b16 %v451
    %v524 = vunpack.c.l.b16 %v452
    %v525 = vunpack.c.l.b16 %v453
    %v526 = vunpack.c.l.b16 %v454
    %v527 = vunpack.c.l.b16 %v455
    %v528 = vunpack.c.l.b16 %v456
    %v529 = vunpack.c.l.b16 %v457
    %v530 = vunpack.c.l.b16 %v458
    %v531 = vunpack.c.l.b16 %v459
    %v532 = vunpack.c.l.b16 %v460
    %v533 = vunpack.c.l.b16 %v461
    %v534 = vunpack.c.l.b16 %v462
    %v535 = vunpack.c.l.b16 %v463
    %v536 = vunpack.c.l.b16 %v464
    %v537 = vunpack.c.l.b16 %v465
    %v538 = vunpack.c.l.b16 %v466
    %v539 = vunpack.c.l.b16 %v467
    %v540 = vunpack.c.l.b16 %v468
    %v541 = vunpack.c.l.b16 %v469
    %v542 = vunpack.c.l.b16 %v470
    %v543 = vpack.c.b16 %v512, %v511
    %v544 = vpack.c.b16 %v514, %v513
    %v545 = vpack.c.b16 %v516, %v515
    %v546 = vpack.c.b16 %v518, %v517
    %v547 = vpack.c.b16 %v520, %v519
    %v548 = vpack.c.b16 %v522, %v521
    %v549 = vpack.c.b16 %v524, %v523
    %v550 = vpack.c.b16 %v526, %v525
    %v551 = vpack.c.b16 %v528, %v527
    %v552 = vpack.c.b16 %v530, %v529
    %v553 = vpack.c.b16 %v532, %v531
    %v554 = vpack.c.b16 %v534, %v533
    %v555 = vpack.c.b16 %v536, %v535
    %v556 = vpack.c.b16 %v538, %v537
    %v557 = vpack.c.b16 %v540, %v539
    %v558 = vpack.c.b16 %v542, %v541
    %575 = vmatpush.bf16.msra.mxu0 %v550
    %576 = vmatpush.bf16.msra.mxu0 %v549
    %577 = vmatpush.bf16.msra.mxu0 %v548
    %578 = vmatpush.bf16.msra.mxu0 %v547
    %579 = vmatpush.bf16.msra.mxu0 %v546
    %580 = vmatpush.bf16.msra.mxu0 %v545
    %581 = vmatpush.bf16.msra.mxu0 %v544
    %582 = vmatpush.bf16.msra.mxu0 %v543
    %583 = vmatmul.bf16.gmra.mxu0 %v471
    %v584 = vpop.f32.mrf.mxu0
    %v585 = vadd.f32 %v477, %v584
    %v586 = vpop.f32.mrf.mxu0
    %v587 = vadd.f32 %v477, %v586
    %588 = vmatmul.bf16.gmra.mxu0 %v473
    %v589 = vpop.f32.mrf.mxu0
    %v590 = vadd.f32 %v477, %v589
    %v591 = vpop.f32.mrf.mxu0
    %v592 = vadd.f32 %v477, %v591
    %593 = vdwg.mxu0
    %594 = vmatpush.bf16.msra.mxu0 %v558
    %595 = vmatpush.bf16.msra.mxu0 %v557
    %596 = vmatpush.bf16.msra.mxu0 %v556
    %597 = vmatpush.bf16.msra.mxu0 %v555
    %598 = vmatpush.bf16.msra.mxu0 %v554
    %599 = vmatpush.bf16.msra.mxu0 %v553
    %600 = vmatpush.bf16.msra.mxu0 %v552
    %601 = vmatpush.bf16.msra.mxu0 %v551
    %602 = vmatmul.bf16.gmra.mxu0 %v472
    %v603 = vpop.f32.mrf.mxu0
    %v604 = vadd.f32 %v585, %v603
    %v605 = vpop.f32.mrf.mxu0
    %v606 = vadd.f32 %v587, %v605
    %607 = vmatmul.bf16.gmra.mxu0 %v474
    %v608 = vpop.f32.mrf.mxu0
    %v609 = vadd.f32 %v590, %v608
    %v610 = vpop.f32.mrf.mxu0
    %v611 = vadd.f32 %v592, %v610
    %612 = vdwg.mxu0
    %v613 = vmax.f32 %v604, 0.0
    %v614 = vmax.f32 %v606, 0.0
    %v615 = vmax.f32 %v609, 0.0
    %v616 = vmax.f32 %v611, 0.0
    %617 = vst [vmem:[#allocation5] sm:$0xff] %v613
    %618 = vst [vmem:[#allocation5 + $0x8] sm:$0xff] %v614
    %619 = vst [vmem:[#allocation5 + $0x10] sm:$0xff] %v615
    %620 = vst [vmem:[#allocation5 + $0x18] sm:$0xff] %v616
    %621 = vst [vmem:[#allocation6] sm:$0xff] %v613
    %622 = vst [vmem:[#allocation6 + $0x8] sm:$0xff] %v614
    %623 = vst [vmem:[#allocation6 + $0x10] sm:$0xff] %v615
    %624 = vst [vmem:[#allocation6 + $0x18] sm:$0xff] %v616
    %625 = vst [vmem:[#allocation4] sm:$0x1] 0.0
    %626 = vst [vmem:[#allocation4 + $0x1] sm:$0x1] 0.0
    %627 = vst [vmem:[#allocation4 + $0x2] sm:$0x1] 0.0
    %628 = vst [vmem:[#allocation4 + $0x3] sm:$0x1] 0.0
    %629 = vst [vmem:[#allocation4 + $0x4] sm:$0x1] 0.0
    %630 = vst [vmem:[#allocation4 + $0x5] sm:$0x1] 0.0
    %631 = vst [vmem:[#allocation4 + $0x6] sm:$0x1] 0.0
    %632 = vst [vmem:[#allocation4 + $0x7] sm:$0x1] 0.0
    %633 = vst [vmem:[#allocation4 + $0x8] sm:$0x1] 0.0
    %634 = vst [vmem:[#allocation4 + $0x9] sm:$0x1] 0.0
    %635 = vst [vmem:[#allocation4 + $0xa] sm:$0x1] 0.0
    %636 = vst [vmem:[#allocation4 + $0xb] sm:$0x1] 0.0
    %637 = vst [vmem:[#allocation4 + $0xc] sm:$0x1] 0.0
    %638 = vst [vmem:[#allocation4 + $0xd] sm:$0x1] 0.0
    %639 = vst [vmem:[#allocation4 + $0xe] sm:$0x1] 0.0
    %640 = vst [vmem:[#allocation4 + $0xf] sm:$0x1] 0.0
    loop: start=0, step=1, limit=4
    $region144: #{tpu_custom_call.1} parent=1 // loop_pre_header
      _
    $region145: #{tpu_custom_call.1} parent=1 // loop_header
      %s642 = sphi 0, %s646
      %p643 = scmp.ge.s32.totalorder %s642, 4
    $region146: #{tpu_custom_call.1} parent=1 // loop_header_branch
      %645 = sbr.rel (%p643) target = $region150
    $region147: #{tpu_custom_call.1} parent=1 // loop_body
      %s647 = smul.u32 %s642, 8
      %s648 = scalar_lea.vmem [#allocation6], %s647
      %v649 = vld [vmem:[%s648] sm:$0xff]
      %s650 = sld [smem:[#allocation16 + %s647]]
      %s651 = scalar_lea.vmem [#allocation4], %s650
      %v652 = vld [vmem:[%s651] sm:$0x1]
      %v653 = vadd.f32 %v652, %v649
      %654 = vst [vmem:[%s651] sm:$0x1] %v653
      %s655 = sadd.s32 %s647, 1
      %s656 = sld [smem:[#allocation16 + %s655]]
      %s657 = scalar_lea.vmem [#allocation4], %s656
      %v658 = vld [vmem:[%s657] sm:$0x1]
      %660 = vst [vmem:[#allocation1] sm:$0xff] %v649
      %s661 = scalar_lea.vmem [#allocation1], 1
      %v662 = vld [vmem:[%s661] ss:$9 sm:$0xff]
      %v664 = vadd.f32 %v658, %v662
      %665 = vst [vmem:[%s657] sm:$0x1] %v664
      %s666 = sadd.s32 %s647, 2
      %s667 = sld [smem:[#allocation16 + %s666]]
      %s668 = scalar_lea.vmem [#allocation4], %s667
      %v669 = vld [vmem:[%s668] sm:$0x1]
      %670 = vst [vmem:[#allocation1] sm:$0xff] %v649
      %s671 = scalar_lea.vmem [#allocation1], 2
      %v672 = vld [vmem:[%s671] ss:$9 sm:$0xff]
      %v674 = vadd.f32 %v669, %v672
      %675 = vst [vmem:[%s668] sm:$0x1] %v674
      %s676 = sadd.s32 %s647, 3
      %s677 = sld [smem:[#allocation16 + %s676]]
      %s678 = scalar_lea.vmem [#allocation4], %s677
      %v679 = vld [vmem:[%s678] sm:$0x1]
      %680 = vst [vmem:[#allocation1] sm:$0xff] %v649
      %s681 = scalar_lea.vmem [#allocation1], 3
      %v682 = vld [vmem:[%s681] ss:$9 sm:$0xff]
      %v684 = vadd.f32 %v679, %v682
      %685 = vst [vmem:[%s678] sm:$0x1] %v684
      %s686 = sadd.s32 %s647, 4
      %s687 = sld [smem:[#allocation16 + %s686]]
      %s688 = scalar_lea.vmem [#allocation4], %s687
      %v689 = vld [vmem:[%s688] sm:$0x1]
      %690 = vst [vmem:[#allocation1] sm:$0xff] %v649
      %s691 = scalar_lea.vmem [#allocation1], 4
      %v692 = vld [vmem:[%s691] ss:$9 sm:$0xff]
      %v694 = vadd.f32 %v689, %v692
      %695 = vst [vmem:[%s688] sm:$0x1] %v694
      %s696 = sadd.s32 %s647, 5
      %s697 = sld [smem:[#allocation16 + %s696]]
      %s698 = scalar_lea.vmem [#allocation4], %s697
      %v699 = vld [vmem:[%s698] sm:$0x1]
      %700 = vst [vmem:[#allocation1] sm:$0xff] %v649
      %s701 = scalar_lea.vmem [#allocation1], 5
      %v702 = vld [vmem:[%s701] ss:$9 sm:$0xff]
      %v704 = vadd.f32 %v699, %v702
      %705 = vst [vmem:[%s698] sm:$0x1] %v704
      %s706 = sadd.s32 %s647, 6
      %s707 = sld [smem:[#allocation16 + %s706]]
      %s708 = scalar_lea.vmem [#allocation4], %s707
      %v709 = vld [vmem:[%s708] sm:$0x1]
      %710 = vst [vmem:[#allocation1] sm:$0xff] %v649
      %s711 = scalar_lea.vmem [#allocation1], 6
      %v712 = vld [vmem:[%s711] ss:$9 sm:$0xff]
      %v714 = vadd.f32 %v709, %v712
      %715 = vst [vmem:[%s708] sm:$0x1] %v714
      %s716 = sadd.s32 %s647, 7
      %s717 = sld [smem:[#allocation16 + %s716]]
      %s718 = scalar_lea.vmem [#allocation4], %s717
      %v719 = vld [vmem:[%s718] sm:$0x1]
      %720 = vst [vmem:[#allocation1] sm:$0xff] %v649
      %s721 = scalar_lea.vmem [#allocation1], 7
      %v722 = vld [vmem:[%s721] ss:$9 sm:$0xff]
      %v724 = vadd.f32 %v719, %v722
      %725 = vst [vmem:[%s718] sm:$0x1] %v724
    $region148: #{tpu_custom_call.1} parent=1 // loop_footer
      %s646 = sadd.s32 1, %s642
    $region149: #{tpu_custom_call.1} parent=1 // loop_footer_branch
      %641 = sbr.rel target = $region145
    $region150: #{tpu_custom_call.1} parent=1 // loop_exit
      _
    loop: start=0, step=1, limit=4
    $region151: #{tpu_custom_call.1} parent=1 // loop_pre_header
      _
    $region152: #{tpu_custom_call.1} parent=1 // loop_header
      %s727 = sphi 0, %s731
      %p728 = scmp.ge.s32.totalorder %s727, 4
    $region153: #{tpu_custom_call.1} parent=1 // loop_header_branch
      %730 = sbr.rel (%p728) target = $region157
    $region154: #{tpu_custom_call.1} parent=1 // loop_body
      %s732 = smul.u32 %s727, 8
      %s733 = sld [smem:[#allocation16 + %s732]]
      %s734 = scalar_lea.vmem [#allocation4], %s733
      %v735 = vld [vmem:[%s734] sm:$0x1]
      %736 = vst [vmem:[#allocation11] sm:$0x1] %v735
      %s737 = sadd.s32 %s732, 1
      %s738 = sld [smem:[#allocation16 + %s737]]
      %s739 = scalar_lea.vmem [#allocation4], %s738
      %v740 = vld [vmem:[%s739] sm:$0x1]
      %741 = vst [vmem:[#allocation11 + $0x1] sm:$0x1] %v740
      %s742 = sadd.s32 %s732, 2
      %s743 = sld [smem:[#allocation16 + %s742]]
      %s744 = scalar_lea.vmem [#allocation4], %s743
      %v745 = vld [vmem:[%s744] sm:$0x1]
      %746 = vst [vmem:[#allocation11 + $0x2] sm:$0x1] %v745
      %s747 = sadd.s32 %s732, 3
      %s748 = sld [smem:[#allocation16 + %s747]]
      %s749 = scalar_lea.vmem [#allocation4], %s748
      %v750 = vld [vmem:[%s749] sm:$0x1]
      %751 = vst [vmem:[#allocation11 + $0x3] sm:$0x1] %v750
      %s752 = sadd.s32 %s732, 4
      %s753 = sld [smem:[#allocation16 + %s752]]
      %s754 = scalar_lea.vmem [#allocation4], %s753
      %v755 = vld [vmem:[%s754] sm:$0x1]
      %756 = vst [vmem:[#allocation11 + $0x4] sm:$0x1] %v755
      %s757 = sadd.s32 %s732, 5
      %s758 = sld [smem:[#allocation16 + %s757]]
      %s759 = scalar_lea.vmem [#allocation4], %s758
      %v760 = vld [vmem:[%s759] sm:$0x1]
      %761 = vst [vmem:[#allocation11 + $0x5] sm:$0x1] %v760
      %s762 = sadd.s32 %s732, 6
      %s763 = sld [smem:[#allocation16 + %s762]]
      %s764 = scalar_lea.vmem [#allocation4], %s763
      %v765 = vld [vmem:[%s764] sm:$0x1]
      %766 = vst [vmem:[#allocation11 + $0x6] sm:$0x1] %v765
      %s767 = sadd.s32 %s732, 7
      %s768 = sld [smem:[#allocation16 + %s767]]
      %s769 = scalar_lea.vmem [#allocation4], %s768
      %v770 = vld [vmem:[%s769] sm:$0x1]
      %771 = vst [vmem:[#allocation11 + $0x7] sm:$0x1] %v770
      %v772 = vld [vmem:[#allocation11] sm:$0xff]
      %s773 = scalar_lea.vmem [#allocation7], %s732
      %774 = vst [vmem:[%s773] sm:$0xff] %v772
    $region155: #{tpu_custom_call.1} parent=1 // loop_footer
      %s731 = sadd.s32 1, %s727
    $region156: #{tpu_custom_call.1} parent=1 // loop_footer_branch
      %726 = sbr.rel target = $region152
    $region157: #{tpu_custom_call.1} parent=1 // loop_exit
      _
    %v775 = vld [vmem:[#allocation7] sm:$0xff]
    %v776 = vld [vmem:[#allocation7 + $0x8] sm:$0xff]
    %v777 = vld [vmem:[#allocation7 + $0x10] sm:$0xff]
    %v778 = vld [vmem:[#allocation7 + $0x18] sm:$0xff]
    %v779 = vld [vmem:[#allocation6] sm:$0xff]
    %v780 = vld [vmem:[#allocation6 + $0x8] sm:$0xff]
    %v781 = vld [vmem:[#allocation6 + $0x10] sm:$0xff]
    %v782 = vld [vmem:[#allocation6 + $0x18] sm:$0xff]
    %v783 = vsub.f32 %v775, %v779
    %v784 = vsub.f32 %v776, %v780
    %v785 = vsub.f32 %v777, %v781
    %v786 = vsub.f32 %v778, %v782
    %v787 = vld [vmem:[#allocation5] sm:$0xff]
    %v788 = vld [vmem:[#allocation5 + $0x8] sm:$0xff]
    %v789 = vld [vmem:[#allocation5 + $0x10] sm:$0xff]
    %v790 = vld [vmem:[#allocation5 + $0x18] sm:$0xff]
    %v791 = vld [vmem:[#allocation29] sm:$0xf]
    %v792 = vld [vmem:[#allocation29 + $0x4] sm:$0xf]
    %v793 = vld [vmem:[#allocation29 + $0x8] sm:$0xf]
    %v794 = vld [vmem:[#allocation29 + $0xc] sm:$0xf]
    %v795 = vld [vmem:[#allocation29 + $0x10] sm:$0xf]
    %v796 = vld [vmem:[#allocation29 + $0x14] sm:$0xf]
    %v797 = vld [vmem:[#allocation29 + $0x18] sm:$0xf]
    %v798 = vld [vmem:[#allocation29 + $0x1c] sm:$0xf]
    %v799 = vld [vmem:[#allocation29 + $0x20] sm:$0xf]
    %v800 = vld [vmem:[#allocation29 + $0x24] sm:$0xf]
    %v801 = vld [vmem:[#allocation29 + $0x28] sm:$0xf]
    %v802 = vld [vmem:[#allocation29 + $0x2c] sm:$0xf]
    %v803 = vld [vmem:[#allocation29 + $0x30] sm:$0xf]
    %v804 = vld [vmem:[#allocation29 + $0x34] sm:$0xf]
    %v805 = vld [vmem:[#allocation29 + $0x38] sm:$0xf]
    %v806 = vld [vmem:[#allocation29 + $0x3c] sm:$0xf]
    %v807 = vpack.c.bf16 %v784, %v783
    %v808 = vpack.c.bf16 %v786, %v785
    %v825 = vunpack.c.l.b16 %v791
    %v826 = vunpack.c.l.b16 %v792
    %v827 = vunpack.c.l.b16 %v793
    %v828 = vunpack.c.l.b16 %v794
    %v829 = vunpack.c.l.b16 %v795
    %v830 = vunpack.c.l.b16 %v796
    %v831 = vunpack.c.l.b16 %v797
    %v832 = vunpack.c.l.b16 %v798
    %v833 = vunpack.c.l.b16 %v799
    %v834 = vunpack.c.l.b16 %v800
    %v835 = vunpack.c.l.b16 %v801
    %v836 = vunpack.c.l.b16 %v802
    %v837 = vunpack.c.l.b16 %v803
    %v838 = vunpack.c.l.b16 %v804
    %v839 = vunpack.c.l.b16 %v805
    %v840 = vunpack.c.l.b16 %v806
    %v841 = vpack.c.b16 %v826, %v825
    %v842 = vpack.c.b16 %v828, %v827
    %v843 = vpack.c.b16 %v830, %v829
    %v844 = vpack.c.b16 %v832, %v831
    %v845 = vpack.c.b16 %v834, %v833
    %v846 = vpack.c.b16 %v836, %v835
    %v847 = vpack.c.b16 %v838, %v837
    %v848 = vpack.c.b16 %v840, %v839
    %857 = vmatpush.bf16.msra.mxu0 %v848
    %858 = vmatpush.bf16.msra.mxu0 %v847
    %859 = vmatpush.bf16.msra.mxu0 %v846
    %860 = vmatpush.bf16.msra.mxu0 %v845
    %861 = vmatpush.bf16.msra.mxu0 %v844
    %862 = vmatpush.bf16.msra.mxu0 %v843
    %863 = vmatpush.bf16.msra.mxu0 %v842
    %864 = vmatpush.bf16.msra.mxu0 %v841
    %865 = vmatmul.bf16.gmra.mxu0 %v807
    %v866 = vpop.f32.mrf.mxu0
    %v867 = vadd.f32 0.0, %v866
    %v868 = vpop.f32.mrf.mxu0
    %v869 = vadd.f32 0.0, %v868
    %870 = vmatmul.bf16.gmra.mxu0 %v808
    %v871 = vpop.f32.mrf.mxu0
    %v872 = vadd.f32 0.0, %v871
    %v873 = vpop.f32.mrf.mxu0
    %v874 = vadd.f32 0.0, %v873
    %875 = vdwg.mxu0
    %v876 = vadd.f32 %v787, %v867
    %v877 = vadd.f32 %v788, %v869
    %v878 = vadd.f32 %v789, %v872
    %v879 = vadd.f32 %v790, %v874
    %v880 = vld [vmem:[#allocation31] sm:$0x1]
    %v882 = vperm.slane %v880, 0
    %v884 = vadd.f32 %v876, %v882
    %v885 = vadd.f32 %v877, %v882
    %v886 = vadd.f32 %v878, %v882
    %v887 = vadd.f32 %v879, %v882
    %v888 = vmax.f32 %v884, 0.0
    %v889 = vmax.f32 %v885, 0.0
    %v890 = vmax.f32 %v886, 0.0
    %v891 = vmax.f32 %v887, 0.0
    %892 = vst [vmem:[#allocation6] sm:$0xff] %v888
    %893 = vst [vmem:[#allocation6 + $0x8] sm:$0xff] %v889
    %894 = vst [vmem:[#allocation6 + $0x10] sm:$0xff] %v890
    %895 = vst [vmem:[#allocation6 + $0x18] sm:$0xff] %v891
    %896 = vst [vmem:[#allocation4] sm:$0x1] 0.0
    %897 = vst [vmem:[#allocation4 + $0x1] sm:$0x1] 0.0
    %898 = vst [vmem:[#allocation4 + $0x2] sm:$0x1] 0.0
    %899 = vst [vmem:[#allocation4 + $0x3] sm:$0x1] 0.0
    %900 = vst [vmem:[#allocation4 + $0x4] sm:$0x1] 0.0
    %901 = vst [vmem:[#allocation4 + $0x5] sm:$0x1] 0.0
    %902 = vst [vmem:[#allocation4 + $0x6] sm:$0x1] 0.0
    %903 = vst [vmem:[#allocation4 + $0x7] sm:$0x1] 0.0
    %904 = vst [vmem:[#allocation4 + $0x8] sm:$0x1] 0.0
    %905 = vst [vmem:[#allocation4 + $0x9] sm:$0x1] 0.0
    %906 = vst [vmem:[#allocation4 + $0xa] sm:$0x1] 0.0
    %907 = vst [vmem:[#allocation4 + $0xb] sm:$0x1] 0.0
    %908 = vst [vmem:[#allocation4 + $0xc] sm:$0x1] 0.0
    %909 = vst [vmem:[#allocation4 + $0xd] sm:$0x1] 0.0
    %910 = vst [vmem:[#allocation4 + $0xe] sm:$0x1] 0.0
    %911 = vst [vmem:[#allocation4 + $0xf] sm:$0x1] 0.0
    loop: start=0, step=1, limit=4
    $region158: #{tpu_custom_call.1} parent=1 // loop_pre_header
      _
    $region159: #{tpu_custom_call.1} parent=1 // loop_header
      %s913 = sphi 0, %s917
      %p914 = scmp.ge.s32.totalorder %s913, 4
    $region160: #{tpu_custom_call.1} parent=1 // loop_header_branch
      %916 = sbr.rel (%p914) target = $region164
    $region161: #{tpu_custom_call.1} parent=1 // loop_body
      %s918 = smul.u32 %s913, 8
      %s919 = scalar_lea.vmem [#allocation6], %s918
      %v920 = vld [vmem:[%s919] sm:$0xff]
      %s921 = sld [smem:[#allocation16 + %s918]]
      %s922 = scalar_lea.vmem [#allocation4], %s921
      %v923 = vld [vmem:[%s922] sm:$0x1]
      %v924 = vadd.f32 %v923, %v920
      %925 = vst [vmem:[%s922] sm:$0x1] %v924
      %s926 = sadd.s32 %s918, 1
      %s927 = sld [smem:[#allocation16 + %s926]]
      %s928 = scalar_lea.vmem [#allocation4], %s927
      %v929 = vld [vmem:[%s928] sm:$0x1]
      %931 = vst [vmem:[#allocation1] sm:$0xff] %v920
      %s932 = scalar_lea.vmem [#allocation1], 1
      %v933 = vld [vmem:[%s932] ss:$9 sm:$0xff]
      %v935 = vadd.f32 %v929, %v933
      %936 = vst [vmem:[%s928] sm:$0x1] %v935
      %s937 = sadd.s32 %s918, 2
      %s938 = sld [smem:[#allocation16 + %s937]]
      %s939 = scalar_lea.vmem [#allocation4], %s938
      %v940 = vld [vmem:[%s939] sm:$0x1]
      %941 = vst [vmem:[#allocation1] sm:$0xff] %v920
      %s942 = scalar_lea.vmem [#allocation1], 2
      %v943 = vld [vmem:[%s942] ss:$9 sm:$0xff]
      %v945 = vadd.f32 %v940, %v943
      %946 = vst [vmem:[%s939] sm:$0x1] %v945
      %s947 = sadd.s32 %s918, 3
      %s948 = sld [smem:[#allocation16 + %s947]]
      %s949 = scalar_lea.vmem [#allocation4], %s948
      %v950 = vld [vmem:[%s949] sm:$0x1]
      %951 = vst [vmem:[#allocation1] sm:$0xff] %v920
      %s952 = scalar_lea.vmem [#allocation1], 3
      %v953 = vld [vmem:[%s952] ss:$9 sm:$0xff]
      %v955 = vadd.f32 %v950, %v953
      %956 = vst [vmem:[%s949] sm:$0x1] %v955
      %s957 = sadd.s32 %s918, 4
      %s958 = sld [smem:[#allocation16 + %s957]]
      %s959 = scalar_lea.vmem [#allocation4], %s958
      %v960 = vld [vmem:[%s959] sm:$0x1]
      %961 = vst [vmem:[#allocation1] sm:$0xff] %v920
      %s962 = scalar_lea.vmem [#allocation1], 4
      %v963 = vld [vmem:[%s962] ss:$9 sm:$0xff]
      %v965 = vadd.f32 %v960, %v963
      %966 = vst [vmem:[%s959] sm:$0x1] %v965
      %s967 = sadd.s32 %s918, 5
      %s968 = sld [smem:[#allocation16 + %s967]]
      %s969 = scalar_lea.vmem [#allocation4], %s968
      %v970 = vld [vmem:[%s969] sm:$0x1]
      %971 = vst [vmem:[#allocation1] sm:$0xff] %v920
      %s972 = scalar_lea.vmem [#allocation1], 5
      %v973 = vld [vmem:[%s972] ss:$9 sm:$0xff]
      %v975 = vadd.f32 %v970, %v973
      %976 = vst [vmem:[%s969] sm:$0x1] %v975
      %s977 = sadd.s32 %s918, 6
      %s978 = sld [smem:[#allocation16 + %s977]]
      %s979 = scalar_lea.vmem [#allocation4], %s978
      %v980 = vld [vmem:[%s979] sm:$0x1]
      %981 = vst [vmem:[#allocation1] sm:$0xff] %v920
      %s982 = scalar_lea.vmem [#allocation1], 6
      %v983 = vld [vmem:[%s982] ss:$9 sm:$0xff]
      %v985 = vadd.f32 %v980, %v983
      %986 = vst [vmem:[%s979] sm:$0x1] %v985
      %s987 = sadd.s32 %s918, 7
      %s988 = sld [smem:[#allocation16 + %s987]]
      %s989 = scalar_lea.vmem [#allocation4], %s988
      %v990 = vld [vmem:[%s989] sm:$0x1]
      %991 = vst [vmem:[#allocation1] sm:$0xff] %v920
      %s992 = scalar_lea.vmem [#allocation1], 7
      %v993 = vld [vmem:[%s992] ss:$9 sm:$0xff]
      %v995 = vadd.f32 %v990, %v993
      %996 = vst [vmem:[%s989] sm:$0x1] %v995
    $region162: #{tpu_custom_call.1} parent=1 // loop_footer
      %s917 = sadd.s32 1, %s913
    $region163: #{tpu_custom_call.1} parent=1 // loop_footer_branch
      %912 = sbr.rel target = $region159
    $region164: #{tpu_custom_call.1} parent=1 // loop_exit
      _
    loop: start=0, step=1, limit=4
    $region165: #{tpu_custom_call.1} parent=1 // loop_pre_header
      _
    $region166: #{tpu_custom_call.1} parent=1 // loop_header
      %s998 = sphi 0, %s1002
      %p999 = scmp.ge.s32.totalorder %s998, 4
    $region167: #{tpu_custom_call.1} parent=1 // loop_header_branch
      %1001 = sbr.rel (%p999) target = $region171
    $region168: #{tpu_custom_call.1} parent=1 // loop_body
      %s1003 = smul.u32 %s998, 8
      %s1004 = sld [smem:[#allocation16 + %s1003]]
      %s1005 = scalar_lea.vmem [#allocation4], %s1004
      %v1006 = vld [vmem:[%s1005] sm:$0x1]
      %1007 = vst [vmem:[#allocation11] sm:$0x1] %v1006
      %s1008 = sadd.s32 %s1003, 1
      %s1009 = sld [smem:[#allocation16 + %s1008]]
      %s1010 = scalar_lea.vmem [#allocation4], %s1009
      %v1011 = vld [vmem:[%s1010] sm:$0x1]
      %1012 = vst [vmem:[#allocation11 + $0x1] sm:$0x1] %v1011
      %s1013 = sadd.s32 %s1003, 2
      %s1014 = sld [smem:[#allocation16 + %s1013]]
      %s1015 = scalar_lea.vmem [#allocation4], %s1014
      %v1016 = vld [vmem:[%s1015] sm:$0x1]
      %1017 = vst [vmem:[#allocation11 + $0x2] sm:$0x1] %v1016
      %s1018 = sadd.s32 %s1003, 3
      %s1019 = sld [smem:[#allocation16 + %s1018]]
      %s1020 = scalar_lea.vmem [#allocation4], %s1019
      %v1021 = vld [vmem:[%s1020] sm:$0x1]
      %1022 = vst [vmem:[#allocation11 + $0x3] sm:$0x1] %v1021
      %s1023 = sadd.s32 %s1003, 4
      %s1024 = sld [smem:[#allocation16 + %s1023]]
      %s1025 = scalar_lea.vmem [#allocation4], %s1024
      %v1026 = vld [vmem:[%s1025] sm:$0x1]
      %1027 = vst [vmem:[#allocation11 + $0x4] sm:$0x1] %v1026
      %s1028 = sadd.s32 %s1003, 5
      %s1029 = sld [smem:[#allocation16 + %s1028]]
      %s1030 = scalar_lea.vmem [#allocation4], %s1029
      %v1031 = vld [vmem:[%s1030] sm:$0x1]
      %1032 = vst [vmem:[#allocation11 + $0x5] sm:$0x1] %v1031
      %s1033 = sadd.s32 %s1003, 6
      %s1034 = sld [smem:[#allocation16 + %s1033]]
      %s1035 = scalar_lea.vmem [#allocation4], %s1034
      %v1036 = vld [vmem:[%s1035] sm:$0x1]
      %1037 = vst [vmem:[#allocation11 + $0x6] sm:$0x1] %v1036
      %s1038 = sadd.s32 %s1003, 7
      %s1039 = sld [smem:[#allocation16 + %s1038]]
      %s1040 = scalar_lea.vmem [#allocation4], %s1039
      %v1041 = vld [vmem:[%s1040] sm:$0x1]
      %1042 = vst [vmem:[#allocation11 + $0x7] sm:$0x1] %v1041
      %v1043 = vld [vmem:[#allocation11] sm:$0xff]
      %s1044 = scalar_lea.vmem [#allocation7], %s1003
      %1045 = vst [vmem:[%s1044] sm:$0xff] %v1043
    $region169: #{tpu_custom_call.1} parent=1 // loop_footer
      %s1002 = sadd.s32 1, %s998
    $region170: #{tpu_custom_call.1} parent=1 // loop_footer_branch
      %997 = sbr.rel target = $region166
    $region171: #{tpu_custom_call.1} parent=1 // loop_exit
      _
    %v1046 = vld [vmem:[#allocation7] sm:$0xff]
    %v1047 = vld [vmem:[#allocation7 + $0x8] sm:$0xff]
    %v1048 = vld [vmem:[#allocation7 + $0x10] sm:$0xff]
    %v1049 = vld [vmem:[#allocation7 + $0x18] sm:$0xff]
    %v1050 = vld [vmem:[#allocation6] sm:$0xff]
    %v1051 = vld [vmem:[#allocation6 + $0x8] sm:$0xff]
    %v1052 = vld [vmem:[#allocation6 + $0x10] sm:$0xff]
    %v1053 = vld [vmem:[#allocation6 + $0x18] sm:$0xff]
    %v1054 = vsub.f32 %v1046, %v1050
    %v1055 = vsub.f32 %v1047, %v1051
    %v1056 = vsub.f32 %v1048, %v1052
    %v1057 = vsub.f32 %v1049, %v1053
    %v1058 = vld [vmem:[#allocation5] sm:$0xff]
    %v1059 = vld [vmem:[#allocation5 + $0x8] sm:$0xff]
    %v1060 = vld [vmem:[#allocation5 + $0x10] sm:$0xff]
    %v1061 = vld [vmem:[#allocation5 + $0x18] sm:$0xff]
    %s1062 = scalar_lea.vmem [#allocation29], 64
    %v1063 = vld [vmem:[%s1062] sm:$0xf]
    %v1064 = vld [vmem:[%s1062 + $0x4] sm:$0xf]
    %v1065 = vld [vmem:[%s1062 + $0x8] sm:$0xf]
    %v1066 = vld [vmem:[%s1062 + $0xc] sm:$0xf]
    %v1067 = vld [vmem:[%s1062 + $0x10] sm:$0xf]
    %v1068 = vld [vmem:[%s1062 + $0x14] sm:$0xf]
    %v1069 = vld [vmem:[%s1062 + $0x18] sm:$0xf]
    %v1070 = vld [vmem:[%s1062 + $0x1c] sm:$0xf]
    %v1071 = vld [vmem:[%s1062 + $0x20] sm:$0xf]
    %v1072 = vld [vmem:[%s1062 + $0x24] sm:$0xf]
    %v1073 = vld [vmem:[%s1062 + $0x28] sm:$0xf]
    %v1074 = vld [vmem:[%s1062 + $0x2c] sm:$0xf]
    %v1075 = vld [vmem:[%s1062 + $0x30] sm:$0xf]
    %v1076 = vld [vmem:[%s1062 + $0x34] sm:$0xf]
    %v1077 = vld [vmem:[%s1062 + $0x38] sm:$0xf]
    %v1078 = vld [vmem:[%s1062 + $0x3c] sm:$0xf]
    %v1079 = vpack.c.bf16 %v1055, %v1054
    %v1080 = vpack.c.bf16 %v1057, %v1056
    %v1097 = vunpack.c.l.b16 %v1063
    %v1098 = vunpack.c.l.b16 %v1064
    %v1099 = vunpack.c.l.b16 %v1065
    %v1100 = vunpack.c.l.b16 %v1066
    %v1101 = vunpack.c.l.b16 %v1067
    %v1102 = vunpack.c.l.b16 %v1068
    %v1103 = vunpack.c.l.b16 %v1069
    %v1104 = vunpack.c.l.b16 %v1070
    %v1105 = vunpack.c.l.b16 %v1071
    %v1106 = vunpack.c.l.b16 %v1072
    %v1107 = vunpack.c.l.b16 %v1073
    %v1108 = vunpack.c.l.b16 %v1074
    %v1109 = vunpack.c.l.b16 %v1075
    %v1110 = vunpack.c.l.b16 %v1076
    %v1111 = vunpack.c.l.b16 %v1077
    %v1112 = vunpack.c.l.b16 %v1078
    %v1113 = vpack.c.b16 %v1098, %v1097
    %v1114 = vpack.c.b16 %v1100, %v1099
    %v1115 = vpack.c.b16 %v1102, %v1101
    %v1116 = vpack.c.b16 %v1104, %v1103
    %v1117 = vpack.c.b16 %v1106, %v1105
    %v1118 = vpack.c.b16 %v1108, %v1107
    %v1119 = vpack.c.b16 %v1110, %v1109
    %v1120 = vpack.c.b16 %v1112, %v1111
    %1129 = vmatpush.bf16.msra.mxu0 %v1120
    %1130 = vmatpush.bf16.msra.mxu0 %v1119
    %1131 = vmatpush.bf16.msra.mxu0 %v1118
    %1132 = vmatpush.bf16.msra.mxu0 %v1117
    %1133 = vmatpush.bf16.msra.mxu0 %v1116
    %1134 = vmatpush.bf16.msra.mxu0 %v1115
    %1135 = vmatpush.bf16.msra.mxu0 %v1114
    %1136 = vmatpush.bf16.msra.mxu0 %v1113
    %1137 = vmatmul.bf16.gmra.mxu0 %v1079
    %v1138 = vpop.f32.mrf.mxu0
    %v1139 = vadd.f32 0.0, %v1138
    %v1140 = vpop.f32.mrf.mxu0
    %v1141 = vadd.f32 0.0, %v1140
    %1142 = vmatmul.bf16.gmra.mxu0 %v1080
    %v1143 = vpop.f32.mrf.mxu0
    %v1144 = vadd.f32 0.0, %v1143
    %v1145 = vpop.f32.mrf.mxu0
    %v1146 = vadd.f32 0.0, %v1145
    %1147 = vdwg.mxu0
    %v1148 = vadd.f32 %v1058, %v1139
    %v1149 = vadd.f32 %v1059, %v1141
    %v1150 = vadd.f32 %v1060, %v1144
    %v1151 = vadd.f32 %v1061, %v1146
    %s1152 = scalar_lea.vmem [#allocation31], 1
    %v1153 = vld [vmem:[%s1152] sm:$0x1]
    %v1155 = vperm.slane %v1153, 0
    %v1157 = vadd.f32 %v1148, %v1155
    %v1158 = vadd.f32 %v1149, %v1155
    %v1159 = vadd.f32 %v1150, %v1155
    %v1160 = vadd.f32 %v1151, %v1155
    %v1161 = vmax.f32 %v1157, 0.0
    %v1162 = vmax.f32 %v1158, 0.0
    %v1163 = vmax.f32 %v1159, 0.0
    %v1164 = vmax.f32 %v1160, 0.0
    %1165 = vst [vmem:[#allocation6] sm:$0xff] %v1161
    %1166 = vst [vmem:[#allocation6 + $0x8] sm:$0xff] %v1162
    %1167 = vst [vmem:[#allocation6 + $0x10] sm:$0xff] %v1163
    %1168 = vst [vmem:[#allocation6 + $0x18] sm:$0xff] %v1164
    %1169 = vst [vmem:[#allocation4] sm:$0x1] 0.0
    %1170 = vst [vmem:[#allocation4 + $0x1] sm:$0x1] 0.0
    %1171 = vst [vmem:[#allocation4 + $0x2] sm:$0x1] 0.0
    %1172 = vst [vmem:[#allocation4 + $0x3] sm:$0x1] 0.0
    %1173 = vst [vmem:[#allocation4 + $0x4] sm:$0x1] 0.0
    %1174 = vst [vmem:[#allocation4 + $0x5] sm:$0x1] 0.0
    %1175 = vst [vmem:[#allocation4 + $0x6] sm:$0x1] 0.0
    %1176 = vst [vmem:[#allocation4 + $0x7] sm:$0x1] 0.0
    %1177 = vst [vmem:[#allocation4 + $0x8] sm:$0x1] 0.0
    %1178 = vst [vmem:[#allocation4 + $0x9] sm:$0x1] 0.0
    %1179 = vst [vmem:[#allocation4 + $0xa] sm:$0x1] 0.0
    %1180 = vst [vmem:[#allocation4 + $0xb] sm:$0x1] 0.0
    %1181 = vst [vmem:[#allocation4 + $0xc] sm:$0x1] 0.0
    %1182 = vst [vmem:[#allocation4 + $0xd] sm:$0x1] 0.0
    %1183 = vst [vmem:[#allocation4 + $0xe] sm:$0x1] 0.0
    %1184 = vst [vmem:[#allocation4 + $0xf] sm:$0x1] 0.0
    loop: start=0, step=1, limit=4
    $region172: #{tpu_custom_call.1} parent=1 // loop_pre_header
      _
    $region173: #{tpu_custom_call.1} parent=1 // loop_header
      %s1186 = sphi 0, %s1190
      %p1187 = scmp.ge.s32.totalorder %s1186, 4
    $region174: #{tpu_custom_call.1} parent=1 // loop_header_branch
      %1189 = sbr.rel (%p1187) target = $region178
    $region175: #{tpu_custom_call.1} parent=1 // loop_body
      %s1191 = smul.u32 %s1186, 8
      %s1192 = scalar_lea.vmem [#allocation6], %s1191
      %v1193 = vld [vmem:[%s1192] sm:$0xff]
      %s1194 = sld [smem:[#allocation16 + %s1191]]
      %s1195 = scalar_lea.vmem [#allocation4], %s1194
      %v1196 = vld [vmem:[%s1195] sm:$0x1]
      %v1197 = vadd.f32 %v1196, %v1193
      %1198 = vst [vmem:[%s1195] sm:$0x1] %v1197
      %s1199 = sadd.s32 %s1191, 1
      %s1200 = sld [smem:[#allocation16 + %s1199]]
      %s1201 = scalar_lea.vmem [#allocation4], %s1200
      %v1202 = vld [vmem:[%s1201] sm:$0x1]
      %1204 = vst [vmem:[#allocation1] sm:$0xff] %v1193
      %s1205 = scalar_lea.vmem [#allocation1], 1
      %v1206 = vld [vmem:[%s1205] ss:$9 sm:$0xff]
      %v1208 = vadd.f32 %v1202, %v1206
      %1209 = vst [vmem:[%s1201] sm:$0x1] %v1208
      %s1210 = sadd.s32 %s1191, 2
      %s1211 = sld [smem:[#allocation16 + %s1210]]
      %s1212 = scalar_lea.vmem [#allocation4], %s1211
      %v1213 = vld [vmem:[%s1212] sm:$0x1]
      %1214 = vst [vmem:[#allocation1] sm:$0xff] %v1193
      %s1215 = scalar_lea.vmem [#allocation1], 2
      %v1216 = vld [vmem:[%s1215] ss:$9 sm:$0xff]
      %v1218 = vadd.f32 %v1213, %v1216
      %1219 = vst [vmem:[%s1212] sm:$0x1] %v1218
      %s1220 = sadd.s32 %s1191, 3
      %s1221 = sld [smem:[#allocation16 + %s1220]]
      %s1222 = scalar_lea.vmem [#allocation4], %s1221
      %v1223 = vld [vmem:[%s1222] sm:$0x1]
      %1224 = vst [vmem:[#allocation1] sm:$0xff] %v1193
      %s1225 = scalar_lea.vmem [#allocation1], 3
      %v1226 = vld [vmem:[%s1225] ss:$9 sm:$0xff]
      %v1228 = vadd.f32 %v1223, %v1226
      %1229 = vst [vmem:[%s1222] sm:$0x1] %v1228
      %s1230 = sadd.s32 %s1191, 4
      %s1231 = sld [smem:[#allocation16 + %s1230]]
      %s1232 = scalar_lea.vmem [#allocation4], %s1231
      %v1233 = vld [vmem:[%s1232] sm:$0x1]
      %1234 = vst [vmem:[#allocation1] sm:$0xff] %v1193
      %s1235 = scalar_lea.vmem [#allocation1], 4
      %v1236 = vld [vmem:[%s1235] ss:$9 sm:$0xff]
      %v1238 = vadd.f32 %v1233, %v1236
      %1239 = vst [vmem:[%s1232] sm:$0x1] %v1238
      %s1240 = sadd.s32 %s1191, 5
      %s1241 = sld [smem:[#allocation16 + %s1240]]
      %s1242 = scalar_lea.vmem [#allocation4], %s1241
      %v1243 = vld [vmem:[%s1242] sm:$0x1]
      %1244 = vst [vmem:[#allocation1] sm:$0xff] %v1193
      %s1245 = scalar_lea.vmem [#allocation1], 5
      %v1246 = vld [vmem:[%s1245] ss:$9 sm:$0xff]
      %v1248 = vadd.f32 %v1243, %v1246
      %1249 = vst [vmem:[%s1242] sm:$0x1] %v1248
      %s1250 = sadd.s32 %s1191, 6
      %s1251 = sld [smem:[#allocation16 + %s1250]]
      %s1252 = scalar_lea.vmem [#allocation4], %s1251
      %v1253 = vld [vmem:[%s1252] sm:$0x1]
      %1254 = vst [vmem:[#allocation1] sm:$0xff] %v1193
      %s1255 = scalar_lea.vmem [#allocation1], 6
      %v1256 = vld [vmem:[%s1255] ss:$9 sm:$0xff]
      %v1258 = vadd.f32 %v1253, %v1256
      %1259 = vst [vmem:[%s1252] sm:$0x1] %v1258
      %s1260 = sadd.s32 %s1191, 7
      %s1261 = sld [smem:[#allocation16 + %s1260]]
      %s1262 = scalar_lea.vmem [#allocation4], %s1261
      %v1263 = vld [vmem:[%s1262] sm:$0x1]
      %1264 = vst [vmem:[#allocation1] sm:$0xff] %v1193
      %s1265 = scalar_lea.vmem [#allocation1], 7
      %v1266 = vld [vmem:[%s1265] ss:$9 sm:$0xff]
      %v1268 = vadd.f32 %v1263, %v1266
      %1269 = vst [vmem:[%s1262] sm:$0x1] %v1268
    $region176: #{tpu_custom_call.1} parent=1 // loop_footer
      %s1190 = sadd.s32 1, %s1186
    $region177: #{tpu_custom_call.1} parent=1 // loop_footer_branch
      %1185 = sbr.rel target = $region173
    $region178: #{tpu_custom_call.1} parent=1 // loop_exit
      _
    loop: start=0, step=1, limit=4
    $region179: #{tpu_custom_call.1} parent=1 // loop_pre_header
      _
    $region180: #{tpu_custom_call.1} parent=1 // loop_header
      %s1271 = sphi 0, %s1275
      %p1272 = scmp.ge.s32.totalorder %s1271, 4
    $region181: #{tpu_custom_call.1} parent=1 // loop_header_branch
      %1274 = sbr.rel (%p1272) target = $region185
    $region182: #{tpu_custom_call.1} parent=1 // loop_body
      %s1276 = smul.u32 %s1271, 8
      %s1277 = sld [smem:[#allocation16 + %s1276]]
      %s1278 = scalar_lea.vmem [#allocation4], %s1277
      %v1279 = vld [vmem:[%s1278] sm:$0x1]
      %1280 = vst [vmem:[#allocation11] sm:$0x1] %v1279
      %s1281 = sadd.s32 %s1276, 1
      %s1282 = sld [smem:[#allocation16 + %s1281]]
      %s1283 = scalar_lea.vmem [#allocation4], %s1282
      %v1284 = vld [vmem:[%s1283] sm:$0x1]
      %1285 = vst [vmem:[#allocation11 + $0x1] sm:$0x1] %v1284
      %s1286 = sadd.s32 %s1276, 2
      %s1287 = sld [smem:[#allocation16 + %s1286]]
      %s1288 = scalar_lea.vmem [#allocation4], %s1287
      %v1289 = vld [vmem:[%s1288] sm:$0x1]
      %1290 = vst [vmem:[#allocation11 + $0x2] sm:$0x1] %v1289
      %s1291 = sadd.s32 %s1276, 3
      %s1292 = sld [smem:[#allocation16 + %s1291]]
      %s1293 = scalar_lea.vmem [#allocation4], %s1292
      %v1294 = vld [vmem:[%s1293] sm:$0x1]
      %1295 = vst [vmem:[#allocation11 + $0x3] sm:$0x1] %v1294
      %s1296 = sadd.s32 %s1276, 4
      %s1297 = sld [smem:[#allocation16 + %s1296]]
      %s1298 = scalar_lea.vmem [#allocation4], %s1297
      %v1299 = vld [vmem:[%s1298] sm:$0x1]
      %1300 = vst [vmem:[#allocation11 + $0x4] sm:$0x1] %v1299
      %s1301 = sadd.s32 %s1276, 5
      %s1302 = sld [smem:[#allocation16 + %s1301]]
      %s1303 = scalar_lea.vmem [#allocation4], %s1302
      %v1304 = vld [vmem:[%s1303] sm:$0x1]
      %1305 = vst [vmem:[#allocation11 + $0x5] sm:$0x1] %v1304
      %s1306 = sadd.s32 %s1276, 6
      %s1307 = sld [smem:[#allocation16 + %s1306]]
      %s1308 = scalar_lea.vmem [#allocation4], %s1307
      %v1309 = vld [vmem:[%s1308] sm:$0x1]
      %1310 = vst [vmem:[#allocation11 + $0x6] sm:$0x1] %v1309
      %s1311 = sadd.s32 %s1276, 7
      %s1312 = sld [smem:[#allocation16 + %s1311]]
      %s1313 = scalar_lea.vmem [#allocation4], %s1312
      %v1314 = vld [vmem:[%s1313] sm:$0x1]
      %1315 = vst [vmem:[#allocation11 + $0x7] sm:$0x1] %v1314
      %v1316 = vld [vmem:[#allocation11] sm:$0xff]
      %s1317 = scalar_lea.vmem [#allocation7], %s1276
      %1318 = vst [vmem:[%s1317] sm:$0xff] %v1316
    $region183: #{tpu_custom_call.1} parent=1 // loop_footer
      %s1275 = sadd.s32 1, %s1271
    $region184: #{tpu_custom_call.1} parent=1 // loop_footer_branch
      %1270 = sbr.rel target = $region180
    $region185: #{tpu_custom_call.1} parent=1 // loop_exit
      _
    %v1319 = vld [vmem:[#allocation7] sm:$0xff]
    %v1320 = vld [vmem:[#allocation7 + $0x8] sm:$0xff]
    %v1321 = vld [vmem:[#allocation7 + $0x10] sm:$0xff]
    %v1322 = vld [vmem:[#allocation7 + $0x18] sm:$0xff]
    %v1323 = vld [vmem:[#allocation6] sm:$0xff]
    %v1324 = vld [vmem:[#allocation6 + $0x8] sm:$0xff]
    %v1325 = vld [vmem:[#allocation6 + $0x10] sm:$0xff]
    %v1326 = vld [vmem:[#allocation6 + $0x18] sm:$0xff]
    %v1327 = vsub.f32 %v1319, %v1323
    %v1328 = vsub.f32 %v1320, %v1324
    %v1329 = vsub.f32 %v1321, %v1325
    %v1330 = vsub.f32 %v1322, %v1326
    %v1331 = vld [vmem:[#allocation5] sm:$0xff]
    %v1332 = vld [vmem:[#allocation5 + $0x8] sm:$0xff]
    %v1333 = vld [vmem:[#allocation5 + $0x10] sm:$0xff]
    %v1334 = vld [vmem:[#allocation5 + $0x18] sm:$0xff]
    %s1335 = scalar_lea.vmem [#allocation29], 128
    %v1336 = vld [vmem:[%s1335] sm:$0xf]
    %v1337 = vld [vmem:[%s1335 + $0x4] sm:$0xf]
    %v1338 = vld [vmem:[%s1335 + $0x8] sm:$0xf]
    %v1339 = vld [vmem:[%s1335 + $0xc] sm:$0xf]
    %v1340 = vld [vmem:[%s1335 + $0x10] sm:$0xf]
    %v1341 = vld [vmem:[%s1335 + $0x14] sm:$0xf]
    %v1342 = vld [vmem:[%s1335 + $0x18] sm:$0xf]
    %v1343 = vld [vmem:[%s1335 + $0x1c] sm:$0xf]
    %v1344 = vld [vmem:[%s1335 + $0x20] sm:$0xf]
    %v1345 = vld [vmem:[%s1335 + $0x24] sm:$0xf]
    %v1346 = vld [vmem:[%s1335 + $0x28] sm:$0xf]
    %v1347 = vld [vmem:[%s1335 + $0x2c] sm:$0xf]
    %v1348 = vld [vmem:[%s1335 + $0x30] sm:$0xf]
    %v1349 = vld [vmem:[%s1335 + $0x34] sm:$0xf]
    %v1350 = vld [vmem:[%s1335 + $0x38] sm:$0xf]
    %v1351 = vld [vmem:[%s1335 + $0x3c] sm:$0xf]
    %v1352 = vpack.c.bf16 %v1328, %v1327
    %v1353 = vpack.c.bf16 %v1330, %v1329
    %v1370 = vunpack.c.l.b16 %v1336
    %v1371 = vunpack.c.l.b16 %v1337
    %v1372 = vunpack.c.l.b16 %v1338
    %v1373 = vunpack.c.l.b16 %v1339
    %v1374 = vunpack.c.l.b16 %v1340
    %v1375 = vunpack.c.l.b16 %v1341
    %v1376 = vunpack.c.l.b16 %v1342
    %v1377 = vunpack.c.l.b16 %v1343
    %v1378 = vunpack.c.l.b16 %v1344
    %v1379 = vunpack.c.l.b16 %v1345
    %v1380 = vunpack.c.l.b16 %v1346
    %v1381 = vunpack.c.l.b16 %v1347
    %v1382 = vunpack.c.l.b16 %v1348
    %v1383 = vunpack.c.l.b16 %v1349
    %v1384 = vunpack.c.l.b16 %v1350
    %v1385 = vunpack.c.l.b16 %v1351
    %v1386 = vpack.c.b16 %v1371, %v1370
    %v1387 = vpack.c.b16 %v1373, %v1372
    %v1388 = vpack.c.b16 %v1375, %v1374
    %v1389 = vpack.c.b16 %v1377, %v1376
    %v1390 = vpack.c.b16 %v1379, %v1378
    %v1391 = vpack.c.b16 %v1381, %v1380
    %v1392 = vpack.c.b16 %v1383, %v1382
    %v1393 = vpack.c.b16 %v1385, %v1384
    %1402 = vmatpush.bf16.msra.mxu0 %v1393
    %1403 = vmatpush.bf16.msra.mxu0 %v1392
    %1404 = vmatpush.bf16.msra.mxu0 %v1391
    %1405 = vmatpush.bf16.msra.mxu0 %v1390
    %1406 = vmatpush.bf16.msra.mxu0 %v1389
    %1407 = vmatpush.bf16.msra.mxu0 %v1388
    %1408 = vmatpush.bf16.msra.mxu0 %v1387
    %1409 = vmatpush.bf16.msra.mxu0 %v1386
    %1410 = vmatmul.bf16.gmra.mxu0 %v1352
    %v1411 = vpop.f32.mrf.mxu0
    %v1412 = vadd.f32 0.0, %v1411
    %v1413 = vpop.f32.mrf.mxu0
    %v1414 = vadd.f32 0.0, %v1413
    %1415 = vmatmul.bf16.gmra.mxu0 %v1353
    %v1416 = vpop.f32.mrf.mxu0
    %v1417 = vadd.f32 0.0, %v1416
    %v1418 = vpop.f32.mrf.mxu0
    %v1419 = vadd.f32 0.0, %v1418
    %1420 = vdwg.mxu0
    %v1421 = vadd.f32 %v1331, %v1412
    %v1422 = vadd.f32 %v1332, %v1414
    %v1423 = vadd.f32 %v1333, %v1417
    %v1424 = vadd.f32 %v1334, %v1419
    %s1425 = scalar_lea.vmem [#allocation31], 2
    %v1426 = vld [vmem:[%s1425] sm:$0x1]
    %v1428 = vperm.slane %v1426, 0
    %v1430 = vadd.f32 %v1421, %v1428
    %v1431 = vadd.f32 %v1422, %v1428
    %v1432 = vadd.f32 %v1423, %v1428
    %v1433 = vadd.f32 %v1424, %v1428
    %v1434 = vmax.f32 %v1430, 0.0
    %v1435 = vmax.f32 %v1431, 0.0
    %v1436 = vmax.f32 %v1432, 0.0
    %v1437 = vmax.f32 %v1433, 0.0
    %1438 = vst [vmem:[#allocation6] sm:$0xff] %v1434
    %1439 = vst [vmem:[#allocation6 + $0x8] sm:$0xff] %v1435
    %1440 = vst [vmem:[#allocation6 + $0x10] sm:$0xff] %v1436
    %1441 = vst [vmem:[#allocation6 + $0x18] sm:$0xff] %v1437
    %1442 = vst [vmem:[#allocation4] sm:$0x1] 0.0
    %1443 = vst [vmem:[#allocation4 + $0x1] sm:$0x1] 0.0
    %1444 = vst [vmem:[#allocation4 + $0x2] sm:$0x1] 0.0
    %1445 = vst [vmem:[#allocation4 + $0x3] sm:$0x1] 0.0
    %1446 = vst [vmem:[#allocation4 + $0x4] sm:$0x1] 0.0
    %1447 = vst [vmem:[#allocation4 + $0x5] sm:$0x1] 0.0
    %1448 = vst [vmem:[#allocation4 + $0x6] sm:$0x1] 0.0
    %1449 = vst [vmem:[#allocation4 + $0x7] sm:$0x1] 0.0
    %1450 = vst [vmem:[#allocation4 + $0x8] sm:$0x1] 0.0
    %1451 = vst [vmem:[#allocation4 + $0x9] sm:$0x1] 0.0
    %1452 = vst [vmem:[#allocation4 + $0xa] sm:$0x1] 0.0
    %1453 = vst [vmem:[#allocation4 + $0xb] sm:$0x1] 0.0
    %1454 = vst [vmem:[#allocation4 + $0xc] sm:$0x1] 0.0
    %1455 = vst [vmem:[#allocation4 + $0xd] sm:$0x1] 0.0
    %1456 = vst [vmem:[#allocation4 + $0xe] sm:$0x1] 0.0
    %1457 = vst [vmem:[#allocation4 + $0xf] sm:$0x1] 0.0
    loop: start=0, step=1, limit=4
    $region186: #{tpu_custom_call.1} parent=1 // loop_pre_header
      _
    $region187: #{tpu_custom_call.1} parent=1 // loop_header
      %s1459 = sphi 0, %s1463
      %p1460 = scmp.ge.s32.totalorder %s1459, 4
    $region188: #{tpu_custom_call.1} parent=1 // loop_header_branch
      %1462 = sbr.rel (%p1460) target = $region192
    $region189: #{tpu_custom_call.1} parent=1 // loop_body
      %s1464 = smul.u32 %s1459, 8
      %s1465 = scalar_lea.vmem [#allocation6], %s1464
      %v1466 = vld [vmem:[%s1465] sm:$0xff]
      %s1467 = sld [smem:[#allocation16 + %s1464]]
      %s1468 = scalar_lea.vmem [#allocation4], %s1467
      %v1469 = vld [vmem:[%s1468] sm:$0x1]
      %v1470 = vadd.f32 %v1469, %v1466
      %1471 = vst [vmem:[%s1468] sm:$0x1] %v1470
      %s1472 = sadd.s32 %s1464, 1
      %s1473 = sld [smem:[#allocation16 + %s1472]]
      %s1474 = scalar_lea.vmem [#allocation4], %s1473
      %v1475 = vld [vmem:[%s1474] sm:$0x1]
      %1477 = vst [vmem:[#allocation1] sm:$0xff] %v1466
      %s1478 = scalar_lea.vmem [#allocation1], 1
      %v1479 = vld [vmem:[%s1478] ss:$9 sm:$0xff]
      %v1481 = vadd.f32 %v1475, %v1479
      %1482 = vst [vmem:[%s1474] sm:$0x1] %v1481
      %s1483 = sadd.s32 %s1464, 2
      %s1484 = sld [smem:[#allocation16 + %s1483]]
      %s1485 = scalar_lea.vmem [#allocation4], %s1484
      %v1486 = vld [vmem:[%s1485] sm:$0x1]
      %1487 = vst [vmem:[#allocation1] sm:$0xff] %v1466
      %s1488 = scalar_lea.vmem [#allocation1], 2
      %v1489 = vld [vmem:[%s1488] ss:$9 sm:$0xff]
      %v1491 = vadd.f32 %v1486, %v1489
      %1492 = vst [vmem:[%s1485] sm:$0x1] %v1491
      %s1493 = sadd.s32 %s1464, 3
      %s1494 = sld [smem:[#allocation16 + %s1493]]
      %s1495 = scalar_lea.vmem [#allocation4], %s1494
      %v1496 = vld [vmem:[%s1495] sm:$0x1]
      %1497 = vst [vmem:[#allocation1] sm:$0xff] %v1466
      %s1498 = scalar_lea.vmem [#allocation1], 3
      %v1499 = vld [vmem:[%s1498] ss:$9 sm:$0xff]
      %v1501 = vadd.f32 %v1496, %v1499
      %1502 = vst [vmem:[%s1495] sm:$0x1] %v1501
      %s1503 = sadd.s32 %s1464, 4
      %s1504 = sld [smem:[#allocation16 + %s1503]]
      %s1505 = scalar_lea.vmem [#allocation4], %s1504
      %v1506 = vld [vmem:[%s1505] sm:$0x1]
      %1507 = vst [vmem:[#allocation1] sm:$0xff] %v1466
      %s1508 = scalar_lea.vmem [#allocation1], 4
      %v1509 = vld [vmem:[%s1508] ss:$9 sm:$0xff]
      %v1511 = vadd.f32 %v1506, %v1509
      %1512 = vst [vmem:[%s1505] sm:$0x1] %v1511
      %s1513 = sadd.s32 %s1464, 5
      %s1514 = sld [smem:[#allocation16 + %s1513]]
      %s1515 = scalar_lea.vmem [#allocation4], %s1514
      %v1516 = vld [vmem:[%s1515] sm:$0x1]
      %1517 = vst [vmem:[#allocation1] sm:$0xff] %v1466
      %s1518 = scalar_lea.vmem [#allocation1], 5
      %v1519 = vld [vmem:[%s1518] ss:$9 sm:$0xff]
      %v1521 = vadd.f32 %v1516, %v1519
      %1522 = vst [vmem:[%s1515] sm:$0x1] %v1521
      %s1523 = sadd.s32 %s1464, 6
      %s1524 = sld [smem:[#allocation16 + %s1523]]
      %s1525 = scalar_lea.vmem [#allocation4], %s1524
      %v1526 = vld [vmem:[%s1525] sm:$0x1]
      %1527 = vst [vmem:[#allocation1] sm:$0xff] %v1466
      %s1528 = scalar_lea.vmem [#allocation1], 6
      %v1529 = vld [vmem:[%s1528] ss:$9 sm:$0xff]
      %v1531 = vadd.f32 %v1526, %v1529
      %1532 = vst [vmem:[%s1525] sm:$0x1] %v1531
      %s1533 = sadd.s32 %s1464, 7
      %s1534 = sld [smem:[#allocation16 + %s1533]]
      %s1535 = scalar_lea.vmem [#allocation4], %s1534
      %v1536 = vld [vmem:[%s1535] sm:$0x1]
      %1537 = vst [vmem:[#allocation1] sm:$0xff] %v1466
      %s1538 = scalar_lea.vmem [#allocation1], 7
      %v1539 = vld [vmem:[%s1538] ss:$9 sm:$0xff]
      %v1541 = vadd.f32 %v1536, %v1539
      %1542 = vst [vmem:[%s1535] sm:$0x1] %v1541
    $region190: #{tpu_custom_call.1} parent=1 // loop_footer
      %s1463 = sadd.s32 1, %s1459
    $region191: #{tpu_custom_call.1} parent=1 // loop_footer_branch
      %1458 = sbr.rel target = $region187
    $region192: #{tpu_custom_call.1} parent=1 // loop_exit
      _
    loop: start=0, step=1, limit=2
    $region193: #{tpu_custom_call.1} parent=1 // loop_pre_header
      _
    $region194: #{tpu_custom_call.1} parent=1 // loop_header
      %s1544 = sphi 0, %s1548
      %p1545 = scmp.ge.s32.totalorder %s1544, 2
    $region195: #{tpu_custom_call.1} parent=1 // loop_header_branch
      %1547 = sbr.rel (%p1545) target = $region199
    $region196: #{tpu_custom_call.1} parent=1 // loop_body
      %s1549 = smul.u32 %s1544, 8
      %s1550 = scalar_lea.vmem [#allocation4], %s1549
      %v1551 = vld [vmem:[%s1550] sm:$0x1]
      %1552 = vst [vmem:[#allocation11] sm:$0x1] %v1551
      %s1553 = sadd.s32 %s1549, 1
      %s1554 = scalar_lea.vmem [#allocation4], %s1553
      %v1555 = vld [vmem:[%s1554] sm:$0x1]
      %1556 = vst [vmem:[#allocation11 + $0x1] sm:$0x1] %v1555
      %s1557 = sadd.s32 %s1549, 2
      %s1558 = scalar_lea.vmem [#allocation4], %s1557
      %v1559 = vld [vmem:[%s1558] sm:$0x1]
      %1560 = vst [vmem:[#allocation11 + $0x2] sm:$0x1] %v1559
      %s1561 = sadd.s32 %s1549, 3
      %s1562 = scalar_lea.vmem [#allocation4], %s1561
      %v1563 = vld [vmem:[%s1562] sm:$0x1]
      %1564 = vst [vmem:[#allocation11 + $0x3] sm:$0x1] %v1563
      %s1565 = sadd.s32 %s1549, 4
      %s1566 = scalar_lea.vmem [#allocation4], %s1565
      %v1567 = vld [vmem:[%s1566] sm:$0x1]
      %1568 = vst [vmem:[#allocation11 + $0x4] sm:$0x1] %v1567
      %s1569 = sadd.s32 %s1549, 5
      %s1570 = scalar_lea.vmem [#allocation4], %s1569
      %v1571 = vld [vmem:[%s1570] sm:$0x1]
      %1572 = vst [vmem:[#allocation11 + $0x5] sm:$0x1] %v1571
      %s1573 = sadd.s32 %s1549, 6
      %s1574 = scalar_lea.vmem [#allocation4], %s1573
      %v1575 = vld [vmem:[%s1574] sm:$0x1]
      %1576 = vst [vmem:[#allocation11 + $0x6] sm:$0x1] %v1575
      %s1577 = sadd.s32 %s1549, 7
      %s1578 = scalar_lea.vmem [#allocation4], %s1577
      %v1579 = vld [vmem:[%s1578] sm:$0x1]
      %1580 = vst [vmem:[#allocation11 + $0x7] sm:$0x1] %v1579
      %v1581 = vld [vmem:[#allocation11] sm:$0xff]
      %s1582 = scalar_lea.vmem [#allocation8], %s1549
      %1583 = vst [vmem:[%s1582] sm:$0xff] %v1581
    $region197: #{tpu_custom_call.1} parent=1 // loop_footer
      %s1548 = sadd.s32 1, %s1544
    $region198: #{tpu_custom_call.1} parent=1 // loop_footer_branch
      %1543 = sbr.rel target = $region194
    $region199: #{tpu_custom_call.1} parent=1 // loop_exit
      _
    %v1584 = vld [vmem:[#allocation2] sm:$0xff]
    %v1585 = vld [vmem:[#allocation2 + $0x8] sm:$0xff]
    %v1586 = vld [vmem:[#allocation8] sm:$0xff]
    %v1587 = vld [vmem:[#allocation8 + $0x8] sm:$0xff]
    %v1588 = vld [vmem:[%s13] sm:$0xf]
    %v1589 = vld [vmem:[%s13 + $0x4] sm:$0xf]
    %v1590 = vld [vmem:[%s13 + $0x8] sm:$0xf]
    %v1591 = vld [vmem:[%s13 + $0xc] sm:$0xf]
    %v1592 = vld [vmem:[%s13 + $0x10] sm:$0xf]
    %v1593 = vld [vmem:[%s13 + $0x14] sm:$0xf]
    %v1594 = vld [vmem:[%s13 + $0x18] sm:$0xf]
    %v1595 = vld [vmem:[%s13 + $0x1c] sm:$0xf]
    %v1596 = vld [vmem:[%s13 + $0x20] sm:$0xf]
    %v1597 = vld [vmem:[%s13 + $0x24] sm:$0xf]
    %v1598 = vld [vmem:[%s13 + $0x28] sm:$0xf]
    %v1599 = vld [vmem:[%s13 + $0x2c] sm:$0xf]
    %v1600 = vld [vmem:[%s13 + $0x30] sm:$0xf]
    %v1601 = vld [vmem:[%s13 + $0x34] sm:$0xf]
    %v1602 = vld [vmem:[%s13 + $0x38] sm:$0xf]
    %v1603 = vld [vmem:[%s13 + $0x3c] sm:$0xf]
    %v1604 = vld [vmem:[%s13 + $0x40] sm:$0xf]
    %v1605 = vld [vmem:[%s13 + $0x44] sm:$0xf]
    %v1606 = vld [vmem:[%s13 + $0x48] sm:$0xf]
    %v1607 = vld [vmem:[%s13 + $0x4c] sm:$0xf]
    %v1608 = vld [vmem:[%s13 + $0x50] sm:$0xf]
    %v1609 = vld [vmem:[%s13 + $0x54] sm:$0xf]
    %v1610 = vld [vmem:[%s13 + $0x58] sm:$0xf]
    %v1611 = vld [vmem:[%s13 + $0x5c] sm:$0xf]
    %v1612 = vld [vmem:[%s13 + $0x60] sm:$0xf]
    %v1613 = vld [vmem:[%s13 + $0x64] sm:$0xf]
    %v1614 = vld [vmem:[%s13 + $0x68] sm:$0xf]
    %v1615 = vld [vmem:[%s13 + $0x6c] sm:$0xf]
    %v1616 = vld [vmem:[%s13 + $0x70] sm:$0xf]
    %v1617 = vld [vmem:[%s13 + $0x74] sm:$0xf]
    %v1618 = vld [vmem:[%s13 + $0x78] sm:$0xf]
    %v1619 = vld [vmem:[%s13 + $0x7c] sm:$0xf]
    %v1620 = vpack.c.bf16 %v1585, %v1584
    %v1621 = vpack.c.bf16 %v1587, %v1586
    %v1622 = vld [vmem:[%s14] sm:$0x1]
    %v1624 = vperm.slane %v1622, 0
    %v1658 = vunpack.c.l.b16 %v1588
    %v1659 = vunpack.c.l.b16 %v1589
    %v1660 = vunpack.c.l.b16 %v1590
    %v1661 = vunpack.c.l.b16 %v1591
    %v1662 = vunpack.c.l.b16 %v1592
    %v1663 = vunpack.c.l.b16 %v1593
    %v1664 = vunpack.c.l.b16 %v1594
    %v1665 = vunpack.c.l.b16 %v1595
    %v1666 = vunpack.c.l.b16 %v1596
    %v1667 = vunpack.c.l.b16 %v1597
    %v1668 = vunpack.c.l.b16 %v1598
    %v1669 = vunpack.c.l.b16 %v1599
    %v1670 = vunpack.c.l.b16 %v1600
    %v1671 = vunpack.c.l.b16 %v1601
    %v1672 = vunpack.c.l.b16 %v1602
    %v1673 = vunpack.c.l.b16 %v1603
    %v1674 = vunpack.c.l.b16 %v1604
    %v1675 = vunpack.c.l.b16 %v1605
    %v1676 = vunpack.c.l.b16 %v1606
    %v1677 = vunpack.c.l.b16 %v1607
    %v1678 = vunpack.c.l.b16 %v1608
    %v1679 = vunpack.c.l.b16 %v1609
    %v1680 = vunpack.c.l.b16 %v1610
    %v1681 = vunpack.c.l.b16 %v1611
    %v1682 = vunpack.c.l.b16 %v1612
    %v1683 = vunpack.c.l.b16 %v1613
    %v1684 = vunpack.c.l.b16 %v1614
    %v1685 = vunpack.c.l.b16 %v1615
    %v1686 = vunpack.c.l.b16 %v1616
    %v1687 = vunpack.c.l.b16 %v1617
    %v1688 = vunpack.c.l.b16 %v1618
    %v1689 = vunpack.c.l.b16 %v1619
    %v1690 = vpack.c.b16 %v1659, %v1658
    %v1691 = vpack.c.b16 %v1661, %v1660
    %v1692 = vpack.c.b16 %v1663, %v1662
    %v1693 = vpack.c.b16 %v1665, %v1664
    %v1694 = vpack.c.b16 %v1667, %v1666
    %v1695 = vpack.c.b16 %v1669, %v1668
    %v1696 = vpack.c.b16 %v1671, %v1670
    %v1697 = vpack.c.b16 %v1673, %v1672
    %v1698 = vpack.c.b16 %v1675, %v1674
    %v1699 = vpack.c.b16 %v1677, %v1676
    %v1700 = vpack.c.b16 %v1679, %v1678
    %v1701 = vpack.c.b16 %v1681, %v1680
    %v1702 = vpack.c.b16 %v1683, %v1682
    %v1703 = vpack.c.b16 %v1685, %v1684
    %v1704 = vpack.c.b16 %v1687, %v1686
    %v1705 = vpack.c.b16 %v1689, %v1688
    %1722 = vmatpush.bf16.msra.mxu0 %v1697
    %1723 = vmatpush.bf16.msra.mxu0 %v1696
    %1724 = vmatpush.bf16.msra.mxu0 %v1695
    %1725 = vmatpush.bf16.msra.mxu0 %v1694
    %1726 = vmatpush.bf16.msra.mxu0 %v1693
    %1727 = vmatpush.bf16.msra.mxu0 %v1692
    %1728 = vmatpush.bf16.msra.mxu0 %v1691
    %1729 = vmatpush.bf16.msra.mxu0 %v1690
    %1730 = vmatmul.bf16.gmra.mxu0 %v1620
    %v1731 = vpop.f32.mrf.mxu0
    %v1732 = vadd.f32 %v1624, %v1731
    %v1733 = vpop.f32.mrf.mxu0
    %v1734 = vadd.f32 %v1624, %v1733
    %1735 = vdwg.mxu0
    %1736 = vmatpush.bf16.msra.mxu0 %v1705
    %1737 = vmatpush.bf16.msra.mxu0 %v1704
    %1738 = vmatpush.bf16.msra.mxu0 %v1703
    %1739 = vmatpush.bf16.msra.mxu0 %v1702
    %1740 = vmatpush.bf16.msra.mxu0 %v1701
    %1741 = vmatpush.bf16.msra.mxu0 %v1700
    %1742 = vmatpush.bf16.msra.mxu0 %v1699
    %1743 = vmatpush.bf16.msra.mxu0 %v1698
    %1744 = vmatmul.bf16.gmra.mxu0 %v1621
    %v1745 = vpop.f32.mrf.mxu0
    %v1746 = vadd.f32 %v1732, %v1745
    %v1747 = vpop.f32.mrf.mxu0
    %v1748 = vadd.f32 %v1734, %v1747
    %1749 = vdwg.mxu0
    %v1750 = vmax.f32 %v1746, 0.0
    %v1751 = vmax.f32 %v1748, 0.0
    %1752 = vst [vmem:[#allocation2] sm:$0xff] %v1750
    %1753 = vst [vmem:[#allocation2 + $0x8] sm:$0xff] %v1751
    %1754 = vst [vmem:[#allocation9] sm:$0x1] 0.0
    %1755 = vst [vmem:[#allocation9 + $0x1] sm:$0x1] 0.0
    %1756 = vst [vmem:[#allocation9 + $0x2] sm:$0x1] 0.0
    %1757 = vst [vmem:[#allocation9 + $0x3] sm:$0x1] 0.0
    %1758 = vst [vmem:[#allocation9 + $0x4] sm:$0x1] 0.0
    %1759 = vst [vmem:[#allocation9 + $0x5] sm:$0x1] 0.0
    %1760 = vst [vmem:[#allocation9 + $0x6] sm:$0x1] 0.0
    %1761 = vst [vmem:[#allocation9 + $0x7] sm:$0x1] 0.0
    loop: start=0, step=1, limit=2
    $region200: #{tpu_custom_call.1} parent=1 // loop_pre_header
      _
    $region201: #{tpu_custom_call.1} parent=1 // loop_header
      %s1763 = sphi 0, %s1767
      %p1764 = scmp.ge.s32.totalorder %s1763, 2
    $region202: #{tpu_custom_call.1} parent=1 // loop_header_branch
      %1766 = sbr.rel (%p1764) target = $region206
    $region203: #{tpu_custom_call.1} parent=1 // loop_body
      %s1768 = smul.u32 %s1763, 8
      %s1769 = scalar_lea.vmem [#allocation2], %s1768
      %v1770 = vld [vmem:[%s1769] sm:$0xff]
      %s1771 = sld [smem:[#allocation18 + %s1768]]
      %s1772 = scalar_lea.vmem [#allocation9], %s1771
      %v1773 = vld [vmem:[%s1772] sm:$0x1]
      %v1774 = vadd.f32 %v1773, %v1770
      %1775 = vst [vmem:[%s1772] sm:$0x1] %v1774
      %s1776 = sadd.s32 %s1768, 1
      %s1777 = sld [smem:[#allocation18 + %s1776]]
      %s1778 = scalar_lea.vmem [#allocation9], %s1777
      %v1779 = vld [vmem:[%s1778] sm:$0x1]
      %1781 = vst [vmem:[#allocation1] sm:$0xff] %v1770
      %s1782 = scalar_lea.vmem [#allocation1], 1
      %v1783 = vld [vmem:[%s1782] ss:$9 sm:$0xff]
      %v1785 = vadd.f32 %v1779, %v1783
      %1786 = vst [vmem:[%s1778] sm:$0x1] %v1785
      %s1787 = sadd.s32 %s1768, 2
      %s1788 = sld [smem:[#allocation18 + %s1787]]
      %s1789 = scalar_lea.vmem [#allocation9], %s1788
      %v1790 = vld [vmem:[%s1789] sm:$0x1]
      %1791 = vst [vmem:[#allocation1] sm:$0xff] %v1770
      %s1792 = scalar_lea.vmem [#allocation1], 2
      %v1793 = vld [vmem:[%s1792] ss:$9 sm:$0xff]
      %v1795 = vadd.f32 %v1790, %v1793
      %1796 = vst [vmem:[%s1789] sm:$0x1] %v1795
      %s1797 = sadd.s32 %s1768, 3
      %s1798 = sld [smem:[#allocation18 + %s1797]]
      %s1799 = scalar_lea.vmem [#allocation9], %s1798
      %v1800 = vld [vmem:[%s1799] sm:$0x1]
      %1801 = vst [vmem:[#allocation1] sm:$0xff] %v1770
      %s1802 = scalar_lea.vmem [#allocation1], 3
      %v1803 = vld [vmem:[%s1802] ss:$9 sm:$0xff]
      %v1805 = vadd.f32 %v1800, %v1803
      %1806 = vst [vmem:[%s1799] sm:$0x1] %v1805
      %s1807 = sadd.s32 %s1768, 4
      %s1808 = sld [smem:[#allocation18 + %s1807]]
      %s1809 = scalar_lea.vmem [#allocation9], %s1808
      %v1810 = vld [vmem:[%s1809] sm:$0x1]
      %1811 = vst [vmem:[#allocation1] sm:$0xff] %v1770
      %s1812 = scalar_lea.vmem [#allocation1], 4
      %v1813 = vld [vmem:[%s1812] ss:$9 sm:$0xff]
      %v1815 = vadd.f32 %v1810, %v1813
      %1816 = vst [vmem:[%s1809] sm:$0x1] %v1815
      %s1817 = sadd.s32 %s1768, 5
      %s1818 = sld [smem:[#allocation18 + %s1817]]
      %s1819 = scalar_lea.vmem [#allocation9], %s1818
      %v1820 = vld [vmem:[%s1819] sm:$0x1]
      %1821 = vst [vmem:[#allocation1] sm:$0xff] %v1770
      %s1822 = scalar_lea.vmem [#allocation1], 5
      %v1823 = vld [vmem:[%s1822] ss:$9 sm:$0xff]
      %v1825 = vadd.f32 %v1820, %v1823
      %1826 = vst [vmem:[%s1819] sm:$0x1] %v1825
      %s1827 = sadd.s32 %s1768, 6
      %s1828 = sld [smem:[#allocation18 + %s1827]]
      %s1829 = scalar_lea.vmem [#allocation9], %s1828
      %v1830 = vld [vmem:[%s1829] sm:$0x1]
      %1831 = vst [vmem:[#allocation1] sm:$0xff] %v1770
      %s1832 = scalar_lea.vmem [#allocation1], 6
      %v1833 = vld [vmem:[%s1832] ss:$9 sm:$0xff]
      %v1835 = vadd.f32 %v1830, %v1833
      %1836 = vst [vmem:[%s1829] sm:$0x1] %v1835
      %s1837 = sadd.s32 %s1768, 7
      %s1838 = sld [smem:[#allocation18 + %s1837]]
      %s1839 = scalar_lea.vmem [#allocation9], %s1838
      %v1840 = vld [vmem:[%s1839] sm:$0x1]
      %1841 = vst [vmem:[#allocation1] sm:$0xff] %v1770
      %s1842 = scalar_lea.vmem [#allocation1], 7
      %v1843 = vld [vmem:[%s1842] ss:$9 sm:$0xff]
      %v1845 = vadd.f32 %v1840, %v1843
      %1846 = vst [vmem:[%s1839] sm:$0x1] %v1845
    $region204: #{tpu_custom_call.1} parent=1 // loop_footer
      %s1767 = sadd.s32 1, %s1763
    $region205: #{tpu_custom_call.1} parent=1 // loop_footer_branch
      %1762 = sbr.rel target = $region201
    $region206: #{tpu_custom_call.1} parent=1 // loop_exit
      _
    %v1847 = vld [vmem:[#allocation9] sm:$0x1]
    %1848 = vst [vmem:[#allocation11] sm:$0x1] %v1847
    %s1849 = sadd.s32 0, 1
    %s1850 = scalar_lea.vmem [#allocation9], %s1849
    %v1851 = vld [vmem:[%s1850] sm:$0x1]
    %1852 = vst [vmem:[#allocation11 + $0x1] sm:$0x1] %v1851
    %s1853 = sadd.s32 0, 2
    %s1854 = scalar_lea.vmem [#allocation9], %s1853
    %v1855 = vld [vmem:[%s1854] sm:$0x1]
    %1856 = vst [vmem:[#allocation11 + $0x2] sm:$0x1] %v1855
    %s1857 = sadd.s32 0, 3
    %s1858 = scalar_lea.vmem [#allocation9], %s1857
    %v1859 = vld [vmem:[%s1858] sm:$0x1]
    %1860 = vst [vmem:[#allocation11 + $0x3] sm:$0x1] %v1859
    %s1861 = sadd.s32 0, 4
    %s1862 = scalar_lea.vmem [#allocation9], %s1861
    %v1863 = vld [vmem:[%s1862] sm:$0x1]
    %1864 = vst [vmem:[#allocation11 + $0x4] sm:$0x1] %v1863
    %s1865 = sadd.s32 0, 5
    %s1866 = scalar_lea.vmem [#allocation9], %s1865
    %v1867 = vld [vmem:[%s1866] sm:$0x1]
    %1868 = vst [vmem:[#allocation11 + $0x5] sm:$0x1] %v1867
    %s1869 = sadd.s32 0, 6
    %s1870 = scalar_lea.vmem [#allocation9], %s1869
    %v1871 = vld [vmem:[%s1870] sm:$0x1]
    %1872 = vst [vmem:[#allocation11 + $0x6] sm:$0x1] %v1871
    %s1873 = sadd.s32 0, 7
    %s1874 = scalar_lea.vmem [#allocation9], %s1873
    %v1875 = vld [vmem:[%s1874] sm:$0x1]
    %1876 = vst [vmem:[#allocation11 + $0x7] sm:$0x1] %v1875
    %v1877 = vld [vmem:[#allocation11] sm:$0xff]
    %1878 = vst [vmem:[#allocation10] sm:$0xff] %v1877
    %v1879 = vld [vmem:[#allocation10] sm:$0xff]
    %v1880 = vld [vmem:[%s15] sm:$0xf]
    %v1881 = vld [vmem:[%s15 + $0x4] sm:$0xf]
    %v1882 = vld [vmem:[%s15 + $0x8] sm:$0xf]
    %v1883 = vld [vmem:[%s15 + $0xc] sm:$0xf]
    %v1884 = vld [vmem:[%s15 + $0x10] sm:$0xf]
    %v1885 = vld [vmem:[%s15 + $0x14] sm:$0xf]
    %v1886 = vld [vmem:[%s15 + $0x18] sm:$0xf]
    %v1887 = vld [vmem:[%s15 + $0x1c] sm:$0xf]
    %v1888 = vld [vmem:[%s15 + $0x20] sm:$0xf]
    %v1889 = vld [vmem:[%s15 + $0x24] sm:$0xf]
    %v1890 = vld [vmem:[%s15 + $0x28] sm:$0xf]
    %v1891 = vld [vmem:[%s15 + $0x2c] sm:$0xf]
    %v1892 = vld [vmem:[%s15 + $0x30] sm:$0xf]
    %v1893 = vld [vmem:[%s15 + $0x34] sm:$0xf]
    %v1894 = vld [vmem:[%s15 + $0x38] sm:$0xf]
    %v1895 = vld [vmem:[%s15 + $0x3c] sm:$0xf]
    %v1896 = vpack.c.bf16 %v1879, %v1879
    %v1897 = vld [vmem:[%s16] sm:$0x1]
    %v1899 = vperm.slane %v1897, 0
    %v1917 = vunpack.c.l.b16 %v1880
    %v1918 = vunpack.c.l.b16 %v1881
    %v1919 = vunpack.c.l.b16 %v1882
    %v1920 = vunpack.c.l.b16 %v1883
    %v1921 = vunpack.c.l.b16 %v1884
    %v1922 = vunpack.c.l.b16 %v1885
    %v1923 = vunpack.c.l.b16 %v1886
    %v1924 = vunpack.c.l.b16 %v1887
    %v1925 = vunpack.c.l.b16 %v1888
    %v1926 = vunpack.c.l.b16 %v1889
    %v1927 = vunpack.c.l.b16 %v1890
    %v1928 = vunpack.c.l.b16 %v1891
    %v1929 = vunpack.c.l.b16 %v1892
    %v1930 = vunpack.c.l.b16 %v1893
    %v1931 = vunpack.c.l.b16 %v1894
    %v1932 = vunpack.c.l.b16 %v1895
    %v1933 = vpack.c.b16 %v1918, %v1917
    %v1934 = vpack.c.b16 %v1920, %v1919
    %v1935 = vpack.c.b16 %v1922, %v1921
    %v1936 = vpack.c.b16 %v1924, %v1923
    %v1937 = vpack.c.b16 %v1926, %v1925
    %v1938 = vpack.c.b16 %v1928, %v1927
    %v1939 = vpack.c.b16 %v1930, %v1929
    %v1940 = vpack.c.b16 %v1932, %v1931
    %1949 = vmatpush.bf16.msra.mxu0 %v1940
    %1950 = vmatpush.bf16.msra.mxu0 %v1939
    %1951 = vmatpush.bf16.msra.mxu0 %v1938
    %1952 = vmatpush.bf16.msra.mxu0 %v1937
    %1953 = vmatpush.bf16.msra.mxu0 %v1936
    %1954 = vmatpush.bf16.msra.mxu0 %v1935
    %1955 = vmatpush.bf16.msra.mxu0 %v1934
    %1956 = vmatpush.bf16.msra.mxu0 %v1933
    %1957 = vmatmul.bf16.gmra.mxu0 %v1896
    %v1958 = vpop.f32.mrf.mxu0
    %v1959 = vadd.f32 %v1899, %v1958
    %v1960 = vpop.f32.mrf.mxu0
    %1961 = vdwg.mxu0
    %v1962 = vmax.f32 %v1959, 0.0
    %v1963 = vld [vmem:[#allocation32] sm:$0xf]
    %v1964 = vld [vmem:[#allocation32 + $0x4] sm:$0xf]
    %v1965 = vld [vmem:[#allocation32 + $0x8] sm:$0xf]
    %v1966 = vld [vmem:[#allocation32 + $0xc] sm:$0xf]
    %v1967 = vld [vmem:[#allocation32 + $0x10] sm:$0xf]
    %v1968 = vld [vmem:[#allocation32 + $0x14] sm:$0xf]
    %v1969 = vld [vmem:[#allocation32 + $0x18] sm:$0xf]
    %v1970 = vld [vmem:[#allocation32 + $0x1c] sm:$0xf]
    %v1971 = vpack.c.bf16 %v1962, %v1962
    %v1972 = vld [vmem:[%s18] sm:$0x1]
    %v1974 = vperm.slane %v1972, 0
    %v1984 = vunpack.c.l.b16 %v1963
    %v1985 = vunpack.c.l.b16 %v1964
    %v1986 = vunpack.c.l.b16 %v1965
    %v1987 = vunpack.c.l.b16 %v1966
    %v1988 = vunpack.c.l.b16 %v1967
    %v1989 = vunpack.c.l.b16 %v1968
    %v1990 = vunpack.c.l.b16 %v1969
    %v1991 = vunpack.c.l.b16 %v1970
    %v1992 = vpack.c.b16 %v1985, %v1984
    %v1993 = vpack.c.b16 %v1987, %v1986
    %v1994 = vpack.c.b16 %v1989, %v1988
    %v1995 = vpack.c.b16 %v1991, %v1990
    %vm2000 = vcmask 523264
    %v2002 = vsel %vm2000, %v1971, 0
    %2004 = vmatpush.bf16.msra.mxu0 0
    %2005 = vmatpush.bf16.msra.mxu0 0
    %2006 = vmatpush.bf16.msra.mxu0 0
    %2007 = vmatpush.bf16.msra.mxu0 0
    %2008 = vmatpush.bf16.msra.mxu0 %v1995
    %2009 = vmatpush.bf16.msra.mxu0 %v1994
    %2010 = vmatpush.bf16.msra.mxu0 %v1993
    %2011 = vmatpush.bf16.msra.mxu0 %v1992
    %2012 = vmatmul.bf16.gmra.mxu0 %v2002
    %v2013 = vpop.f32.mrf.mxu0
    %v2014 = vadd.f32 %v1974, %v2013
    %v2015 = vpop.f32.mrf.mxu0
    %2016 = vdwg.mxu0
    %2017 = vst [vmem:[#allocation34] sm:$0xff] %v2014
    // Predicated region
    $region207: #{tpu_custom_call.1} parent=1 // pred_check
      _
    $region208: #{tpu_custom_call.1} parent=1 // pred_check_branch
      %2019 = sbr.rel (0) target = $region210
    $region209: #{tpu_custom_call.1} parent=1 // pred_region
      %2021 = vsyncadd [#allocation14], 0
      %s2023 = sshll.u32 [#allocation34], 4
      %s2024 = int_to_ptr.vmem [resolvable:$true] %s2023
      %s2025 = sshll.u32 %s19, 4
      %s2026 = int_to_ptr.hbm [resolvable:$true] %s2025
      %2028 = dma.vmem_to_hbm [thread:$0]  %s2024, 128, %s2026, [#allocation14]
    $region210: #{tpu_custom_call.1} parent=1 // pred_fallthru
      _
    // Predicated region
    $region211: #{tpu_custom_call.1} parent=1 // pred_check
      _
    $region212: #{tpu_custom_call.1} parent=1 // pred_check_branch
      %2030 = sbr.rel (0) target = $region214
    $region213: #{tpu_custom_call.1} parent=1 // pred_region
      %2032 = dma.done [#allocation14], 128
    $region214: #{tpu_custom_call.1} parent=1 // pred_fallthru
      _
    %2033 = vsyncpa [#allocation13], 1
    %2034 = vsyncpa [#allocation21], 1
    %2035 = vsyncpa [#allocation24], 1
    %2036 = vsyncpa [#allocation27], 1
    %2037 = vsyncpa [#allocation30], 1
    %2038 = vsyncpa [#allocation33], 1
    %2039 = vsyncpa [#allocation14], 1
    %2040 = vsyncpa [#allocation15], 1
    %2041 = vsyncpa [#allocation17], 1

</llo_original>
